<compile_context>
chip_gen: v7x
topology: tpu7x:2x2x1
jax: 0.10.0
libtpu: 0.0.40
codegen_flags: <defaults>
</compile_context>

<pallas_src>
import numpy as np
import jax
import jax.numpy as jnp
from jax.experimental import pallas as pl
from jax.experimental.pallas import tpu as pltpu

KS = 5
PAD = KS // 2
WS = 128                        # ws (sequence length)
FEAT = 6                        # feature_size
CIN1 = 8                        # feature_size//2 = 3, zero-padded to 8 sublanes
NCH = 72                        # num_layer_conv
NFC = 30                        # num_fc
POOLED = WS // 8                # 16 positions per sample after 3x max_pool(2)
FLAT_CONV = POOLED * NCH        # 1152
FLAT_FFT = WS * (FEAT // 2)     # 384
NFEAT = FLAT_CONV + FLAT_FFT    # 1536
FC_TILE = 128                   # samples per FC grid step (batch lives on lanes)


# ---------------------------------------------------------------- kernels ----
def conv_stack_kernel(x_ref,
                      w1_ref, b1_ref, w1b_ref, b1b_ref,
                      w2_ref, b2_ref, w2b_ref, b2b_ref,
                      w3_ref, b3_ref, w3b_ref, b3b_ref,
                      sel_ref, out_ref):
    n = x_ref.shape[-1]                                    # block_b * 128 lanes
    lane = jax.lax.broadcasted_iota(jnp.int32, (1, n), 1)
    lane_in_seq = lane % WS                                # position within each sample

    # Boundary masks for every (tap, stride) shift used below, built once.
    masks = {}
    for s in (-8, -4, -2, -1, 1, 2, 4, 8):
        pos = lane_in_seq + s
        masks[s] = jnp.logical_and(pos >= 0, pos < WS)

    def shift(h, s):
        # out[:, j] = h[:, j+s] if 0 <= (j mod 128)+s < 128 else 0 (XLU + VPU).
        if s == 0:
            return h
        rolled = pltpu.roll(h, shift=(-s) % n, axis=1)
        return jnp.where(masks[s], rolled, 0.0)

    def conv(h, w_ref, b_ref, stride):
        # 5-tap 'same' conv at dilation `stride` as ONE bf16 MXU matmul
        # (im2col: taps stacked along the contraction dim, K = 5*Cin).
        parts = [shift(h, (k - PAD) * stride) for k in range(KS)]
        x_stk = jnp.concatenate(parts, axis=0).astype(jnp.bfloat16)
        return jnp.dot(w_ref[...], x_stk,
                       preferred_element_type=jnp.float32) + b_ref[...]

    def pool(h, stride):
        # max over dilated pairs (l, l+stride); valid lanes: l % (2*stride) == 0.
        return jnp.maximum(h, pltpu.roll(h, shift=(-stride) % n, axis=1))

    relu = lambda v: jnp.maximum(v, 0.0)

    h = x_ref[...]                                         # (8, n) f32 (3 real rows)
    # stage 1 (stride 1)
    h = conv(h, w1_ref, b1_ref, 1)                         # (72, n) f32
    h = conv(relu(h), w1b_ref, b1b_ref, 1)
    h = pool(relu(h), 1)                                   # valid at lanes % 2 == 0
    # stage 2 (stride 2)
    h = conv(h, w2_ref, b2_ref, 2)
    h = conv(relu(h), w2b_ref, b2b_ref, 2)
    h = pool(relu(h), 2)                                   # valid at lanes % 4 == 0
    # stage 3 (stride 4)
    h = conv(h, w3_ref, b3_ref, 4)
    h = conv(relu(h), w3b_ref, b3b_ref, 4)
    h = pool(relu(h), 4)                                   # valid at lanes % 8 == 0
    # compact lane b*128 + 8*p -> b*16 + p with a small bf16 0/1 selection matmul
    res = jnp.dot(h.astype(jnp.bfloat16), sel_ref[...],
                  preferred_element_type=jnp.float32)      # (72, block_b*16)
    out_ref[...] = res[None, :, :].astype(out_ref.dtype)


def fc_kernel(featT_ref, w1_ref, b1_ref, w2_ref, b2_ref, out_ref):
    # featT: (1536, 128) bf16 with batch on lanes; w1: (30, 1536) bf16.
    h = jnp.dot(w1_ref[...], featT_ref[...],
                preferred_element_type=jnp.float32) + b1_ref[...]   # (30, 128)
    h = jnp.maximum(h, 0.0)                                         # relu(fc1)
    # fc2 (30 -> 1): cross-sublane reduction, lane-dense (1, 128) output
    z = jnp.sum(h * w2_ref[...], axis=0, keepdims=True) + b2_ref[...]
    out_ref[...] = (1.0 / (1.0 + jnp.exp(-z))).astype(out_ref.dtype)  # sigmoid


# --------------------------------------------------- one-time param prep ----
def pick_block_b(batch, max_block_b=8):
    """Samples per conv grid step: >= 2 grid steps whenever batch >= 2
    (keeps both v7x TensorCores busy), up to 8*128 lanes for larger batches."""
    return int(max(1, min(max_block_b, batch // 2)))


def prepare_params(params, *, block_b):
    """Hoisted, run-once parameter prep: bf16 weight matrices in im2col layout,
    f32 bias columns, bf16 block-diagonal selection matrix, FC weights."""
    def wmat(w, cin_pad=None):
        w = jnp.asarray(w, jnp.float32)                    # (Cout, Cin, KS)
        if cin_pad is not None:
            w = jnp.pad(w, ((0, 0), (0, cin_pad - w.shape[1]), (0, 0)))
        # -> (Cout, KS*Cin), tap-major, matching x_stk row order in conv()
        return jnp.transpose(w, (0, 2, 1)).reshape(w.shape[0], -1).astype(jnp.bfloat16)

    col = lambda b: jnp.asarray(b, jnp.float32).reshape(-1, 1)

    # (block_b*128, block_b*16) 0/1 matrix picking lane b*128 + 8*p -> b*16 + p
    n, m = block_b * WS, block_b * POOLED
    sel = np.zeros((n, m), np.float32)
    for b in range(block_b):
        for p in range(POOLED):
            sel[b * WS + 8 * p, b * POOLED + p] = 1.0

    return {
        "conv": (wmat(params["conv1_w"], CIN1), col(params["conv1_b"]),
                 wmat(params["conv1b_w"]),      col(params["conv1b_b"]),
                 wmat(params["conv2_w"]),       col(params["conv2_b"]),
                 wmat(params["conv2b_w"]),      col(params["conv2b_b"]),
                 wmat(params["conv3_w"]),       col(params["conv3_b"]),
                 wmat(params["conv3b_w"]),      col(params["conv3b_b"])),
        "sel": jnp.asarray(sel, jnp.bfloat16),             # exact in bf16 (0/1)
        "fc1_w": jnp.asarray(params["fc1_w"], jnp.bfloat16),          # (30, 1536)
        "fc1_b": jnp.asarray(params["fc1_b"], jnp.float32).reshape(NFC, 1),
        "fc2_w": jnp.asarray(params["fc2_w"], jnp.float32).reshape(NFC, 1),
        "fc2_b": jnp.asarray(params["fc2_b"], jnp.float32).reshape(1, 1),
    }


# ---------------------------------------------------------------- forward ----
@jax.jit
def zipnet_forward(x, prepped):
    """x: (B, 6, 128).  prepped: output of prepare_params()."""
    B = x.shape[0]
    sel = prepped["sel"]
    block_b = sel.shape[0] // WS
    Bp = -(-B // block_b) * block_b
    G = Bp // block_b
    btl = block_b * WS

    x = x.astype(jnp.float32)
    xpad = jnp.pad(x, ((0, Bp - B), (0, 0), (0, 0)))
    # conv input: channels on sublanes (3 -> 8 zero rows), batch*length on lanes
    x_feat = jnp.transpose(xpad[:, :FEAT // 2, :], (1, 0, 2)).reshape(FEAT // 2, Bp * WS)
    x_feat = jnp.pad(x_feat, ((0, CIN1 - FEAT // 2), (0, 0)))

    consts = (*prepped["conv"], sel)
    in_specs = [pl.BlockSpec((CIN1, btl), lambda g: (0, g))]
    in_specs += [pl.BlockSpec(c.shape, lambda g: (0, 0)) for c in consts]

    conv_out = pl.pallas_call(
        conv_stack_kernel,
        out_shape=jax.ShapeDtypeStruct((G, NCH, block_b * POOLED), jnp.float32),
        grid=(G,),
        in_specs=in_specs,
        out_specs=pl.BlockSpec((1, NCH, block_b * POOLED), lambda g: (g, 0, 0)),
        compiler_params=pltpu.CompilerParams(dimension_semantics=("parallel",)),
    )(x_feat, *consts)

    # tiny jitted XLA glue: (NFEAT, B) features with batch on lanes.
    # conv_out[g, c, b*16+p] -> row c*16+p, column g*block_b+b (torch .view order)
    convT = (conv_out.reshape(G, NCH, block_b, POOLED)
             .transpose(1, 3, 0, 2).reshape(FLAT_CONV, Bp))[:, :B]
    # x_fft[b, ch, l] -> row ch*128+l, column b
    fftT = jnp.transpose(x[:, FEAT // 2:, :], (1, 2, 0)).reshape(FLAT_FFT, B)
    Bp2 = -(-B // FC_TILE) * FC_TILE
    featT = jnp.concatenate([convT, fftT], axis=0)
    featT = jnp.pad(featT, ((0, 0), (0, Bp2 - B))).astype(jnp.bfloat16)

    out = pl.pallas_call(
        fc_kernel,
        out_shape=jax.ShapeDtypeStruct((1, Bp2), jnp.float32),
        grid=(Bp2 // FC_TILE,),
        in_specs=[pl.BlockSpec((NFEAT, FC_TILE), lambda i: (0, i)),
                  pl.BlockSpec((NFC, NFEAT), lambda i: (0, 0)),
                  pl.BlockSpec((NFC, 1), lambda i: (0, 0)),
                  pl.BlockSpec((NFC, 1), lambda i: (0, 0)),
                  pl.BlockSpec((1, 1), lambda i: (0, 0))],
        out_specs=pl.BlockSpec((1, FC_TILE), lambda i: (0, i)),
        compiler_params=pltpu.CompilerParams(dimension_semantics=("parallel",)),
    )(featT, prepped["fc1_w"], prepped["fc1_b"], prepped["fc2_w"], prepped["fc2_b"])

    return jnp.squeeze(out[0, :B])                 # matches torch .squeeze()


# -------------------------------------------------------- params / reference -
def init_params(key):
    ks = jax.random.split(key, 16)

    def w(k, shape, fan_in):
        return (jax.random.normal(k, shape, jnp.float32) / np.sqrt(fan_in)).astype(jnp.float32)

    p = {}
    p["conv1_w"] = w(ks[0], (NCH, FEAT // 2, KS), (FEAT // 2) * KS)
    p["conv1_b"] = w(ks[1], (NCH,), (FEAT // 2) * KS)
    p["conv1b_w"] = w(ks[2], (NCH, NCH, KS), NCH * KS)
    p["conv1b_b"] = w(ks[3], (NCH,), NCH * KS)
    p["conv2_w"] = w(ks[4], (NCH, NCH, KS), NCH * KS)
    p["conv2_b"] = w(ks[5], (NCH,), NCH * KS)
    p["conv2b_w"] = w(ks[6], (NCH, NCH, KS), NCH * KS)
    p["conv2b_b"] = w(ks[7], (NCH,), NCH * KS)
    p["conv3_w"] = w(ks[8], (NCH, NCH, KS), NCH * KS)
    p["conv3_b"] = w(ks[9], (NCH,), NCH * KS)
    p["conv3b_w"] = w(ks[10], (NCH, NCH, KS), NCH * KS)
    p["conv3b_b"] = w(ks[11], (NCH,), NCH * KS)
    p["fc1_w"] = w(ks[12], (NFC, NFEAT), NFEAT)
    p["fc1_b"] = w(ks[13], (NFC,), NFEAT)
    p["fc2_w"] = w(ks[14], (1, NFC), NFC)
    p["fc2_b"] = w(ks[15], (1,), NFC)
    return p


def ref_forward(x, params):
    """Pure-JAX f32 reference matching the PyTorch forward (NCL layout)."""
    def conv(h, w, b):
        o = jax.lax.conv_general_dilated(
            h, w, window_strides=(1,), padding=((PAD, PAD),),
            dimension_numbers=("NCH", "OIH", "NCH"),
            precision=jax.lax.Precision.HIGHEST)
        return o + b[None, :, None]

    def pool(h):
        b_, c_, l_ = h.shape
        return jnp.max(h.reshape(b_, c_, l_ // 2, 2), axis=-1)

    xfeat = x[:, :FEAT // 2, :]
    xfft = x[:, FEAT // 2:, :]
    h = conv(xfeat, params["conv1_w"], params["conv1_b"])
    h = conv(jax.nn.relu(h), params["conv1b_w"], params["conv1b_b"])
    h = pool(jax.nn.relu(h))
    h = conv(h, params["conv2_w"], params["conv2_b"])
    h = conv(jax.nn.relu(h), params["conv2b_w"], params["conv2b_b"])
    h = pool(jax.nn.relu(h))
    h = conv(h, params["conv3_w"], params["conv3_b"])
    h = conv(jax.nn.relu(h), params["conv3b_w"], params["conv3b_b"])
    h = pool(jax.nn.relu(h))
    hf = h.reshape(h.shape[0], -1)
    ff = xfft.reshape(x.shape[0], -1)
    z = jnp.concatenate([hf, ff], axis=1)
    z = jax.nn.relu(jnp.dot(z, params["fc1_w"].T,
                            precision=jax.lax.Precision.HIGHEST) + params["fc1_b"])
    z = jax.nn.sigmoid(jnp.dot(z, params["fc2_w"].T,
                               precision=jax.lax.Precision.HIGHEST) + params["fc2_b"])
    return jnp.squeeze(z)


# ------------------------------------------------------------------- main ----
if __name__ == "__main__":
    key = jax.random.PRNGKey(0)
    pkey, xkey = jax.random.split(key)
    params = init_params(pkey)

    B = 2
    x = jax.random.normal(xkey, (B, FEAT, WS), jnp.float32)   # (batch, 6, 128)

    block_b = pick_block_b(B)                                  # -> 1: conv grid (2,)
    prepped = prepare_params(params, block_b=block_b)          # one-time, hoisted

    out = jax.block_until_ready(zipnet_forward(x, prepped))
    ref = jax.block_until_ready(ref_forward(x, params))

    assert out.shape == (B,), out.shape
    # bf16 MXU operands with f32 accumulation -> bf16-appropriate tolerance.
    np.testing.assert_allclose(np.asarray(out), np.asarray(ref), rtol=2e-2, atol=1e-2)

    print("KERNEL_OK")
</pallas_src>

<mosaic_0001>
module attributes {stable_mosaic.version = 11 : i64} {
  func.func @conv_stack_kernel(%arg0: i32, %arg1: memref<8x128xf32, #tpu.memory_space<vmem>>, %arg2: memref<72x40xbf16, #tpu.memory_space<vmem>>, %arg3: memref<72x1xf32, #tpu.memory_space<vmem>>, %arg4: memref<72x360xbf16, #tpu.memory_space<vmem>>, %arg5: memref<72x1xf32, #tpu.memory_space<vmem>>, %arg6: memref<72x360xbf16, #tpu.memory_space<vmem>>, %arg7: memref<72x1xf32, #tpu.memory_space<vmem>>, %arg8: memref<72x360xbf16, #tpu.memory_space<vmem>>, %arg9: memref<72x1xf32, #tpu.memory_space<vmem>>, %arg10: memref<72x360xbf16, #tpu.memory_space<vmem>>, %arg11: memref<72x1xf32, #tpu.memory_space<vmem>>, %arg12: memref<72x360xbf16, #tpu.memory_space<vmem>>, %arg13: memref<72x1xf32, #tpu.memory_space<vmem>>, %arg14: memref<128x16xbf16, #tpu.memory_space<vmem>>, %arg15: memref<1x72x16xf32, #tpu.memory_space<vmem>>) attributes {dimension_semantics = [#tpu.dimension_semantics<parallel>], iteration_bounds = array<i64: 2>, scalar_prefetch = 0 : i64, scratch_operands = 0 : i64, tpu.core_type = #tpu.core_type<tc>, window_params = [{transform_indices = @transform_0, window_bounds = array<i64: 8, 128>}, {pipeline_mode = #tpu.pipeline_mode<synchronous>, transform_indices = @transform_1, window_bounds = array<i64: 72, 40>}, {pipeline_mode = #tpu.pipeline_mode<synchronous>, transform_indices = @transform_2, window_bounds = array<i64: 72, 1>}, {pipeline_mode = #tpu.pipeline_mode<synchronous>, transform_indices = @transform_3, window_bounds = array<i64: 72, 360>}, {pipeline_mode = #tpu.pipeline_mode<synchronous>, transform_indices = @transform_4, window_bounds = array<i64: 72, 1>}, {pipeline_mode = #tpu.pipeline_mode<synchronous>, transform_indices = @transform_5, window_bounds = array<i64: 72, 360>}, {pipeline_mode = #tpu.pipeline_mode<synchronous>, transform_indices = @transform_6, window_bounds = array<i64: 72, 1>}, {pipeline_mode = #tpu.pipeline_mode<synchronous>, transform_indices = @transform_7, window_bounds = array<i64: 72, 360>}, {pipeline_mode = #tpu.pipeline_mode<synchronous>, transform_indices = @transform_8, window_bounds = array<i64: 72, 1>}, {pipeline_mode = #tpu.pipeline_mode<synchronous>, transform_indices = @transform_9, window_bounds = array<i64: 72, 360>}, {pipeline_mode = #tpu.pipeline_mode<synchronous>, transform_indices = @transform_10, window_bounds = array<i64: 72, 1>}, {pipeline_mode = #tpu.pipeline_mode<synchronous>, transform_indices = @transform_11, window_bounds = array<i64: 72, 360>}, {pipeline_mode = #tpu.pipeline_mode<synchronous>, transform_indices = @transform_12, window_bounds = array<i64: 72, 1>}, {pipeline_mode = #tpu.pipeline_mode<synchronous>, transform_indices = @transform_13, window_bounds = array<i64: 128, 16>}, {transform_indices = @transform_14, window_bounds = array<i64: 1, 72, 16>}]} {
    %0 = tpu.iota {dimensions = array<i32: 1>} : vector<1x128xi32>
    %c128_i32 = arith.constant 128 : i32
    %c0_i32 = arith.constant 0 : i32
    %1 = arith.cmpi eq, %c128_i32, %c0_i32 : i32
    %c1_i32 = arith.constant 1 : i32
    %2 = arith.select %1, %c1_i32, %c128_i32 : i32
    %3 = vector.broadcast %2 : i32 to vector<1x128xi32>
    %4 = arith.remsi %0, %3 : vector<1x128xi32>
    %c0_i32_0 = arith.constant 0 : i32
    %5 = vector.broadcast %c0_i32_0 : i32 to vector<1x128xi32>
    %6 = arith.cmpi ne, %4, %5 : vector<1x128xi32>
    %c0_i32_1 = arith.constant 0 : i32
    %7 = vector.broadcast %c0_i32_1 : i32 to vector<1x128xi32>
    %8 = arith.cmpi slt, %4, %7 : vector<1x128xi32>
    %c0_i32_2 = arith.constant 0 : i32
    %9 = arith.cmpi slt, %2, %c0_i32_2 : i32
    %10 = vector.broadcast %9 : i1 to vector<1x128xi1>
    %11 = vector.broadcast %10 : vector<1x128xi1> to vector<1x128xi1>
    %12 = arith.xori %8, %11 : vector<1x128xi1>
    %13 = arith.andi %12, %6 : vector<1x128xi1>
    %14 = vector.broadcast %2 : i32 to vector<1x128xi32>
    %15 = arith.addi %4, %14 : vector<1x128xi32>
    %16 = arith.select %13, %15, %4 : vector<1x128xi1>, vector<1x128xi32>
    %c-8_i32 = arith.constant -8 : i32
    %17 = vector.broadcast %c-8_i32 : i32 to vector<1x128xi32>
    %18 = arith.addi %16, %17 : vector<1x128xi32>
    %c0_i32_3 = arith.constant 0 : i32
    %19 = vector.broadcast %c0_i32_3 : i32 to vector<1x128xi32>
    %20 = arith.cmpi sge, %18, %19 : vector<1x128xi32>
    %c128_i32_4 = arith.constant 128 : i32
    %21 = vector.broadcast %c128_i32_4 : i32 to vector<1x128xi32>
    %22 = arith.cmpi slt, %18, %21 : vector<1x128xi32>
    %23 = arith.andi %20, %22 : vector<1x128xi1>
    %c-4_i32 = arith.constant -4 : i32
    %24 = vector.broadcast %c-4_i32 : i32 to vector<1x128xi32>
    %25 = arith.addi %16, %24 : vector<1x128xi32>
    %c0_i32_5 = arith.constant 0 : i32
    %26 = vector.broadcast %c0_i32_5 : i32 to vector<1x128xi32>
    %27 = arith.cmpi sge, %25, %26 : vector<1x128xi32>
    %c128_i32_6 = arith.constant 128 : i32
    %28 = vector.broadcast %c128_i32_6 : i32 to vector<1x128xi32>
    %29 = arith.cmpi slt, %25, %28 : vector<1x128xi32>
    %30 = arith.andi %27, %29 : vector<1x128xi1>
    %c-2_i32 = arith.constant -2 : i32
    %31 = vector.broadcast %c-2_i32 : i32 to vector<1x128xi32>
    %32 = arith.addi %16, %31 : vector<1x128xi32>
    %c0_i32_7 = arith.constant 0 : i32
    %33 = vector.broadcast %c0_i32_7 : i32 to vector<1x128xi32>
    %34 = arith.cmpi sge, %32, %33 : vector<1x128xi32>
    %c128_i32_8 = arith.constant 128 : i32
    %35 = vector.broadcast %c128_i32_8 : i32 to vector<1x128xi32>
    %36 = arith.cmpi slt, %32, %35 : vector<1x128xi32>
    %37 = arith.andi %34, %36 : vector<1x128xi1>
    %c-1_i32 = arith.constant -1 : i32
    %38 = vector.broadcast %c-1_i32 : i32 to vector<1x128xi32>
    %39 = arith.addi %16, %38 : vector<1x128xi32>
    %c0_i32_9 = arith.constant 0 : i32
    %40 = vector.broadcast %c0_i32_9 : i32 to vector<1x128xi32>
    %41 = arith.cmpi sge, %39, %40 : vector<1x128xi32>
    %c128_i32_10 = arith.constant 128 : i32
    %42 = vector.broadcast %c128_i32_10 : i32 to vector<1x128xi32>
    %43 = arith.cmpi slt, %39, %42 : vector<1x128xi32>
    %44 = arith.andi %41, %43 : vector<1x128xi1>
    %c1_i32_11 = arith.constant 1 : i32
    %45 = vector.broadcast %c1_i32_11 : i32 to vector<1x128xi32>
    %46 = arith.addi %16, %45 : vector<1x128xi32>
    %c0_i32_12 = arith.constant 0 : i32
    %47 = vector.broadcast %c0_i32_12 : i32 to vector<1x128xi32>
    %48 = arith.cmpi sge, %46, %47 : vector<1x128xi32>
    %c128_i32_13 = arith.constant 128 : i32
    %49 = vector.broadcast %c128_i32_13 : i32 to vector<1x128xi32>
    %50 = arith.cmpi slt, %46, %49 : vector<1x128xi32>
    %51 = arith.andi %48, %50 : vector<1x128xi1>
    %c2_i32 = arith.constant 2 : i32
    %52 = vector.broadcast %c2_i32 : i32 to vector<1x128xi32>
    %53 = arith.addi %16, %52 : vector<1x128xi32>
    %c0_i32_14 = arith.constant 0 : i32
    %54 = vector.broadcast %c0_i32_14 : i32 to vector<1x128xi32>
    %55 = arith.cmpi sge, %53, %54 : vector<1x128xi32>
    %c128_i32_15 = arith.constant 128 : i32
    %56 = vector.broadcast %c128_i32_15 : i32 to vector<1x128xi32>
    %57 = arith.cmpi slt, %53, %56 : vector<1x128xi32>
    %58 = arith.andi %55, %57 : vector<1x128xi1>
    %c4_i32 = arith.constant 4 : i32
    %59 = vector.broadcast %c4_i32 : i32 to vector<1x128xi32>
    %60 = arith.addi %16, %59 : vector<1x128xi32>
    %c0_i32_16 = arith.constant 0 : i32
    %61 = vector.broadcast %c0_i32_16 : i32 to vector<1x128xi32>
    %62 = arith.cmpi sge, %60, %61 : vector<1x128xi32>
    %c128_i32_17 = arith.constant 128 : i32
    %63 = vector.broadcast %c128_i32_17 : i32 to vector<1x128xi32>
    %64 = arith.cmpi slt, %60, %63 : vector<1x128xi32>
    %65 = arith.andi %62, %64 : vector<1x128xi1>
    %c8_i32 = arith.constant 8 : i32
    %66 = vector.broadcast %c8_i32 : i32 to vector<1x128xi32>
    %67 = arith.addi %16, %66 : vector<1x128xi32>
    %c0_i32_18 = arith.constant 0 : i32
    %68 = vector.broadcast %c0_i32_18 : i32 to vector<1x128xi32>
    %69 = arith.cmpi sge, %67, %68 : vector<1x128xi32>
    %c128_i32_19 = arith.constant 128 : i32
    %70 = vector.broadcast %c128_i32_19 : i32 to vector<1x128xi32>
    %71 = arith.cmpi slt, %67, %70 : vector<1x128xi32>
    %72 = arith.andi %69, %71 : vector<1x128xi1>
    %c0 = arith.constant 0 : index
    %c0_20 = arith.constant 0 : index
    %73 = vector.load %arg1[%c0, %c0_20] : memref<8x128xf32, #tpu.memory_space<vmem>>, vector<8x128xf32>
    %c2_i32_21 = arith.constant 2 : i32
    %74 = tpu.dynamic_rotate %73 by %c2_i32_21 dim 1 : vector<8x128xf32>, i32 -> vector<8x128xf32>
    %cst = arith.constant 0.000000e+00 : f32
    %75 = vector.shape_cast %37 : vector<1x128xi1> to vector<1x128xi1>
    %76 = vector.broadcast %75 : vector<1x128xi1> to vector<8x128xi1>
    %77 = vector.broadcast %cst : f32 to vector<8x128xf32>
    %78 = arith.select %76, %74, %77 : vector<8x128xi1>, vector<8x128xf32>
    %c1_i32_22 = arith.constant 1 : i32
    %79 = tpu.dynamic_rotate %73 by %c1_i32_22 dim 1 : vector<8x128xf32>, i32 -> vector<8x128xf32>
    %cst_23 = arith.constant 0.000000e+00 : f32
    %80 = vector.shape_cast %44 : vector<1x128xi1> to vector<1x128xi1>
    %81 = vector.broadcast %80 : vector<1x128xi1> to vector<8x128xi1>
    %82 = vector.broadcast %cst_23 : f32 to vector<8x128xf32>
    %83 = arith.select %81, %79, %82 : vector<8x128xi1>, vector<8x128xf32>
    %c127_i32 = arith.constant 127 : i32
    %84 = tpu.dynamic_rotate %73 by %c127_i32 dim 1 : vector<8x128xf32>, i32 -> vector<8x128xf32>
    %cst_24 = arith.constant 0.000000e+00 : f32
    %85 = vector.shape_cast %51 : vector<1x128xi1> to vector<1x128xi1>
    %86 = vector.broadcast %85 : vector<1x128xi1> to vector<8x128xi1>
    %87 = vector.broadcast %cst_24 : f32 to vector<8x128xf32>
    %88 = arith.select %86, %84, %87 : vector<8x128xi1>, vector<8x128xf32>
    %c126_i32 = arith.constant 126 : i32
    %89 = tpu.dynamic_rotate %73 by %c126_i32 dim 1 : vector<8x128xf32>, i32 -> vector<8x128xf32>
    %cst_25 = arith.constant 0.000000e+00 : f32
    %90 = vector.shape_cast %58 : vector<1x128xi1> to vector<1x128xi1>
    %91 = vector.broadcast %90 : vector<1x128xi1> to vector<8x128xi1>
    %92 = vector.broadcast %cst_25 : f32 to vector<8x128xf32>
    %93 = arith.select %91, %89, %92 : vector<8x128xi1>, vector<8x128xf32>
    %94 = tpu.concatenate %78, %83, %73, %88, %93 in 0 : vector<8x128xf32>, vector<8x128xf32>, vector<8x128xf32>, vector<8x128xf32>, vector<8x128xf32> -> vector<40x128xf32>
    %95 = arith.truncf %94 : vector<40x128xf32> to vector<40x128xbf16>
    %c0_26 = arith.constant 0 : index
    %c0_27 = arith.constant 0 : index
    %96 = vector.load %arg2[%c0_26, %c0_27] : memref<72x40xbf16, #tpu.memory_space<vmem>>, vector<72x40xbf16>
    %cst_28 = arith.constant dense<0.000000e+00> : vector<72x128xf32>
    %97 = tpu.matmul %96, %95, %cst_28 {dimension_numbers = #tpu.dot_dimension_numbers<[1], [0], [0], [1], [0, 0, 1, 1], [], []>} : vector<72x40xbf16>, vector<40x128xbf16>, vector<72x128xf32> -> vector<72x128xf32>
    %c0_29 = arith.constant 0 : index
    %c0_30 = arith.constant 0 : index
    %98 = vector.load %arg3[%c0_29, %c0_30] : memref<72x1xf32, #tpu.memory_space<vmem>>, vector<72x1xf32>
    %99 = vector.broadcast %98 : vector<72x1xf32> to vector<72x128xf32>
    %100 = arith.addf %97, %99 : vector<72x128xf32>
    %cst_31 = arith.constant 0.000000e+00 : f32
    %101 = vector.broadcast %cst_31 : f32 to vector<72x128xf32>
    %102 = arith.maximumf %100, %101 : vector<72x128xf32>
    %c2_i32_32 = arith.constant 2 : i32
    %103 = tpu.dynamic_rotate %102 by %c2_i32_32 dim 1 : vector<72x128xf32>, i32 -> vector<72x128xf32>
    %cst_33 = arith.constant 0.000000e+00 : f32
    %104 = vector.shape_cast %37 : vector<1x128xi1> to vector<1x128xi1>
    %105 = vector.broadcast %104 : vector<1x128xi1> to vector<72x128xi1>
    %106 = vector.broadcast %cst_33 : f32 to vector<72x128xf32>
    %107 = arith.select %105, %103, %106 : vector<72x128xi1>, vector<72x128xf32>
    %c1_i32_34 = arith.constant 1 : i32
    %108 = tpu.dynamic_rotate %102 by %c1_i32_34 dim 1 : vector<72x128xf32>, i32 -> vector<72x128xf32>
    %cst_35 = arith.constant 0.000000e+00 : f32
    %109 = vector.shape_cast %44 : vector<1x128xi1> to vector<1x128xi1>
    %110 = vector.broadcast %109 : vector<1x128xi1> to vector<72x128xi1>
    %111 = vector.broadcast %cst_35 : f32 to vector<72x128xf32>
    %112 = arith.select %110, %108, %111 : vector<72x128xi1>, vector<72x128xf32>
    %c127_i32_36 = arith.constant 127 : i32
    %113 = tpu.dynamic_rotate %102 by %c127_i32_36 dim 1 : vector<72x128xf32>, i32 -> vector<72x128xf32>
    %cst_37 = arith.constant 0.000000e+00 : f32
    %114 = vector.shape_cast %51 : vector<1x128xi1> to vector<1x128xi1>
    %115 = vector.broadcast %114 : vector<1x128xi1> to vector<72x128xi1>
    %116 = vector.broadcast %cst_37 : f32 to vector<72x128xf32>
    %117 = arith.select %115, %113, %116 : vector<72x128xi1>, vector<72x128xf32>
    %c126_i32_38 = arith.constant 126 : i32
    %118 = tpu.dynamic_rotate %102 by %c126_i32_38 dim 1 : vector<72x128xf32>, i32 -> vector<72x128xf32>
    %cst_39 = arith.constant 0.000000e+00 : f32
    %119 = vector.shape_cast %58 : vector<1x128xi1> to vector<1x128xi1>
    %120 = vector.broadcast %119 : vector<1x128xi1> to vector<72x128xi1>
    %121 = vector.broadcast %cst_39 : f32 to vector<72x128xf32>
    %122 = arith.select %120, %118, %121 : vector<72x128xi1>, vector<72x128xf32>
    %123 = tpu.concatenate %107, %112, %102, %117, %122 in 0 : vector<72x128xf32>, vector<72x128xf32>, vector<72x128xf32>, vector<72x128xf32>, vector<72x128xf32> -> vector<360x128xf32>
    %124 = arith.truncf %123 : vector<360x128xf32> to vector<360x128xbf16>
    %c0_40 = arith.constant 0 : index
    %c0_41 = arith.constant 0 : index
    %125 = vector.load %arg4[%c0_40, %c0_41] : memref<72x360xbf16, #tpu.memory_space<vmem>>, vector<72x360xbf16>
    %cst_42 = arith.constant dense<0.000000e+00> : vector<72x128xf32>
    %126 = tpu.matmul %125, %124, %cst_42 {dimension_numbers = #tpu.dot_dimension_numbers<[1], [0], [0], [1], [0, 0, 1, 1], [], []>} : vector<72x360xbf16>, vector<360x128xbf16>, vector<72x128xf32> -> vector<72x128xf32>
    %c0_43 = arith.constant 0 : index
    %c0_44 = arith.constant 0 : index
    %127 = vector.load %arg5[%c0_43, %c0_44] : memref<72x1xf32, #tpu.memory_space<vmem>>, vector<72x1xf32>
    %128 = vector.broadcast %127 : vector<72x1xf32> to vector<72x128xf32>
    %129 = arith.addf %126, %128 : vector<72x128xf32>
    %cst_45 = arith.constant 0.000000e+00 : f32
    %130 = vector.broadcast %cst_45 : f32 to vector<72x128xf32>
    %131 = arith.maximumf %129, %130 : vector<72x128xf32>
    %c127_i32_46 = arith.constant 127 : i32
    %132 = tpu.dynamic_rotate %131 by %c127_i32_46 dim 1 : vector<72x128xf32>, i32 -> vector<72x128xf32>
    %133 = arith.maximumf %131, %132 : vector<72x128xf32>
    %c4_i32_47 = arith.constant 4 : i32
    %134 = tpu.dynamic_rotate %133 by %c4_i32_47 dim 1 : vector<72x128xf32>, i32 -> vector<72x128xf32>
    %cst_48 = arith.constant 0.000000e+00 : f32
    %135 = vector.shape_cast %30 : vector<1x128xi1> to vector<1x128xi1>
    %136 = vector.broadcast %135 : vector<1x128xi1> to vector<72x128xi1>
    %137 = vector.broadcast %cst_48 : f32 to vector<72x128xf32>
    %138 = arith.select %136, %134, %137 : vector<72x128xi1>, vector<72x128xf32>
    %c2_i32_49 = arith.constant 2 : i32
    %139 = tpu.dynamic_rotate %133 by %c2_i32_49 dim 1 : vector<72x128xf32>, i32 -> vector<72x128xf32>
    %cst_50 = arith.constant 0.000000e+00 : f32
    %140 = vector.shape_cast %37 : vector<1x128xi1> to vector<1x128xi1>
    %141 = vector.broadcast %140 : vector<1x128xi1> to vector<72x128xi1>
    %142 = vector.broadcast %cst_50 : f32 to vector<72x128xf32>
    %143 = arith.select %141, %139, %142 : vector<72x128xi1>, vector<72x128xf32>
    %c126_i32_51 = arith.constant 126 : i32
    %144 = tpu.dynamic_rotate %133 by %c126_i32_51 dim 1 : vector<72x128xf32>, i32 -> vector<72x128xf32>
    %cst_52 = arith.constant 0.000000e+00 : f32
    %145 = vector.shape_cast %58 : vector<1x128xi1> to vector<1x128xi1>
    %146 = vector.broadcast %145 : vector<1x128xi1> to vector<72x128xi1>
    %147 = vector.broadcast %cst_52 : f32 to vector<72x128xf32>
    %148 = arith.select %146, %144, %147 : vector<72x128xi1>, vector<72x128xf32>
    %c124_i32 = arith.constant 124 : i32
    %149 = tpu.dynamic_rotate %133 by %c124_i32 dim 1 : vector<72x128xf32>, i32 -> vector<72x128xf32>
    %cst_53 = arith.constant 0.000000e+00 : f32
    %150 = vector.shape_cast %65 : vector<1x128xi1> to vector<1x128xi1>
    %151 = vector.broadcast %150 : vector<1x128xi1> to vector<72x128xi1>
    %152 = vector.broadcast %cst_53 : f32 to vector<72x128xf32>
    %153 = arith.select %151, %149, %152 : vector<72x128xi1>, vector<72x128xf32>
    %154 = tpu.concatenate %138, %143, %133, %148, %153 in 0 : vector<72x128xf32>, vector<72x128xf32>, vector<72x128xf32>, vector<72x128xf32>, vector<72x128xf32> -> vector<360x128xf32>
    %155 = arith.truncf %154 : vector<360x128xf32> to vector<360x128xbf16>
    %c0_54 = arith.constant 0 : index
    %c0_55 = arith.constant 0 : index
    %156 = vector.load %arg6[%c0_54, %c0_55] : memref<72x360xbf16, #tpu.memory_space<vmem>>, vector<72x360xbf16>
    %cst_56 = arith.constant dense<0.000000e+00> : vector<72x128xf32>
    %157 = tpu.matmul %156, %155, %cst_56 {dimension_numbers = #tpu.dot_dimension_numbers<[1], [0], [0], [1], [0, 0, 1, 1], [], []>} : vector<72x360xbf16>, vector<360x128xbf16>, vector<72x128xf32> -> vector<72x128xf32>
    %c0_57 = arith.constant 0 : index
    %c0_58 = arith.constant 0 : index
    %158 = vector.load %arg7[%c0_57, %c0_58] : memref<72x1xf32, #tpu.memory_space<vmem>>, vector<72x1xf32>
    %159 = vector.broadcast %158 : vector<72x1xf32> to vector<72x128xf32>
    %160 = arith.addf %157, %159 : vector<72x128xf32>
    %cst_59 = arith.constant 0.000000e+00 : f32
    %161 = vector.broadcast %cst_59 : f32 to vector<72x128xf32>
    %162 = arith.maximumf %160, %161 : vector<72x128xf32>
    %c4_i32_60 = arith.constant 4 : i32
    %163 = tpu.dynamic_rotate %162 by %c4_i32_60 dim 1 : vector<72x128xf32>, i32 -> vector<72x128xf32>
    %cst_61 = arith.constant 0.000000e+00 : f32
    %164 = vector.shape_cast %30 : vector<1x128xi1> to vector<1x128xi1>
    %165 = vector.broadcast %164 : vector<1x128xi1> to vector<72x128xi1>
    %166 = vector.broadcast %cst_61 : f32 to vector<72x128xf32>
    %167 = arith.select %165, %163, %166 : vector<72x128xi1>, vector<72x128xf32>
    %c2_i32_62 = arith.constant 2 : i32
    %168 = tpu.dynamic_rotate %162 by %c2_i32_62 dim 1 : vector<72x128xf32>, i32 -> vector<72x128xf32>
    %cst_63 = arith.constant 0.000000e+00 : f32
    %169 = vector.shape_cast %37 : vector<1x128xi1> to vector<1x128xi1>
    %170 = vector.broadcast %169 : vector<1x128xi1> to vector<72x128xi1>
    %171 = vector.broadcast %cst_63 : f32 to vector<72x128xf32>
    %172 = arith.select %170, %168, %171 : vector<72x128xi1>, vector<72x128xf32>
    %c126_i32_64 = arith.constant 126 : i32
    %173 = tpu.dynamic_rotate %162 by %c126_i32_64 dim 1 : vector<72x128xf32>, i32 -> vector<72x128xf32>
    %cst_65 = arith.constant 0.000000e+00 : f32
    %174 = vector.shape_cast %58 : vector<1x128xi1> to vector<1x128xi1>
    %175 = vector.broadcast %174 : vector<1x128xi1> to vector<72x128xi1>
    %176 = vector.broadcast %cst_65 : f32 to vector<72x128xf32>
    %177 = arith.select %175, %173, %176 : vector<72x128xi1>, vector<72x128xf32>
    %c124_i32_66 = arith.constant 124 : i32
    %178 = tpu.dynamic_rotate %162 by %c124_i32_66 dim 1 : vector<72x128xf32>, i32 -> vector<72x128xf32>
    %cst_67 = arith.constant 0.000000e+00 : f32
    %179 = vector.shape_cast %65 : vector<1x128xi1> to vector<1x128xi1>
    %180 = vector.broadcast %179 : vector<1x128xi1> to vector<72x128xi1>
    %181 = vector.broadcast %cst_67 : f32 to vector<72x128xf32>
    %182 = arith.select %180, %178, %181 : vector<72x128xi1>, vector<72x128xf32>
    %183 = tpu.concatenate %167, %172, %162, %177, %182 in 0 : vector<72x128xf32>, vector<72x128xf32>, vector<72x128xf32>, vector<72x128xf32>, vector<72x128xf32> -> vector<360x128xf32>
    %184 = arith.truncf %183 : vector<360x128xf32> to vector<360x128xbf16>
    %c0_68 = arith.constant 0 : index
    %c0_69 = arith.constant 0 : index
    %185 = vector.load %arg8[%c0_68, %c0_69] : memref<72x360xbf16, #tpu.memory_space<vmem>>, vector<72x360xbf16>
    %cst_70 = arith.constant dense<0.000000e+00> : vector<72x128xf32>
    %186 = tpu.matmul %185, %184, %cst_70 {dimension_numbers = #tpu.dot_dimension_numbers<[1], [0], [0], [1], [0, 0, 1, 1], [], []>} : vector<72x360xbf16>, vector<360x128xbf16>, vector<72x128xf32> -> vector<72x128xf32>
    %c0_71 = arith.constant 0 : index
    %c0_72 = arith.constant 0 : index
    %187 = vector.load %arg9[%c0_71, %c0_72] : memref<72x1xf32, #tpu.memory_space<vmem>>, vector<72x1xf32>
    %188 = vector.broadcast %187 : vector<72x1xf32> to vector<72x128xf32>
    %189 = arith.addf %186, %188 : vector<72x128xf32>
    %cst_73 = arith.constant 0.000000e+00 : f32
    %190 = vector.broadcast %cst_73 : f32 to vector<72x128xf32>
    %191 = arith.maximumf %189, %190 : vector<72x128xf32>
    %c126_i32_74 = arith.constant 126 : i32
    %192 = tpu.dynamic_rotate %191 by %c126_i32_74 dim 1 : vector<72x128xf32>, i32 -> vector<72x128xf32>
    %193 = arith.maximumf %191, %192 : vector<72x128xf32>
    %c8_i32_75 = arith.constant 8 : i32
    %194 = tpu.dynamic_rotate %193 by %c8_i32_75 dim 1 : vector<72x128xf32>, i32 -> vector<72x128xf32>
    %cst_76 = arith.constant 0.000000e+00 : f32
    %195 = vector.shape_cast %23 : vector<1x128xi1> to vector<1x128xi1>
    %196 = vector.broadcast %195 : vector<1x128xi1> to vector<72x128xi1>
    %197 = vector.broadcast %cst_76 : f32 to vector<72x128xf32>
    %198 = arith.select %196, %194, %197 : vector<72x128xi1>, vector<72x128xf32>
    %c4_i32_77 = arith.constant 4 : i32
    %199 = tpu.dynamic_rotate %193 by %c4_i32_77 dim 1 : vector<72x128xf32>, i32 -> vector<72x128xf32>
    %cst_78 = arith.constant 0.000000e+00 : f32
    %200 = vector.shape_cast %30 : vector<1x128xi1> to vector<1x128xi1>
    %201 = vector.broadcast %200 : vector<1x128xi1> to vector<72x128xi1>
    %202 = vector.broadcast %cst_78 : f32 to vector<72x128xf32>
    %203 = arith.select %201, %199, %202 : vector<72x128xi1>, vector<72x128xf32>
    %c124_i32_79 = arith.constant 124 : i32
    %204 = tpu.dynamic_rotate %193 by %c124_i32_79 dim 1 : vector<72x128xf32>, i32 -> vector<72x128xf32>
    %cst_80 = arith.constant 0.000000e+00 : f32
    %205 = vector.shape_cast %65 : vector<1x128xi1> to vector<1x128xi1>
    %206 = vector.broadcast %205 : vector<1x128xi1> to vector<72x128xi1>
    %207 = vector.broadcast %cst_80 : f32 to vector<72x128xf32>
    %208 = arith.select %206, %204, %207 : vector<72x128xi1>, vector<72x128xf32>
    %c120_i32 = arith.constant 120 : i32
    %209 = tpu.dynamic_rotate %193 by %c120_i32 dim 1 : vector<72x128xf32>, i32 -> vector<72x128xf32>
    %cst_81 = arith.constant 0.000000e+00 : f32
    %210 = vector.shape_cast %72 : vector<1x128xi1> to vector<1x128xi1>
    %211 = vector.broadcast %210 : vector<1x128xi1> to vector<72x128xi1>
    %212 = vector.broadcast %cst_81 : f32 to vector<72x128xf32>
    %213 = arith.select %211, %209, %212 : vector<72x128xi1>, vector<72x128xf32>
    %214 = tpu.concatenate %198, %203, %193, %208, %213 in 0 : vector<72x128xf32>, vector<72x128xf32>, vector<72x128xf32>, vector<72x128xf32>, vector<72x128xf32> -> vector<360x128xf32>
    %215 = arith.truncf %214 : vector<360x128xf32> to vector<360x128xbf16>
    %c0_82 = arith.constant 0 : index
    %c0_83 = arith.constant 0 : index
    %216 = vector.load %arg10[%c0_82, %c0_83] : memref<72x360xbf16, #tpu.memory_space<vmem>>, vector<72x360xbf16>
    %cst_84 = arith.constant dense<0.000000e+00> : vector<72x128xf32>
    %217 = tpu.matmul %216, %215, %cst_84 {dimension_numbers = #tpu.dot_dimension_numbers<[1], [0], [0], [1], [0, 0, 1, 1], [], []>} : vector<72x360xbf16>, vector<360x128xbf16>, vector<72x128xf32> -> vector<72x128xf32>
    %c0_85 = arith.constant 0 : index
    %c0_86 = arith.constant 0 : index
    %218 = vector.load %arg11[%c0_85, %c0_86] : memref<72x1xf32, #tpu.memory_space<vmem>>, vector<72x1xf32>
    %219 = vector.broadcast %218 : vector<72x1xf32> to vector<72x128xf32>
    %220 = arith.addf %217, %219 : vector<72x128xf32>
    %cst_87 = arith.constant 0.000000e+00 : f32
    %221 = vector.broadcast %cst_87 : f32 to vector<72x128xf32>
    %222 = arith.maximumf %220, %221 : vector<72x128xf32>
    %c8_i32_88 = arith.constant 8 : i32
    %223 = tpu.dynamic_rotate %222 by %c8_i32_88 dim 1 : vector<72x128xf32>, i32 -> vector<72x128xf32>
    %cst_89 = arith.constant 0.000000e+00 : f32
    %224 = vector.shape_cast %23 : vector<1x128xi1> to vector<1x128xi1>
    %225 = vector.broadcast %224 : vector<1x128xi1> to vector<72x128xi1>
    %226 = vector.broadcast %cst_89 : f32 to vector<72x128xf32>
    %227 = arith.select %225, %223, %226 : vector<72x128xi1>, vector<72x128xf32>
    %c4_i32_90 = arith.constant 4 : i32
    %228 = tpu.dynamic_rotate %222 by %c4_i32_90 dim 1 : vector<72x128xf32>, i32 -> vector<72x128xf32>
    %cst_91 = arith.constant 0.000000e+00 : f32
    %229 = vector.shape_cast %30 : vector<1x128xi1> to vector<1x128xi1>
    %230 = vector.broadcast %229 : vector<1x128xi1> to vector<72x128xi1>
    %231 = vector.broadcast %cst_91 : f32 to vector<72x128xf32>
    %232 = arith.select %230, %228, %231 : vector<72x128xi1>, vector<72x128xf32>
    %c124_i32_92 = arith.constant 124 : i32
    %233 = tpu.dynamic_rotate %222 by %c124_i32_92 dim 1 : vector<72x128xf32>, i32 -> vector<72x128xf32>
    %cst_93 = arith.constant 0.000000e+00 : f32
    %234 = vector.shape_cast %65 : vector<1x128xi1> to vector<1x128xi1>
    %235 = vector.broadcast %234 : vector<1x128xi1> to vector<72x128xi1>
    %236 = vector.broadcast %cst_93 : f32 to vector<72x128xf32>
    %237 = arith.select %235, %233, %236 : vector<72x128xi1>, vector<72x128xf32>
    %c120_i32_94 = arith.constant 120 : i32
    %238 = tpu.dynamic_rotate %222 by %c120_i32_94 dim 1 : vector<72x128xf32>, i32 -> vector<72x128xf32>
    %cst_95 = arith.constant 0.000000e+00 : f32
    %239 = vector.shape_cast %72 : vector<1x128xi1> to vector<1x128xi1>
    %240 = vector.broadcast %239 : vector<1x128xi1> to vector<72x128xi1>
    %241 = vector.broadcast %cst_95 : f32 to vector<72x128xf32>
    %242 = arith.select %240, %238, %241 : vector<72x128xi1>, vector<72x128xf32>
    %243 = tpu.concatenate %227, %232, %222, %237, %242 in 0 : vector<72x128xf32>, vector<72x128xf32>, vector<72x128xf32>, vector<72x128xf32>, vector<72x128xf32> -> vector<360x128xf32>
    %244 = arith.truncf %243 : vector<360x128xf32> to vector<360x128xbf16>
    %c0_96 = arith.constant 0 : index
    %c0_97 = arith.constant 0 : index
    %245 = vector.load %arg12[%c0_96, %c0_97] : memref<72x360xbf16, #tpu.memory_space<vmem>>, vector<72x360xbf16>
    %cst_98 = arith.constant dense<0.000000e+00> : vector<72x128xf32>
    %246 = tpu.matmul %245, %244, %cst_98 {dimension_numbers = #tpu.dot_dimension_numbers<[1], [0], [0], [1], [0, 0, 1, 1], [], []>} : vector<72x360xbf16>, vector<360x128xbf16>, vector<72x128xf32> -> vector<72x128xf32>
    %c0_99 = arith.constant 0 : index
    %c0_100 = arith.constant 0 : index
    %247 = vector.load %arg13[%c0_99, %c0_100] : memref<72x1xf32, #tpu.memory_space<vmem>>, vector<72x1xf32>
    %248 = vector.broadcast %247 : vector<72x1xf32> to vector<72x128xf32>
    %249 = arith.addf %246, %248 : vector<72x128xf32>
    %cst_101 = arith.constant 0.000000e+00 : f32
    %250 = vector.broadcast %cst_101 : f32 to vector<72x128xf32>
    %251 = arith.maximumf %249, %250 : vector<72x128xf32>
    %c124_i32_102 = arith.constant 124 : i32
    %252 = tpu.dynamic_rotate %251 by %c124_i32_102 dim 1 : vector<72x128xf32>, i32 -> vector<72x128xf32>
    %253 = arith.maximumf %251, %252 : vector<72x128xf32>
    %254 = arith.truncf %253 : vector<72x128xf32> to vector<72x128xbf16>
    %c0_103 = arith.constant 0 : index
    %c0_104 = arith.constant 0 : index
    %255 = vector.load %arg14[%c0_103, %c0_104] : memref<128x16xbf16, #tpu.memory_space<vmem>>, vector<128x16xbf16>
    %cst_105 = arith.constant dense<0.000000e+00> : vector<72x16xf32>
    %256 = tpu.matmul %254, %255, %cst_105 {dimension_numbers = #tpu.dot_dimension_numbers<[1], [0], [0], [1], [0, 0, 1, 1], [], []>} : vector<72x128xbf16>, vector<128x16xbf16>, vector<72x16xf32> -> vector<72x16xf32>
    %257 = vector.shape_cast %256 : vector<72x16xf32> to vector<1x72x16xf32>
    %c0_106 = arith.constant 0 : index
    %c0_107 = arith.constant 0 : index
    %c0_108 = arith.constant 0 : index
    %258 = vector.load %arg15[%c0_106, %c0_107, %c0_108] : memref<1x72x16xf32, #tpu.memory_space<vmem>>, vector<1x72x16xf32>
    tpu.vector_store %arg15[%c0_106, %c0_107, %c0_108], %257 {strides = array<i32>} : memref<1x72x16xf32, #tpu.memory_space<vmem>>, vector<1x72x16xf32>,
    return
  }
  func.func @transform_0(%arg0: i32) -> (i32, i32) {
    %c0_i32 = arith.constant 0 : i32
    %c0_i32_0 = arith.constant 0 : i32
    return %c0_i32, %arg0 : i32, i32
  }
  func.func @transform_1(%arg0: i32) -> (i32, i32) {
    %c0_i32 = arith.constant 0 : i32
    %c0_i32_0 = arith.constant 0 : i32
    %c0_i32_1 = arith.constant 0 : i32
    return %c0_i32, %c0_i32_0 : i32, i32
  }
  func.func @transform_2(%arg0: i32) -> (i32, i32) {
    %c0_i32 = arith.constant 0 : i32
    %c0_i32_0 = arith.constant 0 : i32
    %c0_i32_1 = arith.constant 0 : i32
    return %c0_i32, %c0_i32_0 : i32, i32
  }
  func.func @transform_3(%arg0: i32) -> (i32, i32) {
    %c0_i32 = arith.constant 0 : i32
    %c0_i32_0 = arith.constant 0 : i32
    %c0_i32_1 = arith.constant 0 : i32
    return %c0_i32, %c0_i32_0 : i32, i32
  }
  func.func @transform_4(%arg0: i32) -> (i32, i32) {
    %c0_i32 = arith.constant 0 : i32
    %c0_i32_0 = arith.constant 0 : i32
    %c0_i32_1 = arith.constant 0 : i32
    return %c0_i32, %c0_i32_0 : i32, i32
  }
  func.func @transform_5(%arg0: i32) -> (i32, i32) {
    %c0_i32 = arith.constant 0 : i32
    %c0_i32_0 = arith.constant 0 : i32
    %c0_i32_1 = arith.constant 0 : i32
    return %c0_i32, %c0_i32_0 : i32, i32
  }
  func.func @transform_6(%arg0: i32) -> (i32, i32) {
    %c0_i32 = arith.constant 0 : i32
    %c0_i32_0 = arith.constant 0 : i32
    %c0_i32_1 = arith.constant 0 : i32
    return %c0_i32, %c0_i32_0 : i32, i32
  }
  func.func @transform_7(%arg0: i32) -> (i32, i32) {
    %c0_i32 = arith.constant 0 : i32
    %c0_i32_0 = arith.constant 0 : i32
    %c0_i32_1 = arith.constant 0 : i32
    return %c0_i32, %c0_i32_0 : i32, i32
  }
  func.func @transform_8(%arg0: i32) -> (i32, i32) {
    %c0_i32 = arith.constant 0 : i32
    %c0_i32_0 = arith.constant 0 : i32
    %c0_i32_1 = arith.constant 0 : i32
    return %c0_i32, %c0_i32_0 : i32, i32
  }
  func.func @transform_9(%arg0: i32) -> (i32, i32) {
    %c0_i32 = arith.constant 0 : i32
    %c0_i32_0 = arith.constant 0 : i32
    %c0_i32_1 = arith.constant 0 : i32
    return %c0_i32, %c0_i32_0 : i32, i32
  }
  func.func @transform_10(%arg0: i32) -> (i32, i32) {
    %c0_i32 = arith.constant 0 : i32
    %c0_i32_0 = arith.constant 0 : i32
    %c0_i32_1 = arith.constant 0 : i32
    return %c0_i32, %c0_i32_0 : i32, i32
  }
  func.func @transform_11(%arg0: i32) -> (i32, i32) {
    %c0_i32 = arith.constant 0 : i32
    %c0_i32_0 = arith.constant 0 : i32
    %c0_i32_1 = arith.constant 0 : i32
    return %c0_i32, %c0_i32_0 : i32, i32
  }
  func.func @transform_12(%arg0: i32) -> (i32, i32) {
    %c0_i32 = arith.constant 0 : i32
    %c0_i32_0 = arith.constant 0 : i32
    %c0_i32_1 = arith.constant 0 : i32
    return %c0_i32, %c0_i32_0 : i32, i32
  }
  func.func @transform_13(%arg0: i32) -> (i32, i32) {
    %c0_i32 = arith.constant 0 : i32
    %c0_i32_0 = arith.constant 0 : i32
    %c0_i32_1 = arith.constant 0 : i32
    return %c0_i32, %c0_i32_0 : i32, i32
  }
  func.func @transform_14(%arg0: i32) -> (i32, i32, i32) {
    %c0_i32 = arith.constant 0 : i32
    %c0_i32_0 = arith.constant 0 : i32
    %c0_i32_1 = arith.constant 0 : i32
    return %arg0, %c0_i32, %c0_i32_0 : i32, i32, i32
  }
}

module attributes {stable_mosaic.version = 11 : i64} {
  func.func @fc_kernel(%arg0: i32, %arg1: memref<1536x128xbf16, #tpu.memory_space<vmem>>, %arg2: memref<30x1536xbf16, #tpu.memory_space<vmem>>, %arg3: memref<30x1xf32, #tpu.memory_space<vmem>>, %arg4: memref<30x1xf32, #tpu.memory_space<vmem>>, %arg5: memref<1x1xf32, #tpu.memory_space<vmem>>, %arg6: memref<1x128xf32, #tpu.memory_space<vmem>>) attributes {dimension_semantics = [#tpu.dimension_semantics<parallel>], iteration_bounds = array<i64: 1>, scalar_prefetch = 0 : i64, scratch_operands = 0 : i64, tpu.core_type = #tpu.core_type<tc>, window_params = [{transform_indices = @transform_0, window_bounds = array<i64: 1536, 128>}, {pipeline_mode = #tpu.pipeline_mode<synchronous>, transform_indices = @transform_1, window_bounds = array<i64: 30, 1536>}, {pipeline_mode = #tpu.pipeline_mode<synchronous>, transform_indices = @transform_2, window_bounds = array<i64: 30, 1>}, {pipeline_mode = #tpu.pipeline_mode<synchronous>, transform_indices = @transform_3, window_bounds = array<i64: 30, 1>}, {pipeline_mode = #tpu.pipeline_mode<synchronous>, transform_indices = @transform_4, window_bounds = array<i64: 1, 1>}, {transform_indices = @transform_5, window_bounds = array<i64: 1, 128>}]} {
    %c0 = arith.constant 0 : index
    %c0_0 = arith.constant 0 : index
    %0 = vector.load %arg2[%c0, %c0_0] : memref<30x1536xbf16, #tpu.memory_space<vmem>>, vector<30x1536xbf16>
    %c0_1 = arith.constant 0 : index
    %c0_2 = arith.constant 0 : index
    %1 = vector.load %arg1[%c0_1, %c0_2] : memref<1536x128xbf16, #tpu.memory_space<vmem>>, vector<1536x128xbf16>
    %cst = arith.constant dense<0.000000e+00> : vector<30x128xf32>
    %2 = tpu.matmul %0, %1, %cst {dimension_numbers = #tpu.dot_dimension_numbers<[1], [0], [0], [1], [0, 0, 1, 1], [], []>} : vector<30x1536xbf16>, vector<1536x128xbf16>, vector<30x128xf32> -> vector<30x128xf32>
    %c0_3 = arith.constant 0 : index
    %c0_4 = arith.constant 0 : index
    %3 = vector.load %arg3[%c0_3, %c0_4] : memref<30x1xf32, #tpu.memory_space<vmem>>, vector<30x1xf32>
    %4 = vector.broadcast %3 : vector<30x1xf32> to vector<30x128xf32>
    %5 = arith.addf %2, %4 : vector<30x128xf32>
    %cst_5 = arith.constant 0.000000e+00 : f32
    %6 = vector.broadcast %cst_5 : f32 to vector<30x128xf32>
    %7 = arith.maximumf %5, %6 : vector<30x128xf32>
    %c0_6 = arith.constant 0 : index
    %c0_7 = arith.constant 0 : index
    %8 = vector.load %arg4[%c0_6, %c0_7] : memref<30x1xf32, #tpu.memory_space<vmem>>, vector<30x1xf32>
    %9 = vector.broadcast %8 : vector<30x1xf32> to vector<30x128xf32>
    %10 = arith.mulf %7, %9 : vector<30x128xf32>
    %cst_8 = arith.constant dense<0.000000e+00> : vector<128xf32>
    %11 = vector.multi_reduction <add>, %10, %cst_8 [0] : vector<30x128xf32> to vector<128xf32>
    %12 = vector.shape_cast %11 : vector<128xf32> to vector<1x128xf32>
    %c0_9 = arith.constant 0 : index
    %c0_10 = arith.constant 0 : index
    %13 = vector.load %arg5[%c0_9, %c0_10] : memref<1x1xf32, #tpu.memory_space<vmem>>, vector<1x1xf32>
    %14 = vector.broadcast %13 : vector<1x1xf32> to vector<1x128xf32>
    %15 = arith.addf %12, %14 : vector<1x128xf32>
    %cst_11 = arith.constant 0.000000e+00 : f32
    %16 = vector.broadcast %cst_11 : f32 to vector<1x128xf32>
    %17 = arith.subf %16, %15 : vector<1x128xf32>
    %18 = math.exp %17 : vector<1x128xf32>
    %cst_12 = arith.constant 1.000000e+00 : f32
    %19 = vector.broadcast %cst_12 : f32 to vector<1x128xf32>
    %20 = arith.addf %19, %18 : vector<1x128xf32>
    %cst_13 = arith.constant 1.000000e+00 : f32
    %21 = vector.broadcast %cst_13 : f32 to vector<1x128xf32>
    %22 = arith.divf %21, %20 : vector<1x128xf32>
    %c0_14 = arith.constant 0 : index
    %c0_15 = arith.constant 0 : index
    %23 = vector.load %arg6[%c0_14, %c0_15] : memref<1x128xf32, #tpu.memory_space<vmem>>, vector<1x128xf32>
    tpu.vector_store %arg6[%c0_14, %c0_15], %22 {strides = array<i32>} : memref<1x128xf32, #tpu.memory_space<vmem>>, vector<1x128xf32>,
    return
  }
  func.func @transform_0(%arg0: i32) -> (i32, i32) {
    %c0_i32 = arith.constant 0 : i32
    %c0_i32_0 = arith.constant 0 : i32
    return %c0_i32, %arg0 : i32, i32
  }
  func.func @transform_1(%arg0: i32) -> (i32, i32) {
    %c0_i32 = arith.constant 0 : i32
    %c0_i32_0 = arith.constant 0 : i32
    %c0_i32_1 = arith.constant 0 : i32
    return %c0_i32, %c0_i32_0 : i32, i32
  }
  func.func @transform_2(%arg0: i32) -> (i32, i32) {
    %c0_i32 = arith.constant 0 : i32
    %c0_i32_0 = arith.constant 0 : i32
    %c0_i32_1 = arith.constant 0 : i32
    return %c0_i32, %c0_i32_0 : i32, i32
  }
  func.func @transform_3(%arg0: i32) -> (i32, i32) {
    %c0_i32 = arith.constant 0 : i32
    %c0_i32_0 = arith.constant 0 : i32
    %c0_i32_1 = arith.constant 0 : i32
    return %c0_i32, %c0_i32_0 : i32, i32
  }
  func.func @transform_4(%arg0: i32) -> (i32, i32) {
    %c0_i32 = arith.constant 0 : i32
    %c0_i32_0 = arith.constant 0 : i32
    %c0_i32_1 = arith.constant 0 : i32
    return %c0_i32, %c0_i32_0 : i32, i32
  }
  func.func @transform_5(%arg0: i32) -> (i32, i32) {
    %c0_i32 = arith.constant 0 : i32
    %c0_i32_0 = arith.constant 0 : i32
    return %c0_i32, %arg0 : i32, i32
  }
}

</mosaic_0001>

<llo_original>
// kernel: zipnet_forward.3
$region0: #{zipnet_forward.3}
  #allocation0 [shape = 'u32[]', space=smem, size = 0x4, offset = 0x4, fixed_abs, tag = 'smem constant byte address 0x4 - core index']
  #allocation1 [shape = 'u32[144,128]{1,0:T(1,128)}', space=vmem, size = 0x12000, scoped, tag = 'internal scratch']
  #allocation2 [shape = 'f32[1,1]{1,0:T(1,128)S(1)}', space=vmem, size = 0x200, scoped, tag = 'scoped memory for zipnet_forward.3']
  %s0 = inlined_call_operand.vmem [shape: bf16[1536,128], index: 0, kind: input, shape index: {}]
  %s1 = inlined_call_operand.vmem [shape: bf16[30,1536], index: 1, kind: input, shape index: {}]
  %s2 = inlined_call_operand.vmem [shape: f32[30,1], index: 2, kind: input, shape index: {}]
  %s3 = inlined_call_operand.vmem [shape: f32[30,1], index: 3, kind: input, shape index: {}]
  %s4 = inlined_call_operand.<no memory space> [shape: f32[1,1], index: 4, kind: input, shape index: {}]
  %s5 = inlined_call_operand.vmem [shape: f32[1,128], index: 5, kind: output, shape index: {}]
  %s6 = sld [smem:[#allocation0]]
  $region30: #{zipnet_forward.3} parent=0
    _
  %s8 = ssub.s32 1, %s6
  %s9 = scalar_select 0, %s8, %s6
  %v10 = vstv %s4
  %11 = vst [vmem:[#allocation2] sm:$0x1] %v10
  // Predicated region
  $region2: #{zipnet_forward.3} parent=0 // pred_check
    _
  $region3: #{zipnet_forward.3} parent=0 // pred_check_branch
    %13 = sbr.rel (0) target = $region5
  $region4: #{zipnet_forward.3} parent=0 // pred_region
    _
  $region5: #{zipnet_forward.3} parent=0 // pred_fallthru
    _
  // Predicated region
  $region6: #{zipnet_forward.3} parent=0 // pred_check
    _
  $region7: #{zipnet_forward.3} parent=0 // pred_check_branch
    %15 = sbr.rel (0) target = $region9
  $region8: #{zipnet_forward.3} parent=0 // pred_region
    _
  $region9: #{zipnet_forward.3} parent=0 // pred_fallthru
    _
  // Predicated region
  $region10: #{zipnet_forward.3} parent=0 // pred_check
    _
  $region11: #{zipnet_forward.3} parent=0 // pred_check_branch
    %17 = sbr.rel (0) target = $region13
  $region12: #{zipnet_forward.3} parent=0 // pred_region
    _
  $region13: #{zipnet_forward.3} parent=0 // pred_fallthru
    _
  // Predicated region
  $region14: #{zipnet_forward.3} parent=0 // pred_check
    _
  $region15: #{zipnet_forward.3} parent=0 // pred_check_branch
    %19 = sbr.rel (0) target = $region17
  $region16: #{zipnet_forward.3} parent=0 // pred_region
    _
  $region17: #{zipnet_forward.3} parent=0 // pred_fallthru
    _
  // Predicated region
  $region18: #{zipnet_forward.3} parent=0 // pred_check
    _
  $region19: #{zipnet_forward.3} parent=0 // pred_check_branch
    %21 = sbr.rel (0) target = $region21
  $region20: #{zipnet_forward.3} parent=0 // pred_region
    _
  $region21: #{zipnet_forward.3} parent=0 // pred_fallthru
    _
  %v23 = vld [vmem:[%s1] sm:$0xff]
  %v24 = vld [vmem:[%s1 + $0x8] sm:$0xff]
  %v25 = vld [vmem:[%s1 + $0x10] sm:$0xff]
  %v26 = vld [vmem:[%s1 + $0x18] sm:$0xff]
  %v27 = vld [vmem:[%s1 + $0x20] sm:$0xff]
  %v28 = vld [vmem:[%s1 + $0x28] sm:$0xff]
  %v29 = vld [vmem:[%s1 + $0x30] sm:$0xff]
  %v30 = vld [vmem:[%s1 + $0x38] sm:$0xff]
  %v31 = vld [vmem:[%s1 + $0x40] sm:$0xff]
  %v32 = vld [vmem:[%s1 + $0x48] sm:$0xff]
  %v33 = vld [vmem:[%s1 + $0x50] sm:$0xff]
  %v34 = vld [vmem:[%s1 + $0x58] sm:$0xff]
  %v35 = vld [vmem:[%s1 + $0x60] sm:$0xff]
  %v36 = vld [vmem:[%s1 + $0x68] sm:$0xff]
  %v37 = vld [vmem:[%s1 + $0x70] sm:$0xff]
  %v38 = vld [vmem:[%s1 + $0x78] sm:$0xff]
  %v39 = vld [vmem:[%s1 + $0x80] sm:$0xff]
  %v40 = vld [vmem:[%s1 + $0x88] sm:$0xff]
  %v41 = vld [vmem:[%s1 + $0x90] sm:$0x77]
  %v42 = vld [vmem:[%s1 + $0x98] sm:$0x77]
  %v43 = vld [vmem:[%s1 + $0xa0] sm:$0x77]
  %v44 = vld [vmem:[%s1 + $0xa8] sm:$0x77]
  %v45 = vld [vmem:[%s1 + $0xb0] sm:$0x77]
  %v46 = vld [vmem:[%s1 + $0xb8] sm:$0x77]
  %v47 = vld [vmem:[%s0] sm:$0xf]
  %v48 = vld [vmem:[%s0 + $0x4] sm:$0xf]
  %v49 = vld [vmem:[%s0 + $0x8] sm:$0xf]
  %v50 = vld [vmem:[%s0 + $0xc] sm:$0xf]
  %v51 = vld [vmem:[%s0 + $0x10] sm:$0xf]
  %v52 = vld [vmem:[%s0 + $0x14] sm:$0xf]
  %v53 = vld [vmem:[%s0 + $0x18] sm:$0xf]
  %v54 = vld [vmem:[%s0 + $0x1c] sm:$0xf]
  %v55 = vld [vmem:[%s0 + $0x20] sm:$0xf]
  %v56 = vld [vmem:[%s0 + $0x24] sm:$0xf]
  %v57 = vld [vmem:[%s0 + $0x28] sm:$0xf]
  %v58 = vld [vmem:[%s0 + $0x2c] sm:$0xf]
  %v59 = vld [vmem:[%s0 + $0x30] sm:$0xf]
  %v60 = vld [vmem:[%s0 + $0x34] sm:$0xf]
  %v61 = vld [vmem:[%s0 + $0x38] sm:$0xf]
  %v62 = vld [vmem:[%s0 + $0x3c] sm:$0xf]
  %v63 = vld [vmem:[%s0 + $0x40] sm:$0xf]
  %v64 = vld [vmem:[%s0 + $0x44] sm:$0xf]
  %v65 = vld [vmem:[%s0 + $0x48] sm:$0xf]
  %v66 = vld [vmem:[%s0 + $0x4c] sm:$0xf]
  %v67 = vld [vmem:[%s0 + $0x50] sm:$0xf]
  %v68 = vld [vmem:[%s0 + $0x54] sm:$0xf]
  %v69 = vld [vmem:[%s0 + $0x58] sm:$0xf]
  %v70 = vld [vmem:[%s0 + $0x5c] sm:$0xf]
  %v71 = vld [vmem:[%s0 + $0x60] sm:$0xf]
  %v72 = vld [vmem:[%s0 + $0x64] sm:$0xf]
  %v73 = vld [vmem:[%s0 + $0x68] sm:$0xf]
  %v74 = vld [vmem:[%s0 + $0x6c] sm:$0xf]
  %v75 = vld [vmem:[%s0 + $0x70] sm:$0xf]
  %v76 = vld [vmem:[%s0 + $0x74] sm:$0xf]
  %v77 = vld [vmem:[%s0 + $0x78] sm:$0xf]
  %v78 = vld [vmem:[%s0 + $0x7c] sm:$0xf]
  %v79 = vld [vmem:[%s0 + $0x80] sm:$0xf]
  %v80 = vld [vmem:[%s0 + $0x84] sm:$0xf]
  %v81 = vld [vmem:[%s0 + $0x88] sm:$0xf]
  %v82 = vld [vmem:[%s0 + $0x8c] sm:$0xf]
  %v83 = vld [vmem:[%s0 + $0x90] sm:$0xf]
  %v84 = vld [vmem:[%s0 + $0x94] sm:$0xf]
  %v85 = vld [vmem:[%s0 + $0x98] sm:$0xf]
  %v86 = vld [vmem:[%s0 + $0x9c] sm:$0xf]
  %v87 = vld [vmem:[%s0 + $0xa0] sm:$0xf]
  %v88 = vld [vmem:[%s0 + $0xa4] sm:$0xf]
  %v89 = vld [vmem:[%s0 + $0xa8] sm:$0xf]
  %v90 = vld [vmem:[%s0 + $0xac] sm:$0xf]
  %v91 = vld [vmem:[%s0 + $0xb0] sm:$0xf]
  %v92 = vld [vmem:[%s0 + $0xb4] sm:$0xf]
  %v93 = vld [vmem:[%s0 + $0xb8] sm:$0xf]
  %v94 = vld [vmem:[%s0 + $0xbc] sm:$0xf]
  %v95 = vld [vmem:[%s0 + $0xc0] sm:$0xf]
  %v96 = vld [vmem:[%s0 + $0xc4] sm:$0xf]
  %v97 = vld [vmem:[%s0 + $0xc8] sm:$0xf]
  %v98 = vld [vmem:[%s0 + $0xcc] sm:$0xf]
  %v99 = vld [vmem:[%s0 + $0xd0] sm:$0xf]
  %v100 = vld [vmem:[%s0 + $0xd4] sm:$0xf]
  %v101 = vld [vmem:[%s0 + $0xd8] sm:$0xf]
  %v102 = vld [vmem:[%s0 + $0xdc] sm:$0xf]
  %v103 = vld [vmem:[%s0 + $0xe0] sm:$0xf]
  %v104 = vld [vmem:[%s0 + $0xe4] sm:$0xf]
  %v105 = vld [vmem:[%s0 + $0xe8] sm:$0xf]
  %v106 = vld [vmem:[%s0 + $0xec] sm:$0xf]
  %v107 = vld [vmem:[%s0 + $0xf0] sm:$0xf]
  %v108 = vld [vmem:[%s0 + $0xf4] sm:$0xf]
  %v109 = vld [vmem:[%s0 + $0xf8] sm:$0xf]
  %v110 = vld [vmem:[%s0 + $0xfc] sm:$0xf]
  %v111 = vld [vmem:[%s0 + $0x100] sm:$0xf]
  %v112 = vld [vmem:[%s0 + $0x104] sm:$0xf]
  %v113 = vld [vmem:[%s0 + $0x108] sm:$0xf]
  %v114 = vld [vmem:[%s0 + $0x10c] sm:$0xf]
  %v115 = vld [vmem:[%s0 + $0x110] sm:$0xf]
  %v116 = vld [vmem:[%s0 + $0x114] sm:$0xf]
  %v117 = vld [vmem:[%s0 + $0x118] sm:$0xf]
  %v118 = vld [vmem:[%s0 + $0x11c] sm:$0xf]
  %v119 = vld [vmem:[%s0 + $0x120] sm:$0xf]
  %v120 = vld [vmem:[%s0 + $0x124] sm:$0xf]
  %v121 = vld [vmem:[%s0 + $0x128] sm:$0xf]
  %v122 = vld [vmem:[%s0 + $0x12c] sm:$0xf]
  %v123 = vld [vmem:[%s0 + $0x130] sm:$0xf]
  %v124 = vld [vmem:[%s0 + $0x134] sm:$0xf]
  %v125 = vld [vmem:[%s0 + $0x138] sm:$0xf]
  %v126 = vld [vmem:[%s0 + $0x13c] sm:$0xf]
  %v127 = vld [vmem:[%s0 + $0x140] sm:$0xf]
  %v128 = vld [vmem:[%s0 + $0x144] sm:$0xf]
  %v129 = vld [vmem:[%s0 + $0x148] sm:$0xf]
  %v130 = vld [vmem:[%s0 + $0x14c] sm:$0xf]
  %v131 = vld [vmem:[%s0 + $0x150] sm:$0xf]
  %v132 = vld [vmem:[%s0 + $0x154] sm:$0xf]
  %v133 = vld [vmem:[%s0 + $0x158] sm:$0xf]
  %v134 = vld [vmem:[%s0 + $0x15c] sm:$0xf]
  %v135 = vld [vmem:[%s0 + $0x160] sm:$0xf]
  %v136 = vld [vmem:[%s0 + $0x164] sm:$0xf]
  %v137 = vld [vmem:[%s0 + $0x168] sm:$0xf]
  %v138 = vld [vmem:[%s0 + $0x16c] sm:$0xf]
  %v139 = vld [vmem:[%s0 + $0x170] sm:$0xf]
  %v140 = vld [vmem:[%s0 + $0x174] sm:$0xf]
  %v141 = vld [vmem:[%s0 + $0x178] sm:$0xf]
  %v142 = vld [vmem:[%s0 + $0x17c] sm:$0xf]
  %v143 = vld [vmem:[%s0 + $0x180] sm:$0xf]
  %v144 = vld [vmem:[%s0 + $0x184] sm:$0xf]
  %v145 = vld [vmem:[%s0 + $0x188] sm:$0xf]
  %v146 = vld [vmem:[%s0 + $0x18c] sm:$0xf]
  %v147 = vld [vmem:[%s0 + $0x190] sm:$0xf]
  %v148 = vld [vmem:[%s0 + $0x194] sm:$0xf]
  %v149 = vld [vmem:[%s0 + $0x198] sm:$0xf]
  %v150 = vld [vmem:[%s0 + $0x19c] sm:$0xf]
  %v151 = vld [vmem:[%s0 + $0x1a0] sm:$0xf]
  %v152 = vld [vmem:[%s0 + $0x1a4] sm:$0xf]
  %v153 = vld [vmem:[%s0 + $0x1a8] sm:$0xf]
  %v154 = vld [vmem:[%s0 + $0x1ac] sm:$0xf]
  %v155 = vld [vmem:[%s0 + $0x1b0] sm:$0xf]
  %v156 = vld [vmem:[%s0 + $0x1b4] sm:$0xf]
  %v157 = vld [vmem:[%s0 + $0x1b8] sm:$0xf]
  %v158 = vld [vmem:[%s0 + $0x1bc] sm:$0xf]
  %v159 = vld [vmem:[%s0 + $0x1c0] sm:$0xf]
  %v160 = vld [vmem:[%s0 + $0x1c4] sm:$0xf]
  %v161 = vld [vmem:[%s0 + $0x1c8] sm:$0xf]
  %v162 = vld [vmem:[%s0 + $0x1cc] sm:$0xf]
  %v163 = vld [vmem:[%s0 + $0x1d0] sm:$0xf]
  %v164 = vld [vmem:[%s0 + $0x1d4] sm:$0xf]
  %v165 = vld [vmem:[%s0 + $0x1d8] sm:$0xf]
  %v166 = vld [vmem:[%s0 + $0x1dc] sm:$0xf]
  %v167 = vld [vmem:[%s0 + $0x1e0] sm:$0xf]
  %v168 = vld [vmem:[%s0 + $0x1e4] sm:$0xf]
  %v169 = vld [vmem:[%s0 + $0x1e8] sm:$0xf]
  %v170 = vld [vmem:[%s0 + $0x1ec] sm:$0xf]
  %v171 = vld [vmem:[%s0 + $0x1f0] sm:$0xf]
  %v172 = vld [vmem:[%s0 + $0x1f4] sm:$0xf]
  %v173 = vld [vmem:[%s0 + $0x1f8] sm:$0xf]
  %v174 = vld [vmem:[%s0 + $0x1fc] sm:$0xf]
  %v175 = vld [vmem:[%s0 + $0x200] sm:$0xf]
  %v176 = vld [vmem:[%s0 + $0x204] sm:$0xf]
  %v177 = vld [vmem:[%s0 + $0x208] sm:$0xf]
  %v178 = vld [vmem:[%s0 + $0x20c] sm:$0xf]
  %v179 = vld [vmem:[%s0 + $0x210] sm:$0xf]
  %v180 = vld [vmem:[%s0 + $0x214] sm:$0xf]
  %v181 = vld [vmem:[%s0 + $0x218] sm:$0xf]
  %v182 = vld [vmem:[%s0 + $0x21c] sm:$0xf]
  %v183 = vld [vmem:[%s0 + $0x220] sm:$0xf]
  %v184 = vld [vmem:[%s0 + $0x224] sm:$0xf]
  %v185 = vld [vmem:[%s0 + $0x228] sm:$0xf]
  %v186 = vld [vmem:[%s0 + $0x22c] sm:$0xf]
  %v187 = vld [vmem:[%s0 + $0x230] sm:$0xf]
  %v188 = vld [vmem:[%s0 + $0x234] sm:$0xf]
  %v189 = vld [vmem:[%s0 + $0x238] sm:$0xf]
  %v190 = vld [vmem:[%s0 + $0x23c] sm:$0xf]
  %v191 = vld [vmem:[%s0 + $0x240] sm:$0xf]
  %v192 = vld [vmem:[%s0 + $0x244] sm:$0xf]
  %v193 = vld [vmem:[%s0 + $0x248] sm:$0xf]
  %v194 = vld [vmem:[%s0 + $0x24c] sm:$0xf]
  %v195 = vld [vmem:[%s0 + $0x250] sm:$0xf]
  %v196 = vld [vmem:[%s0 + $0x254] sm:$0xf]
  %v197 = vld [vmem:[%s0 + $0x258] sm:$0xf]
  %v198 = vld [vmem:[%s0 + $0x25c] sm:$0xf]
  %v199 = vld [vmem:[%s0 + $0x260] sm:$0xf]
  %v200 = vld [vmem:[%s0 + $0x264] sm:$0xf]
  %v201 = vld [vmem:[%s0 + $0x268] sm:$0xf]
  %v202 = vld [vmem:[%s0 + $0x26c] sm:$0xf]
  %v203 = vld [vmem:[%s0 + $0x270] sm:$0xf]
  %v204 = vld [vmem:[%s0 + $0x274] sm:$0xf]
  %v205 = vld [vmem:[%s0 + $0x278] sm:$0xf]
  %v206 = vld [vmem:[%s0 + $0x27c] sm:$0xf]
  %v207 = vld [vmem:[%s0 + $0x280] sm:$0xf]
  %v208 = vld [vmem:[%s0 + $0x284] sm:$0xf]
  %v209 = vld [vmem:[%s0 + $0x288] sm:$0xf]
  %v210 = vld [vmem:[%s0 + $0x28c] sm:$0xf]
  %v211 = vld [vmem:[%s0 + $0x290] sm:$0xf]
  %v212 = vld [vmem:[%s0 + $0x294] sm:$0xf]
  %v213 = vld [vmem:[%s0 + $0x298] sm:$0xf]
  %v214 = vld [vmem:[%s0 + $0x29c] sm:$0xf]
  %v215 = vld [vmem:[%s0 + $0x2a0] sm:$0xf]
  %v216 = vld [vmem:[%s0 + $0x2a4] sm:$0xf]
  %v217 = vld [vmem:[%s0 + $0x2a8] sm:$0xf]
  %v218 = vld [vmem:[%s0 + $0x2ac] sm:$0xf]
  %v219 = vld [vmem:[%s0 + $0x2b0] sm:$0xf]
  %v220 = vld [vmem:[%s0 + $0x2b4] sm:$0xf]
  %v221 = vld [vmem:[%s0 + $0x2b8] sm:$0xf]
  %v222 = vld [vmem:[%s0 + $0x2bc] sm:$0xf]
  %v223 = vld [vmem:[%s0 + $0x2c0] sm:$0xf]
  %v224 = vld [vmem:[%s0 + $0x2c4] sm:$0xf]
  %v225 = vld [vmem:[%s0 + $0x2c8] sm:$0xf]
  %v226 = vld [vmem:[%s0 + $0x2cc] sm:$0xf]
  %v227 = vld [vmem:[%s0 + $0x2d0] sm:$0xf]
  %v228 = vld [vmem:[%s0 + $0x2d4] sm:$0xf]
  %v229 = vld [vmem:[%s0 + $0x2d8] sm:$0xf]
  %v230 = vld [vmem:[%s0 + $0x2dc] sm:$0xf]
  %v231 = vld [vmem:[%s0 + $0x2e0] sm:$0xf]
  %v232 = vld [vmem:[%s0 + $0x2e4] sm:$0xf]
  %v233 = vld [vmem:[%s0 + $0x2e8] sm:$0xf]
  %v234 = vld [vmem:[%s0 + $0x2ec] sm:$0xf]
  %v235 = vld [vmem:[%s0 + $0x2f0] sm:$0xf]
  %v236 = vld [vmem:[%s0 + $0x2f4] sm:$0xf]
  %v237 = vld [vmem:[%s0 + $0x2f8] sm:$0xf]
  %v238 = vld [vmem:[%s0 + $0x2fc] sm:$0xf]
  %v239 = vld [vmem:[%s2] sm:$0xff]
  %v240 = vld [vmem:[%s2 + $0x8] sm:$0xff]
  %v241 = vld [vmem:[%s2 + $0x10] sm:$0xff]
  %v242 = vld [vmem:[%s2 + $0x18] sm:$0x3f]
  %244 = vset.pattern.permute.xlu0 0
  %245 = vperm.xlu0 %244, %v239
  %v246 = vpop.permute.xlu0 %245
  %249 = vset.pattern.permute.xlu0 0
  %250 = vperm.xlu0 %249, %v240
  %v251 = vpop.permute.xlu0 %250
  %254 = vset.pattern.permute.xlu0 0
  %255 = vperm.xlu0 %254, %v241
  %v256 = vpop.permute.xlu0 %255
  %259 = vset.pattern.permute.xlu0 0
  %260 = vperm.xlu0 %259, %v242
  %v261 = vpop.permute.xlu0 %260
  %v287 = vunpack.c.l.b16 %v23
  %v288 = vunpack.c.h.b16 %v23
  %v289 = vunpack.c.l.b16 %v24
  %v290 = vunpack.c.h.b16 %v24
  %v291 = vunpack.c.l.b16 %v25
  %v292 = vunpack.c.h.b16 %v25
  %v293 = vunpack.c.l.b16 %v26
  %v294 = vunpack.c.h.b16 %v26
  %v295 = vunpack.c.l.b16 %v27
  %v296 = vunpack.c.h.b16 %v27
  %v297 = vunpack.c.l.b16 %v28
  %v298 = vunpack.c.h.b16 %v28
  %v299 = vunpack.c.l.b16 %v29
  %v300 = vunpack.c.h.b16 %v29
  %v301 = vunpack.c.l.b16 %v30
  %v302 = vunpack.c.h.b16 %v30
  %v303 = vunpack.c.l.b16 %v31
  %v304 = vunpack.c.h.b16 %v31
  %v305 = vunpack.c.l.b16 %v32
  %v306 = vunpack.c.h.b16 %v32
  %v307 = vunpack.c.l.b16 %v33
  %v308 = vunpack.c.h.b16 %v33
  %v309 = vunpack.c.l.b16 %v34
  %v310 = vunpack.c.h.b16 %v34
  %v311 = vunpack.c.l.b16 %v35
  %v312 = vunpack.c.h.b16 %v35
  %v313 = vunpack.c.l.b16 %v36
  %v314 = vunpack.c.h.b16 %v36
  %v315 = vunpack.c.l.b16 %v37
  %v316 = vunpack.c.h.b16 %v37
  %v317 = vunpack.c.l.b16 %v38
  %v318 = vunpack.c.h.b16 %v38
  %v319 = vunpack.c.l.b16 %v39
  %v320 = vunpack.c.h.b16 %v39
  %v321 = vunpack.c.l.b16 %v40
  %v322 = vunpack.c.h.b16 %v40
  %v323 = vunpack.c.l.b16 %v41
  %v324 = vunpack.c.h.b16 %v41
  %v325 = vunpack.c.l.b16 %v42
  %v326 = vunpack.c.h.b16 %v42
  %v327 = vunpack.c.l.b16 %v43
  %v328 = vunpack.c.h.b16 %v43
  %v329 = vunpack.c.l.b16 %v44
  %v330 = vunpack.c.h.b16 %v44
  %v331 = vunpack.c.l.b16 %v45
  %v332 = vunpack.c.h.b16 %v45
  %v333 = vunpack.c.l.b16 %v46
  %v334 = vunpack.c.h.b16 %v46
  %v335 = vpack.c.b16 %v299, %v287
  %v336 = vpack.c.b16 %v300, %v288
  %v337 = vpack.c.b16 %v301, %v289
  %v338 = vpack.c.b16 %v302, %v290
  %v339 = vpack.c.b16 %v303, %v291
  %v340 = vpack.c.b16 %v304, %v292
  %v341 = vpack.c.b16 %v305, %v293
  %v342 = vpack.c.b16 %v306, %v294
  %v343 = vpack.c.b16 %v307, %v295
  %v344 = vpack.c.b16 %v308, %v296
  %v345 = vpack.c.b16 %v309, %v297
  %v346 = vpack.c.b16 %v310, %v298
  %v347 = vpack.c.b16 %v323, %v311
  %v348 = vpack.c.b16 %v324, %v312
  %v349 = vpack.c.b16 %v325, %v313
  %v350 = vpack.c.b16 %v326, %v314
  %v351 = vpack.c.b16 %v327, %v315
  %v352 = vpack.c.b16 %v328, %v316
  %v353 = vpack.c.b16 %v329, %v317
  %v354 = vpack.c.b16 %v330, %v318
  %v355 = vpack.c.b16 %v331, %v319
  %v356 = vpack.c.b16 %v332, %v320
  %v357 = vpack.c.b16 %v333, %v321
  %v358 = vpack.c.b16 %v334, %v322
  %v575 = vunpack.c.l.b16 %v47
  %v576 = vunpack.c.l.b16 %v48
  %v577 = vunpack.c.l.b16 %v49
  %v578 = vunpack.c.l.b16 %v50
  %v579 = vunpack.c.l.b16 %v51
  %v580 = vunpack.c.l.b16 %v52
  %v581 = vunpack.c.l.b16 %v53
  %v582 = vunpack.c.l.b16 %v54
  %v583 = vunpack.c.l.b16 %v55
  %v584 = vunpack.c.l.b16 %v56
  %v585 = vunpack.c.l.b16 %v57
  %v586 = vunpack.c.l.b16 %v58
  %v587 = vunpack.c.l.b16 %v59
  %v588 = vunpack.c.l.b16 %v60
  %v589 = vunpack.c.l.b16 %v61
  %v590 = vunpack.c.l.b16 %v62
  %v591 = vunpack.c.l.b16 %v63
  %v592 = vunpack.c.l.b16 %v64
  %v593 = vunpack.c.l.b16 %v65
  %v594 = vunpack.c.l.b16 %v66
  %v595 = vunpack.c.l.b16 %v67
  %v596 = vunpack.c.l.b16 %v68
  %v597 = vunpack.c.l.b16 %v69
  %v598 = vunpack.c.l.b16 %v70
  %v599 = vunpack.c.l.b16 %v71
  %v600 = vunpack.c.l.b16 %v72
  %v601 = vunpack.c.l.b16 %v73
  %v602 = vunpack.c.l.b16 %v74
  %v603 = vunpack.c.l.b16 %v75
  %v604 = vunpack.c.l.b16 %v76
  %v605 = vunpack.c.l.b16 %v77
  %v606 = vunpack.c.l.b16 %v78
  %v607 = vunpack.c.l.b16 %v79
  %v608 = vunpack.c.l.b16 %v80
  %v609 = vunpack.c.l.b16 %v81
  %v610 = vunpack.c.l.b16 %v82
  %v611 = vunpack.c.l.b16 %v83
  %v612 = vunpack.c.l.b16 %v84
  %v613 = vunpack.c.l.b16 %v85
  %v614 = vunpack.c.l.b16 %v86
  %v615 = vunpack.c.l.b16 %v87
  %v616 = vunpack.c.l.b16 %v88
  %v617 = vunpack.c.l.b16 %v89
  %v618 = vunpack.c.l.b16 %v90
  %v619 = vunpack.c.l.b16 %v91
  %v620 = vunpack.c.l.b16 %v92
  %v621 = vunpack.c.l.b16 %v93
  %v622 = vunpack.c.l.b16 %v94
  %v623 = vunpack.c.l.b16 %v95
  %v624 = vunpack.c.l.b16 %v96
  %v625 = vunpack.c.l.b16 %v97
  %v626 = vunpack.c.l.b16 %v98
  %v627 = vunpack.c.l.b16 %v99
  %v628 = vunpack.c.l.b16 %v100
  %v629 = vunpack.c.l.b16 %v101
  %v630 = vunpack.c.l.b16 %v102
  %v631 = vunpack.c.l.b16 %v103
  %v632 = vunpack.c.l.b16 %v104
  %v633 = vunpack.c.l.b16 %v105
  %v634 = vunpack.c.l.b16 %v106
  %v635 = vunpack.c.l.b16 %v107
  %v636 = vunpack.c.l.b16 %v108
  %v637 = vunpack.c.l.b16 %v109
  %v638 = vunpack.c.l.b16 %v110
  %v639 = vunpack.c.l.b16 %v111
  %v640 = vunpack.c.l.b16 %v112
  %v641 = vunpack.c.l.b16 %v113
  %v642 = vunpack.c.l.b16 %v114
  %v643 = vunpack.c.l.b16 %v115
  %v644 = vunpack.c.l.b16 %v116
  %v645 = vunpack.c.l.b16 %v117
  %v646 = vunpack.c.l.b16 %v118
  %v647 = vunpack.c.l.b16 %v119
  %v648 = vunpack.c.l.b16 %v120
  %v649 = vunpack.c.l.b16 %v121
  %v650 = vunpack.c.l.b16 %v122
  %v651 = vunpack.c.l.b16 %v123
  %v652 = vunpack.c.l.b16 %v124
  %v653 = vunpack.c.l.b16 %v125
  %v654 = vunpack.c.l.b16 %v126
  %v655 = vunpack.c.l.b16 %v127
  %v656 = vunpack.c.l.b16 %v128
  %v657 = vunpack.c.l.b16 %v129
  %v658 = vunpack.c.l.b16 %v130
  %v659 = vunpack.c.l.b16 %v131
  %v660 = vunpack.c.l.b16 %v132
  %v661 = vunpack.c.l.b16 %v133
  %v662 = vunpack.c.l.b16 %v134
  %v663 = vunpack.c.l.b16 %v135
  %v664 = vunpack.c.l.b16 %v136
  %v665 = vunpack.c.l.b16 %v137
  %v666 = vunpack.c.l.b16 %v138
  %v667 = vunpack.c.l.b16 %v139
  %v668 = vunpack.c.l.b16 %v140
  %v669 = vunpack.c.l.b16 %v141
  %v670 = vunpack.c.l.b16 %v142
  %v671 = vunpack.c.l.b16 %v143
  %v672 = vunpack.c.l.b16 %v144
  %v673 = vunpack.c.l.b16 %v145
  %v674 = vunpack.c.l.b16 %v146
  %v675 = vunpack.c.l.b16 %v147
  %v676 = vunpack.c.l.b16 %v148
  %v677 = vunpack.c.l.b16 %v149
  %v678 = vunpack.c.l.b16 %v150
  %v679 = vunpack.c.l.b16 %v151
  %v680 = vunpack.c.l.b16 %v152
  %v681 = vunpack.c.l.b16 %v153
  %v682 = vunpack.c.l.b16 %v154
  %v683 = vunpack.c.l.b16 %v155
  %v684 = vunpack.c.l.b16 %v156
  %v685 = vunpack.c.l.b16 %v157
  %v686 = vunpack.c.l.b16 %v158
  %v687 = vunpack.c.l.b16 %v159
  %v688 = vunpack.c.l.b16 %v160
  %v689 = vunpack.c.l.b16 %v161
  %v690 = vunpack.c.l.b16 %v162
  %v691 = vunpack.c.l.b16 %v163
  %v692 = vunpack.c.l.b16 %v164
  %v693 = vunpack.c.l.b16 %v165
  %v694 = vunpack.c.l.b16 %v166
  %v695 = vunpack.c.l.b16 %v167
  %v696 = vunpack.c.l.b16 %v168
  %v697 = vunpack.c.l.b16 %v169
  %v698 = vunpack.c.l.b16 %v170
  %v699 = vunpack.c.l.b16 %v171
  %v700 = vunpack.c.l.b16 %v172
  %v701 = vunpack.c.l.b16 %v173
  %v702 = vunpack.c.l.b16 %v174
  %v703 = vunpack.c.l.b16 %v175
  %v704 = vunpack.c.l.b16 %v176
  %v705 = vunpack.c.l.b16 %v177
  %v706 = vunpack.c.l.b16 %v178
  %v707 = vunpack.c.l.b16 %v179
  %v708 = vunpack.c.l.b16 %v180
  %v709 = vunpack.c.l.b16 %v181
  %v710 = vunpack.c.l.b16 %v182
  %v711 = vunpack.c.l.b16 %v183
  %v712 = vunpack.c.l.b16 %v184
  %v713 = vunpack.c.l.b16 %v185
  %v714 = vunpack.c.l.b16 %v186
  %v715 = vunpack.c.l.b16 %v187
  %v716 = vunpack.c.l.b16 %v188
  %v717 = vunpack.c.l.b16 %v189
  %v718 = vunpack.c.l.b16 %v190
  %v719 = vunpack.c.l.b16 %v191
  %v720 = vunpack.c.l.b16 %v192
  %v721 = vunpack.c.l.b16 %v193
  %v722 = vunpack.c.l.b16 %v194
  %v723 = vunpack.c.l.b16 %v195
  %v724 = vunpack.c.l.b16 %v196
  %v725 = vunpack.c.l.b16 %v197
  %v726 = vunpack.c.l.b16 %v198
  %v727 = vunpack.c.l.b16 %v199
  %v728 = vunpack.c.l.b16 %v200
  %v729 = vunpack.c.l.b16 %v201
  %v730 = vunpack.c.l.b16 %v202
  %v731 = vunpack.c.l.b16 %v203
  %v732 = vunpack.c.l.b16 %v204
  %v733 = vunpack.c.l.b16 %v205
  %v734 = vunpack.c.l.b16 %v206
  %v735 = vunpack.c.l.b16 %v207
  %v736 = vunpack.c.l.b16 %v208
  %v737 = vunpack.c.l.b16 %v209
  %v738 = vunpack.c.l.b16 %v210
  %v739 = vunpack.c.l.b16 %v211
  %v740 = vunpack.c.l.b16 %v212
  %v741 = vunpack.c.l.b16 %v213
  %v742 = vunpack.c.l.b16 %v214
  %v743 = vunpack.c.l.b16 %v215
  %v744 = vunpack.c.l.b16 %v216
  %v745 = vunpack.c.l.b16 %v217
  %v746 = vunpack.c.l.b16 %v218
  %v747 = vunpack.c.l.b16 %v219
  %v748 = vunpack.c.l.b16 %v220
  %v749 = vunpack.c.l.b16 %v221
  %v750 = vunpack.c.l.b16 %v222
  %v751 = vunpack.c.l.b16 %v223
  %v752 = vunpack.c.l.b16 %v224
  %v753 = vunpack.c.l.b16 %v225
  %v754 = vunpack.c.l.b16 %v226
  %v755 = vunpack.c.l.b16 %v227
  %v756 = vunpack.c.l.b16 %v228
  %v757 = vunpack.c.l.b16 %v229
  %v758 = vunpack.c.l.b16 %v230
  %v759 = vunpack.c.l.b16 %v231
  %v760 = vunpack.c.l.b16 %v232
  %v761 = vunpack.c.l.b16 %v233
  %v762 = vunpack.c.l.b16 %v234
  %v763 = vunpack.c.l.b16 %v235
  %v764 = vunpack.c.l.b16 %v236
  %v765 = vunpack.c.l.b16 %v237
  %v766 = vunpack.c.l.b16 %v238
  %v767 = vpack.c.b16 %v576, %v575
  %v768 = vpack.c.b16 %v578, %v577
  %v769 = vpack.c.b16 %v580, %v579
  %v770 = vpack.c.b16 %v582, %v581
  %v771 = vpack.c.b16 %v584, %v583
  %v772 = vpack.c.b16 %v586, %v585
  %v773 = vpack.c.b16 %v588, %v587
  %v774 = vpack.c.b16 %v590, %v589
  %v775 = vpack.c.b16 %v592, %v591
  %v776 = vpack.c.b16 %v594, %v593
  %v777 = vpack.c.b16 %v596, %v595
  %v778 = vpack.c.b16 %v598, %v597
  %v779 = vpack.c.b16 %v600, %v599
  %v780 = vpack.c.b16 %v602, %v601
  %v781 = vpack.c.b16 %v604, %v603
  %v782 = vpack.c.b16 %v606, %v605
  %v783 = vpack.c.b16 %v608, %v607
  %v784 = vpack.c.b16 %v610, %v609
  %v785 = vpack.c.b16 %v612, %v611
  %v786 = vpack.c.b16 %v614, %v613
  %v787 = vpack.c.b16 %v616, %v615
  %v788 = vpack.c.b16 %v618, %v617
  %v789 = vpack.c.b16 %v620, %v619
  %v790 = vpack.c.b16 %v622, %v621
  %v791 = vpack.c.b16 %v624, %v623
  %v792 = vpack.c.b16 %v626, %v625
  %v793 = vpack.c.b16 %v628, %v627
  %v794 = vpack.c.b16 %v630, %v629
  %v795 = vpack.c.b16 %v632, %v631
  %v796 = vpack.c.b16 %v634, %v633
  %v797 = vpack.c.b16 %v636, %v635
  %v798 = vpack.c.b16 %v638, %v637
  %v799 = vpack.c.b16 %v640, %v639
  %v800 = vpack.c.b16 %v642, %v641
  %v801 = vpack.c.b16 %v644, %v643
  %v802 = vpack.c.b16 %v646, %v645
  %v803 = vpack.c.b16 %v648, %v647
  %v804 = vpack.c.b16 %v650, %v649
  %v805 = vpack.c.b16 %v652, %v651
  %v806 = vpack.c.b16 %v654, %v653
  %v807 = vpack.c.b16 %v656, %v655
  %v808 = vpack.c.b16 %v658, %v657
  %v809 = vpack.c.b16 %v660, %v659
  %v810 = vpack.c.b16 %v662, %v661
  %v811 = vpack.c.b16 %v664, %v663
  %v812 = vpack.c.b16 %v666, %v665
  %v813 = vpack.c.b16 %v668, %v667
  %v814 = vpack.c.b16 %v670, %v669
  %v815 = vpack.c.b16 %v672, %v671
  %v816 = vpack.c.b16 %v674, %v673
  %v817 = vpack.c.b16 %v676, %v675
  %v818 = vpack.c.b16 %v678, %v677
  %v819 = vpack.c.b16 %v680, %v679
  %v820 = vpack.c.b16 %v682, %v681
  %v821 = vpack.c.b16 %v684, %v683
  %v822 = vpack.c.b16 %v686, %v685
  %v823 = vpack.c.b16 %v688, %v687
  %v824 = vpack.c.b16 %v690, %v689
  %v825 = vpack.c.b16 %v692, %v691
  %v826 = vpack.c.b16 %v694, %v693
  %v827 = vpack.c.b16 %v696, %v695
  %v828 = vpack.c.b16 %v698, %v697
  %v829 = vpack.c.b16 %v700, %v699
  %v830 = vpack.c.b16 %v702, %v701
  %v831 = vpack.c.b16 %v704, %v703
  %v832 = vpack.c.b16 %v706, %v705
  %v833 = vpack.c.b16 %v708, %v707
  %v834 = vpack.c.b16 %v710, %v709
  %v835 = vpack.c.b16 %v712, %v711
  %v836 = vpack.c.b16 %v714, %v713
  %v837 = vpack.c.b16 %v716, %v715
  %v838 = vpack.c.b16 %v718, %v717
  %v839 = vpack.c.b16 %v720, %v719
  %v840 = vpack.c.b16 %v722, %v721
  %v841 = vpack.c.b16 %v724, %v723
  %v842 = vpack.c.b16 %v726, %v725
  %v843 = vpack.c.b16 %v728, %v727
  %v844 = vpack.c.b16 %v730, %v729
  %v845 = vpack.c.b16 %v732, %v731
  %v846 = vpack.c.b16 %v734, %v733
  %v847 = vpack.c.b16 %v736, %v735
  %v848 = vpack.c.b16 %v738, %v737
  %v849 = vpack.c.b16 %v740, %v739
  %v850 = vpack.c.b16 %v742, %v741
  %v851 = vpack.c.b16 %v744, %v743
  %v852 = vpack.c.b16 %v746, %v745
  %v853 = vpack.c.b16 %v748, %v747
  %v854 = vpack.c.b16 %v750, %v749
  %v855 = vpack.c.b16 %v752, %v751
  %v856 = vpack.c.b16 %v754, %v753
  %v857 = vpack.c.b16 %v756, %v755
  %v858 = vpack.c.b16 %v758, %v757
  %v859 = vpack.c.b16 %v760, %v759
  %v860 = vpack.c.b16 %v762, %v761
  %v861 = vpack.c.b16 %v764, %v763
  %v862 = vpack.c.b16 %v766, %v765
  %959 = vmatprep.subr.bf16.mxu0 0
  %960 = vmatpush1.bf16.msra.mxu0 %v767
  %961 = vmatprep.subr.bf16.mxu0 0
  %962 = vmatpush1.bf16.msra.mxu0 %v768
  %963 = vmatprep.subr.bf16.mxu0 0
  %964 = vmatpush1.bf16.msra.mxu0 %v769
  %965 = vmatprep.subr.bf16.mxu0 0
  %966 = vmatpush1.bf16.msra.mxu0 %v770
  %967 = vmatprep.subr.bf16.mxu0 0
  %968 = vmatpush1.bf16.msra.mxu0 %v771
  %969 = vmatprep.subr.bf16.mxu0 0
  %970 = vmatpush1.bf16.msra.mxu0 %v772
  %971 = vmatprep.subr.bf16.mxu0 0
  %972 = vmatpush1.bf16.msra.mxu0 %v773
  %973 = vmatprep.subr.bf16.mxu0 0
  %974 = vmatpush1.bf16.msra.mxu0 %v774
  %975 = vmatprep.subr.bf16.mxu0 0
  %976 = vmatpush1.bf16.msra.mxu0 %v775
  %977 = vmatprep.subr.bf16.mxu0 0
  %978 = vmatpush1.bf16.msra.mxu0 %v776
  %979 = vmatprep.subr.bf16.mxu0 0
  %980 = vmatpush1.bf16.msra.mxu0 %v777
  %981 = vmatprep.subr.bf16.mxu0 0
  %982 = vmatpush1.bf16.msra.mxu0 %v778
  %983 = vmatprep.subr.bf16.mxu0 0
  %984 = vmatpush1.bf16.msra.mxu0 %v779
  %985 = vmatprep.subr.bf16.mxu0 0
  %986 = vmatpush1.bf16.msra.mxu0 %v780
  %987 = vmatprep.subr.bf16.mxu0 0
  %988 = vmatpush1.bf16.msra.mxu0 %v781
  %989 = vmatprep.subr.bf16.mxu0 0
  %990 = vmatpush1.bf16.msra.mxu0 %v782
  %991 = vmatprep.mubr.bf16.mxu0 %v336
  %992 = vmatmul.mubr.bf16.gmra.mrb[0].mxu0 %v335
  %v993 = vpop.f32.mrb[0].mxu0
  %v994 = vadd.f32 %v246, %v993
  %v995 = vpop.f32.mrb[0].mxu0
  %v996 = vpop.f32.mrb[0].mxu0
  %v997 = vadd.f32 %v251, %v996
  %v998 = vpop.f32.mrb[0].mxu0
  %999 = vmatprep.mubr.bf16.mxu0 %v348
  %1000 = vmatmul.mubr.bf16.gmra.mrb[0].mxu0 %v347
  %v1001 = vpop.f32.mrb[0].mxu0
  %v1002 = vadd.f32 %v256, %v1001
  %v1003 = vpop.f32.mrb[0].mxu0
  %v1004 = vpop.f32.mrb[0].mxu0
  %v1005 = vadd.f32 %v261, %v1004
  %v1006 = vpop.f32.mrb[0].mxu0
  %1007 = vdwg.mxu0
  %1008 = vmatprep.subr.bf16.mxu0 0
  %1009 = vmatpush1.bf16.msra.mxu0 %v783
  %1010 = vmatprep.subr.bf16.mxu0 0
  %1011 = vmatpush1.bf16.msra.mxu0 %v784
  %1012 = vmatprep.subr.bf16.mxu0 0
  %1013 = vmatpush1.bf16.msra.mxu0 %v785
  %1014 = vmatprep.subr.bf16.mxu0 0
  %1015 = vmatpush1.bf16.msra.mxu0 %v786
  %1016 = vmatprep.subr.bf16.mxu0 0
  %1017 = vmatpush1.bf16.msra.mxu0 %v787
  %1018 = vmatprep.subr.bf16.mxu0 0
  %1019 = vmatpush1.bf16.msra.mxu0 %v788
  %1020 = vmatprep.subr.bf16.mxu0 0
  %1021 = vmatpush1.bf16.msra.mxu0 %v789
  %1022 = vmatprep.subr.bf16.mxu0 0
  %1023 = vmatpush1.bf16.msra.mxu0 %v790
  %1024 = vmatprep.subr.bf16.mxu0 0
  %1025 = vmatpush1.bf16.msra.mxu0 %v791
  %1026 = vmatprep.subr.bf16.mxu0 0
  %1027 = vmatpush1.bf16.msra.mxu0 %v792
  %1028 = vmatprep.subr.bf16.mxu0 0
  %1029 = vmatpush1.bf16.msra.mxu0 %v793
  %1030 = vmatprep.subr.bf16.mxu0 0
  %1031 = vmatpush1.bf16.msra.mxu0 %v794
  %1032 = vmatprep.subr.bf16.mxu0 0
  %1033 = vmatpush1.bf16.msra.mxu0 %v795
  %1034 = vmatprep.subr.bf16.mxu0 0
  %1035 = vmatpush1.bf16.msra.mxu0 %v796
  %1036 = vmatprep.subr.bf16.mxu0 0
  %1037 = vmatpush1.bf16.msra.mxu0 %v797
  %1038 = vmatprep.subr.bf16.mxu0 0
  %1039 = vmatpush1.bf16.msra.mxu0 %v798
  %1040 = vmatprep.mubr.bf16.mxu0 %v338
  %1041 = vmatmul.mubr.bf16.gmra.mrb[0].mxu0 %v337
  %v1042 = vpop.f32.mrb[0].mxu0
  %v1043 = vadd.f32 %v994, %v1042
  %v1044 = vpop.f32.mrb[0].mxu0
  %v1045 = vpop.f32.mrb[0].mxu0
  %v1046 = vadd.f32 %v997, %v1045
  %v1047 = vpop.f32.mrb[0].mxu0
  %1048 = vmatprep.mubr.bf16.mxu0 %v350
  %1049 = vmatmul.mubr.bf16.gmra.mrb[0].mxu0 %v349
  %v1050 = vpop.f32.mrb[0].mxu0
  %v1051 = vadd.f32 %v1002, %v1050
  %v1052 = vpop.f32.mrb[0].mxu0
  %v1053 = vpop.f32.mrb[0].mxu0
  %v1054 = vadd.f32 %v1005, %v1053
  %v1055 = vpop.f32.mrb[0].mxu0
  %1056 = vdwg.mxu0
  %1057 = vmatprep.subr.bf16.mxu0 0
  %1058 = vmatpush1.bf16.msra.mxu0 %v799
  %1059 = vmatprep.subr.bf16.mxu0 0
  %1060 = vmatpush1.bf16.msra.mxu0 %v800
  %1061 = vmatprep.subr.bf16.mxu0 0
  %1062 = vmatpush1.bf16.msra.mxu0 %v801
  %1063 = vmatprep.subr.bf16.mxu0 0
  %1064 = vmatpush1.bf16.msra.mxu0 %v802
  %1065 = vmatprep.subr.bf16.mxu0 0
  %1066 = vmatpush1.bf16.msra.mxu0 %v803
  %1067 = vmatprep.subr.bf16.mxu0 0
  %1068 = vmatpush1.bf16.msra.mxu0 %v804
  %1069 = vmatprep.subr.bf16.mxu0 0
  %1070 = vmatpush1.bf16.msra.mxu0 %v805
  %1071 = vmatprep.subr.bf16.mxu0 0
  %1072 = vmatpush1.bf16.msra.mxu0 %v806
  %1073 = vmatprep.subr.bf16.mxu0 0
  %1074 = vmatpush1.bf16.msra.mxu0 %v807
  %1075 = vmatprep.subr.bf16.mxu0 0
  %1076 = vmatpush1.bf16.msra.mxu0 %v808
  %1077 = vmatprep.subr.bf16.mxu0 0
  %1078 = vmatpush1.bf16.msra.mxu0 %v809
  %1079 = vmatprep.subr.bf16.mxu0 0
  %1080 = vmatpush1.bf16.msra.mxu0 %v810
  %1081 = vmatprep.subr.bf16.mxu0 0
  %1082 = vmatpush1.bf16.msra.mxu0 %v811
  %1083 = vmatprep.subr.bf16.mxu0 0
  %1084 = vmatpush1.bf16.msra.mxu0 %v812
  %1085 = vmatprep.subr.bf16.mxu0 0
  %1086 = vmatpush1.bf16.msra.mxu0 %v813
  %1087 = vmatprep.subr.bf16.mxu0 0
  %1088 = vmatpush1.bf16.msra.mxu0 %v814
  %1089 = vmatprep.mubr.bf16.mxu0 %v340
  %1090 = vmatmul.mubr.bf16.gmra.mrb[0].mxu0 %v339
  %v1091 = vpop.f32.mrb[0].mxu0
  %v1092 = vadd.f32 %v1043, %v1091
  %v1093 = vpop.f32.mrb[0].mxu0
  %v1094 = vpop.f32.mrb[0].mxu0
  %v1095 = vadd.f32 %v1046, %v1094
  %v1096 = vpop.f32.mrb[0].mxu0
  %1097 = vmatprep.mubr.bf16.mxu0 %v352
  %1098 = vmatmul.mubr.bf16.gmra.mrb[0].mxu0 %v351
  %v1099 = vpop.f32.mrb[0].mxu0
  %v1100 = vadd.f32 %v1051, %v1099
  %v1101 = vpop.f32.mrb[0].mxu0
  %v1102 = vpop.f32.mrb[0].mxu0
  %v1103 = vadd.f32 %v1054, %v1102
  %v1104 = vpop.f32.mrb[0].mxu0
  %1105 = vdwg.mxu0
  %1106 = vmatprep.subr.bf16.mxu0 0
  %1107 = vmatpush1.bf16.msra.mxu0 %v815
  %1108 = vmatprep.subr.bf16.mxu0 0
  %1109 = vmatpush1.bf16.msra.mxu0 %v816
  %1110 = vmatprep.subr.bf16.mxu0 0
  %1111 = vmatpush1.bf16.msra.mxu0 %v817
  %1112 = vmatprep.subr.bf16.mxu0 0
  %1113 = vmatpush1.bf16.msra.mxu0 %v818
  %1114 = vmatprep.subr.bf16.mxu0 0
  %1115 = vmatpush1.bf16.msra.mxu0 %v819
  %1116 = vmatprep.subr.bf16.mxu0 0
  %1117 = vmatpush1.bf16.msra.mxu0 %v820
  %1118 = vmatprep.subr.bf16.mxu0 0
  %1119 = vmatpush1.bf16.msra.mxu0 %v821
  %1120 = vmatprep.subr.bf16.mxu0 0
  %1121 = vmatpush1.bf16.msra.mxu0 %v822
  %1122 = vmatprep.subr.bf16.mxu0 0
  %1123 = vmatpush1.bf16.msra.mxu0 %v823
  %1124 = vmatprep.subr.bf16.mxu0 0
  %1125 = vmatpush1.bf16.msra.mxu0 %v824
  %1126 = vmatprep.subr.bf16.mxu0 0
  %1127 = vmatpush1.bf16.msra.mxu0 %v825
  %1128 = vmatprep.subr.bf16.mxu0 0
  %1129 = vmatpush1.bf16.msra.mxu0 %v826
  %1130 = vmatprep.subr.bf16.mxu0 0
  %1131 = vmatpush1.bf16.msra.mxu0 %v827
  %1132 = vmatprep.subr.bf16.mxu0 0
  %1133 = vmatpush1.bf16.msra.mxu0 %v828
  %1134 = vmatprep.subr.bf16.mxu0 0
  %1135 = vmatpush1.bf16.msra.mxu0 %v829
  %1136 = vmatprep.subr.bf16.mxu0 0
  %1137 = vmatpush1.bf16.msra.mxu0 %v830
  %1138 = vmatprep.mubr.bf16.mxu0 %v342
  %1139 = vmatmul.mubr.bf16.gmra.mrb[0].mxu0 %v341
  %v1140 = vpop.f32.mrb[0].mxu0
  %v1141 = vadd.f32 %v1092, %v1140
  %v1142 = vpop.f32.mrb[0].mxu0
  %v1143 = vpop.f32.mrb[0].mxu0
  %v1144 = vadd.f32 %v1095, %v1143
  %v1145 = vpop.f32.mrb[0].mxu0
  %1146 = vmatprep.mubr.bf16.mxu0 %v354
  %1147 = vmatmul.mubr.bf16.gmra.mrb[0].mxu0 %v353
  %v1148 = vpop.f32.mrb[0].mxu0
  %v1149 = vadd.f32 %v1100, %v1148
  %v1150 = vpop.f32.mrb[0].mxu0
  %v1151 = vpop.f32.mrb[0].mxu0
  %v1152 = vadd.f32 %v1103, %v1151
  %v1153 = vpop.f32.mrb[0].mxu0
  %1154 = vdwg.mxu0
  %1155 = vmatprep.subr.bf16.mxu0 0
  %1156 = vmatpush1.bf16.msra.mxu0 %v831
  %1157 = vmatprep.subr.bf16.mxu0 0
  %1158 = vmatpush1.bf16.msra.mxu0 %v832
  %1159 = vmatprep.subr.bf16.mxu0 0
  %1160 = vmatpush1.bf16.msra.mxu0 %v833
  %1161 = vmatprep.subr.bf16.mxu0 0
  %1162 = vmatpush1.bf16.msra.mxu0 %v834
  %1163 = vmatprep.subr.bf16.mxu0 0
  %1164 = vmatpush1.bf16.msra.mxu0 %v835
  %1165 = vmatprep.subr.bf16.mxu0 0
  %1166 = vmatpush1.bf16.msra.mxu0 %v836
  %1167 = vmatprep.subr.bf16.mxu0 0
  %1168 = vmatpush1.bf16.msra.mxu0 %v837
  %1169 = vmatprep.subr.bf16.mxu0 0
  %1170 = vmatpush1.bf16.msra.mxu0 %v838
  %1171 = vmatprep.subr.bf16.mxu0 0
  %1172 = vmatpush1.bf16.msra.mxu0 %v839
  %1173 = vmatprep.subr.bf16.mxu0 0
  %1174 = vmatpush1.bf16.msra.mxu0 %v840
  %1175 = vmatprep.subr.bf16.mxu0 0
  %1176 = vmatpush1.bf16.msra.mxu0 %v841
  %1177 = vmatprep.subr.bf16.mxu0 0
  %1178 = vmatpush1.bf16.msra.mxu0 %v842
  %1179 = vmatprep.subr.bf16.mxu0 0
  %1180 = vmatpush1.bf16.msra.mxu0 %v843
  %1181 = vmatprep.subr.bf16.mxu0 0
  %1182 = vmatpush1.bf16.msra.mxu0 %v844
  %1183 = vmatprep.subr.bf16.mxu0 0
  %1184 = vmatpush1.bf16.msra.mxu0 %v845
  %1185 = vmatprep.subr.bf16.mxu0 0
  %1186 = vmatpush1.bf16.msra.mxu0 %v846
  %1187 = vmatprep.mubr.bf16.mxu0 %v344
  %1188 = vmatmul.mubr.bf16.gmra.mrb[0].mxu0 %v343
  %v1189 = vpop.f32.mrb[0].mxu0
  %v1190 = vadd.f32 %v1141, %v1189
  %v1191 = vpop.f32.mrb[0].mxu0
  %v1192 = vpop.f32.mrb[0].mxu0
  %v1193 = vadd.f32 %v1144, %v1192
  %v1194 = vpop.f32.mrb[0].mxu0
  %1195 = vmatprep.mubr.bf16.mxu0 %v356
  %1196 = vmatmul.mubr.bf16.gmra.mrb[0].mxu0 %v355
  %v1197 = vpop.f32.mrb[0].mxu0
  %v1198 = vadd.f32 %v1149, %v1197
  %v1199 = vpop.f32.mrb[0].mxu0
  %v1200 = vpop.f32.mrb[0].mxu0
  %v1201 = vadd.f32 %v1152, %v1200
  %v1202 = vpop.f32.mrb[0].mxu0
  %1203 = vdwg.mxu0
  %1204 = vmatprep.subr.bf16.mxu0 0
  %1205 = vmatpush1.bf16.msra.mxu0 %v847
  %1206 = vmatprep.subr.bf16.mxu0 0
  %1207 = vmatpush1.bf16.msra.mxu0 %v848
  %1208 = vmatprep.subr.bf16.mxu0 0
  %1209 = vmatpush1.bf16.msra.mxu0 %v849
  %1210 = vmatprep.subr.bf16.mxu0 0
  %1211 = vmatpush1.bf16.msra.mxu0 %v850
  %1212 = vmatprep.subr.bf16.mxu0 0
  %1213 = vmatpush1.bf16.msra.mxu0 %v851
  %1214 = vmatprep.subr.bf16.mxu0 0
  %1215 = vmatpush1.bf16.msra.mxu0 %v852
  %1216 = vmatprep.subr.bf16.mxu0 0
  %1217 = vmatpush1.bf16.msra.mxu0 %v853
  %1218 = vmatprep.subr.bf16.mxu0 0
  %1219 = vmatpush1.bf16.msra.mxu0 %v854
  %1220 = vmatprep.subr.bf16.mxu0 0
  %1221 = vmatpush1.bf16.msra.mxu0 %v855
  %1222 = vmatprep.subr.bf16.mxu0 0
  %1223 = vmatpush1.bf16.msra.mxu0 %v856
  %1224 = vmatprep.subr.bf16.mxu0 0
  %1225 = vmatpush1.bf16.msra.mxu0 %v857
  %1226 = vmatprep.subr.bf16.mxu0 0
  %1227 = vmatpush1.bf16.msra.mxu0 %v858
  %1228 = vmatprep.subr.bf16.mxu0 0
  %1229 = vmatpush1.bf16.msra.mxu0 %v859
  %1230 = vmatprep.subr.bf16.mxu0 0
  %1231 = vmatpush1.bf16.msra.mxu0 %v860
  %1232 = vmatprep.subr.bf16.mxu0 0
  %1233 = vmatpush1.bf16.msra.mxu0 %v861
  %1234 = vmatprep.subr.bf16.mxu0 0
  %1235 = vmatpush1.bf16.msra.mxu0 %v862
  %1236 = vmatprep.mubr.bf16.mxu0 %v346
  %1237 = vmatmul.mubr.bf16.gmra.mrb[0].mxu0 %v345
  %v1238 = vpop.f32.mrb[0].mxu0
  %v1239 = vadd.f32 %v1190, %v1238
  %v1240 = vpop.f32.mrb[0].mxu0
  %v1241 = vpop.f32.mrb[0].mxu0
  %v1242 = vadd.f32 %v1193, %v1241
  %v1243 = vpop.f32.mrb[0].mxu0
  %1244 = vmatprep.mubr.bf16.mxu0 %v358
  %1245 = vmatmul.mubr.bf16.gmra.mrb[0].mxu0 %v357
  %v1246 = vpop.f32.mrb[0].mxu0
  %v1247 = vadd.f32 %v1198, %v1246
  %v1248 = vpop.f32.mrb[0].mxu0
  %v1249 = vpop.f32.mrb[0].mxu0
  %v1250 = vadd.f32 %v1201, %v1249
  %v1251 = vpop.f32.mrb[0].mxu0
  %1252 = vdwg.mxu0
  %v1253 = vmax.f32 %v1239, 0.0
  %v1254 = vmax.f32 %v1242, 0.0
  %v1255 = vmax.f32 %v1247, 0.0
  %v1256 = vmax.f32 %v1250, 0.0
  %v1257 = vld [vmem:[%s3] sm:$0xff]
  %v1258 = vld [vmem:[%s3 + $0x8] sm:$0xff]
  %v1259 = vld [vmem:[%s3 + $0x10] sm:$0xff]
  %v1260 = vld [vmem:[%s3 + $0x18] sm:$0x3f]
  %1262 = vset.pattern.permute.xlu0 0
  %1263 = vperm.xlu0 %1262, %v1257
  %v1264 = vpop.permute.xlu0 %1263
  %1267 = vset.pattern.permute.xlu0 0
  %1268 = vperm.xlu0 %1267, %v1258
  %v1269 = vpop.permute.xlu0 %1268
  %1272 = vset.pattern.permute.xlu0 0
  %1273 = vperm.xlu0 %1272, %v1259
  %v1274 = vpop.permute.xlu0 %1273
  %1277 = vset.pattern.permute.xlu0 0
  %1278 = vperm.xlu0 %1277, %v1260
  %v1279 = vpop.permute.xlu0 %1278
  %v1281 = vmul.f32 %v1253, %v1264
  %v1282 = vmul.f32 %v1254, %v1269
  %v1283 = vmul.f32 %v1255, %v1274
  %v1284 = vmul.f32 %v1256, %v1279
  %v1285 = vadd.f32 %v1281, %v1282
  %v1286 = vadd.f32 %v1285, %v1283
  %vm1287 = vcmask 1045504
  %v1288 = vsel %vm1287, %v1284, 0.0
  %v1289 = vadd.f32 %v1286, %v1288
  %v1290 = vrot.slane %v1289, 4
  %v1291 = vadd.f32 %v1289, %v1290
  %v1292 = vrot.slane %v1291, 2
  %v1293 = vadd.f32 %v1291, %v1292
  %v1294 = vrot.slane %v1293, 1
  %v1295 = vadd.f32 %v1293, %v1294
  %v1296 = vld [vmem:[#allocation2] sm:$0x1]
  %1298 = vset.pattern.permute.xlu0 0
  %1299 = vperm.xlu0 %1298, %v1296
  %v1300 = vpop.permute.xlu0 %1299
  %v1302 = vlaneseq
  %v1303 = vshrl.u32 %v1302, 7
  %v1304 = vsub.s32 0, %v1303
  %v1305 = vrot.slane %v1300, %v1304
  %v1306 = vadd.f32 %v1295, %v1305
  %v1307 = vsub.f32 0.0, %v1306
  %v1308 = vmul.f32 %v1307, 1.442695
  %v1309 = vpow.pop %v1308
  %v1310 = vadd.f32 %v1309, 1.0
  %v1311 = vrcp.pop %v1310
  %v1312 = vmul.f32 1.0, %v1311
  %1313 = vst [vmem:[%s5] sm:$0x1] %v1312
  // Predicated region
  $region22: #{zipnet_forward.3} parent=0 // pred_check
    _
  $region23: #{zipnet_forward.3} parent=0 // pred_check_branch
    %1315 = sbr.rel (0) target = $region25
  $region24: #{zipnet_forward.3} parent=0 // pred_region
    _
  $region25: #{zipnet_forward.3} parent=0 // pred_fallthru
    _
  // Predicated region
  $region26: #{zipnet_forward.3} parent=0 // pred_check
    _
  $region27: #{zipnet_forward.3} parent=0 // pred_check_branch
    %1317 = sbr.rel (0) target = $region29
  $region28: #{zipnet_forward.3} parent=0 // pred_region
    _
  $region29: #{zipnet_forward.3} parent=0 // pred_fallthru
    _

// kernel: zipnet_forward.2
$region0: #{zipnet_forward.2}
  #allocation0 [shape = 'u32[]', space=smem, size = 0x4, offset = 0x4, fixed_abs, tag = 'smem constant byte address 0x4 - core index']
  #allocation1 [shape = 'u32[144,128]{1,0:T(1,128)}', space=vmem, size = 0x12000, scoped, tag = 'internal scratch']
  %s0 = inlined_call_operand.vmem [shape: f32[8,256], index: 0, kind: input, shape index: {}]
  %s1 = inlined_call_operand.vmem [shape: bf16[72,40], index: 1, kind: input, shape index: {}]
  %s2 = inlined_call_operand.vmem [shape: f32[72,1], index: 2, kind: input, shape index: {}]
  %s3 = inlined_call_operand.vmem [shape: bf16[72,360], index: 3, kind: input, shape index: {}]
  %s4 = inlined_call_operand.vmem [shape: f32[72,1], index: 4, kind: input, shape index: {}]
  %s5 = inlined_call_operand.vmem [shape: bf16[72,360], index: 5, kind: input, shape index: {}]
  %s6 = inlined_call_operand.vmem [shape: f32[72,1], index: 6, kind: input, shape index: {}]
  %s7 = inlined_call_operand.vmem [shape: bf16[72,360], index: 7, kind: input, shape index: {}]
  %s8 = inlined_call_operand.vmem [shape: f32[72,1], index: 8, kind: input, shape index: {}]
  %s9 = inlined_call_operand.vmem [shape: bf16[72,360], index: 9, kind: input, shape index: {}]
  %s10 = inlined_call_operand.vmem [shape: f32[72,1], index: 10, kind: input, shape index: {}]
  %s11 = inlined_call_operand.vmem [shape: bf16[72,360], index: 11, kind: input, shape index: {}]
  %s12 = inlined_call_operand.vmem [shape: f32[72,1], index: 12, kind: input, shape index: {}]
  %s13 = inlined_call_operand.vmem [shape: bf16[128,16], index: 13, kind: input, shape index: {}]
  %s14 = inlined_call_operand.vmem [shape: f32[2,72,16], index: 14, kind: output, shape index: {}]
  %s15 = sld [smem:[#allocation0]]
  $region89: #{zipnet_forward.2} parent=0
    _
  %s17 = ssub.s32 1, %s15
  %s18 = scalar_select 0, %s17, %s15
  loop: start=0, step=1, limit=4
  $region2: #{zipnet_forward.2} parent=0 // loop_pre_header
    _
  $region3: #{zipnet_forward.2} parent=0 // loop_header
    %s20 = sphi 0, %s24
    %p21 = scmp.ge.s32.totalorder %s20, 4
    %s30 = sphi 0, %s32
    %s33 = sphi 0, %s30
    %s34 = sphi 0, %s33
    %s50 = sphi 0, %s34
    %s54 = sphi 0, %s54
    %s56 = sphi 0, %s54
    %s57 = sphi 0, %s56
    %s71 = sphi 0, %s57
    %s75 = sphi 0, %s75
    %s77 = sphi 0, %s75
    %s78 = sphi 0, %s77
    %s92 = sphi 0, %s78
    %s96 = sphi 0, %s96
    %s98 = sphi 0, %s96
    %s99 = sphi 0, %s98
    %s113 = sphi 0, %s99
    %s117 = sphi 0, %s117
    %s119 = sphi 0, %s117
    %s120 = sphi 0, %s119
    %s134 = sphi 0, %s120
    %s138 = sphi 0, %s138
    %s140 = sphi 0, %s138
    %s141 = sphi 0, %s140
    %s155 = sphi 0, %s141
    %s159 = sphi 0, %s159
    %s161 = sphi 0, %s159
    %s162 = sphi 0, %s161
    %s176 = sphi 0, %s162
    %s180 = sphi 0, %s180
    %s182 = sphi 0, %s180
    %s183 = sphi 0, %s182
    %s197 = sphi 0, %s183
    %s201 = sphi 0, %s201
    %s203 = sphi 0, %s201
    %s204 = sphi 0, %s203
    %s218 = sphi 0, %s204
    %s222 = sphi 0, %s222
    %s224 = sphi 0, %s222
    %s225 = sphi 0, %s224
    %s239 = sphi 0, %s225
    %s243 = sphi 0, %s243
    %s245 = sphi 0, %s243
    %s246 = sphi 0, %s245
    %s260 = sphi 0, %s246
    %s264 = sphi 0, %s264
    %s266 = sphi 0, %s264
    %s267 = sphi 0, %s266
    %s281 = sphi 0, %s267
    %s285 = sphi 0, %s285
    %s287 = sphi 0, %s285
    %s288 = sphi 0, %s287
    %s302 = sphi 0, %s288
    %s306 = sphi 0, %s306
    %s308 = sphi 0, %s306
    %s309 = sphi 0, %s308
    %s323 = sphi 0, %s309
    %s329 = sphi 0, %s331
    %s332 = sphi 0, %s329
    %s333 = sphi 0, %s332
    %s349 = sphi 0, %s333
  $region4: #{zipnet_forward.2} parent=0 // loop_header_branch
    %23 = sbr.rel (%p21) target = $region8
  $region5: #{zipnet_forward.2} parent=0 // loop_body
    %s25 = ssub.s32 %s20, 1
    %s26 = ssub.s32 %s20, 2
    %s27 = sadd.s32 %s20, 1
    %s28 = ssub.s32 %s20, %s27
    %p29 = scmp.eq.s32.totalorder %s28, 0
    %s31 = sadd.s32 %s30, 1
    %s32 = scalar_select %p29, %s30, %s31
    %p35 = pneg %p29
    %p36 = scmp.eq.s32.totalorder %s20, 1
    %p37 = por %p35, %p36
    %p38 = scmp.ne.s32.totalorder %s30, %s33
    %p39 = scmp.eq.s32.totalorder %s20, 0
    %p40 = por %p38, %p39
    %p41 = scmp.ne.s32.totalorder %s30, %s33
    %p42 = scmp.eq.s32.totalorder %s25, 1
    %p43 = por %p41, %p42
    %p44 = scmp.ne.s32.totalorder %s33, %s34
    %p45 = scmp.eq.s32.totalorder %s25, 0
    %p46 = por %p44, %p45
    %p47 = scmp.ne.s32.totalorder %s33, %s34
    %p48 = scmp.eq.s32.totalorder %s26, 1
    %p49 = por %p47, %p48
    %p51 = scmp.ne.s32.totalorder %s34, %s50
    %p52 = scmp.eq.s32.totalorder %s26, 0
    %p53 = por %p51, %p52
    %s55 = sadd.s32 %s54, 1
    %p58 = scmp.eq.s32.totalorder %s20, 1
    %p59 = scmp.ne.s32.totalorder %s54, %s56
    %p60 = scmp.eq.s32.totalorder %s20, 0
    %p61 = por %p59, %p60
    %p62 = scmp.ne.s32.totalorder %s54, %s56
    %p63 = scmp.eq.s32.totalorder %s25, 1
    %p64 = por %p62, %p63
    %p65 = scmp.ne.s32.totalorder %s56, %s57
    %p66 = scmp.eq.s32.totalorder %s25, 0
    %p67 = por %p65, %p66
    %p68 = scmp.ne.s32.totalorder %s56, %s57
    %p69 = scmp.eq.s32.totalorder %s26, 1
    %p70 = por %p68, %p69
    %p72 = scmp.ne.s32.totalorder %s57, %s71
    %p73 = scmp.eq.s32.totalorder %s26, 0
    %p74 = por %p72, %p73
    %s76 = sadd.s32 %s75, 1
    %p79 = scmp.eq.s32.totalorder %s20, 1
    %p80 = scmp.ne.s32.totalorder %s75, %s77
    %p81 = scmp.eq.s32.totalorder %s20, 0
    %p82 = por %p80, %p81
    %p83 = scmp.ne.s32.totalorder %s75, %s77
    %p84 = scmp.eq.s32.totalorder %s25, 1
    %p85 = por %p83, %p84
    %p86 = scmp.ne.s32.totalorder %s77, %s78
    %p87 = scmp.eq.s32.totalorder %s25, 0
    %p88 = por %p86, %p87
    %p89 = scmp.ne.s32.totalorder %s77, %s78
    %p90 = scmp.eq.s32.totalorder %s26, 1
    %p91 = por %p89, %p90
    %p93 = scmp.ne.s32.totalorder %s78, %s92
    %p94 = scmp.eq.s32.totalorder %s26, 0
    %p95 = por %p93, %p94
    %s97 = sadd.s32 %s96, 1
    %p100 = scmp.eq.s32.totalorder %s20, 1
    %p101 = scmp.ne.s32.totalorder %s96, %s98
    %p102 = scmp.eq.s32.totalorder %s20, 0
    %p103 = por %p101, %p102
    %p104 = scmp.ne.s32.totalorder %s96, %s98
    %p105 = scmp.eq.s32.totalorder %s25, 1
    %p106 = por %p104, %p105
    %p107 = scmp.ne.s32.totalorder %s98, %s99
    %p108 = scmp.eq.s32.totalorder %s25, 0
    %p109 = por %p107, %p108
    %p110 = scmp.ne.s32.totalorder %s98, %s99
    %p111 = scmp.eq.s32.totalorder %s26, 1
    %p112 = por %p110, %p111
    %p114 = scmp.ne.s32.totalorder %s99, %s113
    %p115 = scmp.eq.s32.totalorder %s26, 0
    %p116 = por %p114, %p115
    %s118 = sadd.s32 %s117, 1
    %p121 = scmp.eq.s32.totalorder %s20, 1
    %p122 = scmp.ne.s32.totalorder %s117, %s119
    %p123 = scmp.eq.s32.totalorder %s20, 0
    %p124 = por %p122, %p123
    %p125 = scmp.ne.s32.totalorder %s117, %s119
    %p126 = scmp.eq.s32.totalorder %s25, 1
    %p127 = por %p125, %p126
    %p128 = scmp.ne.s32.totalorder %s119, %s120
    %p129 = scmp.eq.s32.totalorder %s25, 0
    %p130 = por %p128, %p129
    %p131 = scmp.ne.s32.totalorder %s119, %s120
    %p132 = scmp.eq.s32.totalorder %s26, 1
    %p133 = por %p131, %p132
    %p135 = scmp.ne.s32.totalorder %s120, %s134
    %p136 = scmp.eq.s32.totalorder %s26, 0
    %p137 = por %p135, %p136
    %s139 = sadd.s32 %s138, 1
    %p142 = scmp.eq.s32.totalorder %s20, 1
    %p143 = scmp.ne.s32.totalorder %s138, %s140
    %p144 = scmp.eq.s32.totalorder %s20, 0
    %p145 = por %p143, %p144
    %p146 = scmp.ne.s32.totalorder %s138, %s140
    %p147 = scmp.eq.s32.totalorder %s25, 1
    %p148 = por %p146, %p147
    %p149 = scmp.ne.s32.totalorder %s140, %s141
    %p150 = scmp.eq.s32.totalorder %s25, 0
    %p151 = por %p149, %p150
    %p152 = scmp.ne.s32.totalorder %s140, %s141
    %p153 = scmp.eq.s32.totalorder %s26, 1
    %p154 = por %p152, %p153
    %p156 = scmp.ne.s32.totalorder %s141, %s155
    %p157 = scmp.eq.s32.totalorder %s26, 0
    %p158 = por %p156, %p157
    %s160 = sadd.s32 %s159, 1
    %p163 = scmp.eq.s32.totalorder %s20, 1
    %p164 = scmp.ne.s32.totalorder %s159, %s161
    %p165 = scmp.eq.s32.totalorder %s20, 0
    %p166 = por %p164, %p165
    %p167 = scmp.ne.s32.totalorder %s159, %s161
    %p168 = scmp.eq.s32.totalorder %s25, 1
    %p169 = por %p167, %p168
    %p170 = scmp.ne.s32.totalorder %s161, %s162
    %p171 = scmp.eq.s32.totalorder %s25, 0
    %p172 = por %p170, %p171
    %p173 = scmp.ne.s32.totalorder %s161, %s162
    %p174 = scmp.eq.s32.totalorder %s26, 1
    %p175 = por %p173, %p174
    %p177 = scmp.ne.s32.totalorder %s162, %s176
    %p178 = scmp.eq.s32.totalorder %s26, 0
    %p179 = por %p177, %p178
    %s181 = sadd.s32 %s180, 1
    %p184 = scmp.eq.s32.totalorder %s20, 1
    %p185 = scmp.ne.s32.totalorder %s180, %s182
    %p186 = scmp.eq.s32.totalorder %s20, 0
    %p187 = por %p185, %p186
    %p188 = scmp.ne.s32.totalorder %s180, %s182
    %p189 = scmp.eq.s32.totalorder %s25, 1
    %p190 = por %p188, %p189
    %p191 = scmp.ne.s32.totalorder %s182, %s183
    %p192 = scmp.eq.s32.totalorder %s25, 0
    %p193 = por %p191, %p192
    %p194 = scmp.ne.s32.totalorder %s182, %s183
    %p195 = scmp.eq.s32.totalorder %s26, 1
    %p196 = por %p194, %p195
    %p198 = scmp.ne.s32.totalorder %s183, %s197
    %p199 = scmp.eq.s32.totalorder %s26, 0
    %p200 = por %p198, %p199
    %s202 = sadd.s32 %s201, 1
    %p205 = scmp.eq.s32.totalorder %s20, 1
    %p206 = scmp.ne.s32.totalorder %s201, %s203
    %p207 = scmp.eq.s32.totalorder %s20, 0
    %p208 = por %p206, %p207
    %p209 = scmp.ne.s32.totalorder %s201, %s203
    %p210 = scmp.eq.s32.totalorder %s25, 1
    %p211 = por %p209, %p210
    %p212 = scmp.ne.s32.totalorder %s203, %s204
    %p213 = scmp.eq.s32.totalorder %s25, 0
    %p214 = por %p212, %p213
    %p215 = scmp.ne.s32.totalorder %s203, %s204
    %p216 = scmp.eq.s32.totalorder %s26, 1
    %p217 = por %p215, %p216
    %p219 = scmp.ne.s32.totalorder %s204, %s218
    %p220 = scmp.eq.s32.totalorder %s26, 0
    %p221 = por %p219, %p220
    %s223 = sadd.s32 %s222, 1
    %p226 = scmp.eq.s32.totalorder %s20, 1
    %p227 = scmp.ne.s32.totalorder %s222, %s224
    %p228 = scmp.eq.s32.totalorder %s20, 0
    %p229 = por %p227, %p228
    %p230 = scmp.ne.s32.totalorder %s222, %s224
    %p231 = scmp.eq.s32.totalorder %s25, 1
    %p232 = por %p230, %p231
    %p233 = scmp.ne.s32.totalorder %s224, %s225
    %p234 = scmp.eq.s32.totalorder %s25, 0
    %p235 = por %p233, %p234
    %p236 = scmp.ne.s32.totalorder %s224, %s225
    %p237 = scmp.eq.s32.totalorder %s26, 1
    %p238 = por %p236, %p237
    %p240 = scmp.ne.s32.totalorder %s225, %s239
    %p241 = scmp.eq.s32.totalorder %s26, 0
    %p242 = por %p240, %p241
    %s244 = sadd.s32 %s243, 1
    %p247 = scmp.eq.s32.totalorder %s20, 1
    %p248 = scmp.ne.s32.totalorder %s243, %s245
    %p249 = scmp.eq.s32.totalorder %s20, 0
    %p250 = por %p248, %p249
    %p251 = scmp.ne.s32.totalorder %s243, %s245
    %p252 = scmp.eq.s32.totalorder %s25, 1
    %p253 = por %p251, %p252
    %p254 = scmp.ne.s32.totalorder %s245, %s246
    %p255 = scmp.eq.s32.totalorder %s25, 0
    %p256 = por %p254, %p255
    %p257 = scmp.ne.s32.totalorder %s245, %s246
    %p258 = scmp.eq.s32.totalorder %s26, 1
    %p259 = por %p257, %p258
    %p261 = scmp.ne.s32.totalorder %s246, %s260
    %p262 = scmp.eq.s32.totalorder %s26, 0
    %p263 = por %p261, %p262
    %s265 = sadd.s32 %s264, 1
    %p268 = scmp.eq.s32.totalorder %s20, 1
    %p269 = scmp.ne.s32.totalorder %s264, %s266
    %p270 = scmp.eq.s32.totalorder %s20, 0
    %p271 = por %p269, %p270
    %p272 = scmp.ne.s32.totalorder %s264, %s266
    %p273 = scmp.eq.s32.totalorder %s25, 1
    %p274 = por %p272, %p273
    %p275 = scmp.ne.s32.totalorder %s266, %s267
    %p276 = scmp.eq.s32.totalorder %s25, 0
    %p277 = por %p275, %p276
    %p278 = scmp.ne.s32.totalorder %s266, %s267
    %p279 = scmp.eq.s32.totalorder %s26, 1
    %p280 = por %p278, %p279
    %p282 = scmp.ne.s32.totalorder %s267, %s281
    %p283 = scmp.eq.s32.totalorder %s26, 0
    %p284 = por %p282, %p283
    %s286 = sadd.s32 %s285, 1
    %p289 = scmp.eq.s32.totalorder %s20, 1
    %p290 = scmp.ne.s32.totalorder %s285, %s287
    %p291 = scmp.eq.s32.totalorder %s20, 0
    %p292 = por %p290, %p291
    %p293 = scmp.ne.s32.totalorder %s285, %s287
    %p294 = scmp.eq.s32.totalorder %s25, 1
    %p295 = por %p293, %p294
    %p296 = scmp.ne.s32.totalorder %s287, %s288
    %p297 = scmp.eq.s32.totalorder %s25, 0
    %p298 = por %p296, %p297
    %p299 = scmp.ne.s32.totalorder %s287, %s288
    %p300 = scmp.eq.s32.totalorder %s26, 1
    %p301 = por %p299, %p300
    %p303 = scmp.ne.s32.totalorder %s288, %s302
    %p304 = scmp.eq.s32.totalorder %s26, 0
    %p305 = por %p303, %p304
    %s307 = sadd.s32 %s306, 1
    %p310 = scmp.eq.s32.totalorder %s20, 1
    %p311 = scmp.ne.s32.totalorder %s306, %s308
    %p312 = scmp.eq.s32.totalorder %s20, 0
    %p313 = por %p311, %p312
    %p314 = scmp.ne.s32.totalorder %s306, %s308
    %p315 = scmp.eq.s32.totalorder %s25, 1
    %p316 = por %p314, %p315
    %p317 = scmp.ne.s32.totalorder %s308, %s309
    %p318 = scmp.eq.s32.totalorder %s25, 0
    %p319 = por %p317, %p318
    %p320 = scmp.ne.s32.totalorder %s308, %s309
    %p321 = scmp.eq.s32.totalorder %s26, 1
    %p322 = por %p320, %p321
    %p324 = scmp.ne.s32.totalorder %s309, %s323
    %p325 = scmp.eq.s32.totalorder %s26, 0
    %p326 = por %p324, %p325
    %s327 = ssub.s32 %s20, %s27
    %p328 = scmp.eq.s32.totalorder %s327, 0
    %s330 = sadd.s32 %s329, 1
    %s331 = scalar_select %p328, %s329, %s330
    %p334 = pneg %p328
    %p335 = scmp.eq.s32.totalorder %s20, 1
    %p336 = por %p334, %p335
    %p337 = scmp.ne.s32.totalorder %s329, %s332
    %p338 = scmp.eq.s32.totalorder %s20, 0
    %p339 = por %p337, %p338
    %p340 = scmp.ne.s32.totalorder %s329, %s332
    %p341 = scmp.eq.s32.totalorder %s25, 1
    %p342 = por %p340, %p341
    %p343 = scmp.ne.s32.totalorder %s332, %s333
    %p344 = scmp.eq.s32.totalorder %s25, 0
    %p345 = por %p343, %p344
    %p346 = scmp.ne.s32.totalorder %s332, %s333
    %p347 = scmp.eq.s32.totalorder %s26, 1
    %p348 = por %p346, %p347
    %p350 = scmp.ne.s32.totalorder %s333, %s349
    %p351 = scmp.eq.s32.totalorder %s26, 0
    %p352 = por %p350, %p351
    %p353 = scmp.le.s32.totalorder 1, %s20
    %p354 = scmp.lt.s32.totalorder %s20, 3
    %p355 = pnand %p353, %p354
    %p356 = pneg %p355
    // Predicated region
    $region9: #{zipnet_forward.2} parent=5 // pred_check
      _
    $region10: #{zipnet_forward.2} parent=5 // pred_check_branch
      %358 = sbr.rel (%p355) target = $region12
    $region11: #{zipnet_forward.2} parent=5 // pred_region
      %s359 = ssub.s32 %s20, 1
      // Predicated region
      $region13: #{zipnet_forward.2} parent=11 // pred_check
        %p360 = pneg %p67
      $region14: #{zipnet_forward.2} parent=11 // pred_check_branch
        %362 = sbr.rel (%p360) target = $region16
      $region15: #{zipnet_forward.2} parent=11 // pred_region
        _
      $region16: #{zipnet_forward.2} parent=11 // pred_fallthru
        _
      // Predicated region
      $region17: #{zipnet_forward.2} parent=11 // pred_check
        %p363 = pneg %p88
      $region18: #{zipnet_forward.2} parent=11 // pred_check_branch
        %365 = sbr.rel (%p363) target = $region20
      $region19: #{zipnet_forward.2} parent=11 // pred_region
        _
      $region20: #{zipnet_forward.2} parent=11 // pred_fallthru
        _
      // Predicated region
      $region21: #{zipnet_forward.2} parent=11 // pred_check
        %p366 = pneg %p109
      $region22: #{zipnet_forward.2} parent=11 // pred_check_branch
        %368 = sbr.rel (%p366) target = $region24
      $region23: #{zipnet_forward.2} parent=11 // pred_region
        _
      $region24: #{zipnet_forward.2} parent=11 // pred_fallthru
        _
      // Predicated region
      $region25: #{zipnet_forward.2} parent=11 // pred_check
        %p369 = pneg %p130
      $region26: #{zipnet_forward.2} parent=11 // pred_check_branch
        %371 = sbr.rel (%p369) target = $region28
      $region27: #{zipnet_forward.2} parent=11 // pred_region
        _
      $region28: #{zipnet_forward.2} parent=11 // pred_fallthru
        _
      // Predicated region
      $region29: #{zipnet_forward.2} parent=11 // pred_check
        %p372 = pneg %p151
      $region30: #{zipnet_forward.2} parent=11 // pred_check_branch
        %374 = sbr.rel (%p372) target = $region32
      $region31: #{zipnet_forward.2} parent=11 // pred_region
        _
      $region32: #{zipnet_forward.2} parent=11 // pred_fallthru
        _
      // Predicated region
      $region33: #{zipnet_forward.2} parent=11 // pred_check
        %p375 = pneg %p172
      $region34: #{zipnet_forward.2} parent=11 // pred_check_branch
        %377 = sbr.rel (%p375) target = $region36
      $region35: #{zipnet_forward.2} parent=11 // pred_region
        _
      $region36: #{zipnet_forward.2} parent=11 // pred_fallthru
        _
      // Predicated region
      $region37: #{zipnet_forward.2} parent=11 // pred_check
        %p378 = pneg %p193
      $region38: #{zipnet_forward.2} parent=11 // pred_check_branch
        %380 = sbr.rel (%p378) target = $region40
      $region39: #{zipnet_forward.2} parent=11 // pred_region
        _
      $region40: #{zipnet_forward.2} parent=11 // pred_fallthru
        _
      // Predicated region
      $region41: #{zipnet_forward.2} parent=11 // pred_check
        %p381 = pneg %p214
      $region42: #{zipnet_forward.2} parent=11 // pred_check_branch
        %383 = sbr.rel (%p381) target = $region44
      $region43: #{zipnet_forward.2} parent=11 // pred_region
        _
      $region44: #{zipnet_forward.2} parent=11 // pred_fallthru
        _
      // Predicated region
      $region45: #{zipnet_forward.2} parent=11 // pred_check
        %p384 = pneg %p235
      $region46: #{zipnet_forward.2} parent=11 // pred_check_branch
        %386 = sbr.rel (%p384) target = $region48
      $region47: #{zipnet_forward.2} parent=11 // pred_region
        _
      $region48: #{zipnet_forward.2} parent=11 // pred_fallthru
        _
      // Predicated region
      $region49: #{zipnet_forward.2} parent=11 // pred_check
        %p387 = pneg %p256
      $region50: #{zipnet_forward.2} parent=11 // pred_check_branch
        %389 = sbr.rel (%p387) target = $region52
      $region51: #{zipnet_forward.2} parent=11 // pred_region
        _
      $region52: #{zipnet_forward.2} parent=11 // pred_fallthru
        _
      // Predicated region
      $region53: #{zipnet_forward.2} parent=11 // pred_check
        %p390 = pneg %p277
      $region54: #{zipnet_forward.2} parent=11 // pred_check_branch
        %392 = sbr.rel (%p390) target = $region56
      $region55: #{zipnet_forward.2} parent=11 // pred_region
        _
      $region56: #{zipnet_forward.2} parent=11 // pred_fallthru
        _
      // Predicated region
      $region57: #{zipnet_forward.2} parent=11 // pred_check
        %p393 = pneg %p298
      $region58: #{zipnet_forward.2} parent=11 // pred_check_branch
        %395 = sbr.rel (%p393) target = $region60
      $region59: #{zipnet_forward.2} parent=11 // pred_region
        _
      $region60: #{zipnet_forward.2} parent=11 // pred_fallthru
        _
      // Predicated region
      $region61: #{zipnet_forward.2} parent=11 // pred_check
        %p396 = pneg %p319
      $region62: #{zipnet_forward.2} parent=11 // pred_check_branch
        %398 = sbr.rel (%p396) target = $region64
      $region63: #{zipnet_forward.2} parent=11 // pred_region
        _
      $region64: #{zipnet_forward.2} parent=11 // pred_fallthru
        _
    $region12: #{zipnet_forward.2} parent=5 // pred_fallthru
      _
    %p399 = scmp.lt.s32.totalorder %s20, 2
    // Predicated region
    $region65: #{zipnet_forward.2} parent=5 // pred_check
      %p400 = pneg %p399
    $region66: #{zipnet_forward.2} parent=5 // pred_check_branch
      %402 = sbr.rel (%p400) target = $region68
    $region67: #{zipnet_forward.2} parent=5 // pred_region
      // Predicated region
      $region69: #{zipnet_forward.2} parent=67 // pred_check
        %p403 = pneg %p40
      $region70: #{zipnet_forward.2} parent=67 // pred_check_branch
        %405 = sbr.rel (%p403) target = $region72
      $region71: #{zipnet_forward.2} parent=67 // pred_region
        %p406 = scmp.lt.s32.totalorder %s20, 1
        %s407 = scalar_select %p406, %s20, 1
        %s408 = smul.addr %s407, 8
        %s409 = scalar_lea.vmem %s0, %s408
      $region72: #{zipnet_forward.2} parent=67 // pred_fallthru
        _
    $region68: #{zipnet_forward.2} parent=5 // pred_fallthru
      _
    %p410 = scmp.le.s32.totalorder 1, %s20
    %p411 = scmp.lt.s32.totalorder %s20, 3
    %p412 = pnand %p410, %p411
    %p413 = pneg %p412
    // Predicated region
    $region73: #{zipnet_forward.2} parent=5 // pred_check
      _
    $region74: #{zipnet_forward.2} parent=5 // pred_check_branch
      %415 = sbr.rel (%p412) target = $region76
    $region75: #{zipnet_forward.2} parent=5 // pred_region
      %s416 = ssub.s32 %s20, 1
      %p417 = scmp.lt.s32.totalorder %s25, 1
      %s418 = scalar_select %p417, %s25, 1
      %s419 = smul.addr %s418, 8
      %s420 = scalar_lea.vmem %s0, %s419
      %p421 = pneg %p46
      %p422 = pneg %p43
      %p423 = pneg %p67
      %p424 = pneg %p64
      %p425 = pneg %p88
      %p426 = pneg %p85
      %p427 = pneg %p109
      %p428 = pneg %p106
      %p429 = pneg %p130
      %p430 = pneg %p127
      %p431 = pneg %p151
      %p432 = pneg %p148
      %p433 = pneg %p172
      %p434 = pneg %p169
      %p435 = pneg %p193
      %p436 = pneg %p190
      %p437 = pneg %p214
      %p438 = pneg %p211
      %p439 = pneg %p235
      %p440 = pneg %p232
      %p441 = pneg %p256
      %p442 = pneg %p253
      %p443 = pneg %p277
      %p444 = pneg %p274
      %p445 = pneg %p298
      %p446 = pneg %p295
      %p447 = pneg %p319
      %p448 = pneg %p316
      %p449 = pneg %p345
      %p450 = pneg %p342
      %p451 = scmp.lt.s32.totalorder %s25, 1
      %s452 = scalar_select %p451, %s25, 1
      %s453 = smul.addr %s452, 9
      %s454 = smul.addr %s453, 8
      %s455 = scalar_lea.vmem %s14, %s454
      %p456 = scmp.lt.s32.totalorder %s25, 1
      %s457 = scalar_select %p456, %s25, 1
      %s458 = smul.addr %s457, 8
      %s459 = scalar_lea.vmem %s0, %s458
      %p460 = scmp.lt.s32.totalorder %s25, 1
      %s461 = scalar_select %p460, %s25, 1
      %s462 = smul.addr %s461, 9
      %s463 = smul.addr %s462, 8
      %s464 = scalar_lea.vmem %s14, %s463
      %v466 = vlaneseq
      %v467 = vand.u32 %v466, 127
      %vm468 = vcmp.lt.s32.totalorder %v467, 0
      %v469 = vsub.s32 0, %v467
      %v470 = vsel %vm468, %v469, %v467
      %v471 = vshrl.u32 %v470, 7
      %v472 = vand.u32 %v470, 127
      %v473 = vsub.s32 0, %v472
      %v474 = vsel %vm468, %v473, %v472
      %vm475 = vcmp.ne.s32.totalorder %v474, 0
      %vm476 = vcmp.lt.s32.totalorder %v474, 0
      %vm477 = vmand %vm476, %vm475
      %v478 = vadd.s32 %v474, 128
      %v479 = vsel %vm477, %v478, %v474
      %v480 = vadd.s32 %v479, 4294967288
      %vm481 = vcmp.ge.s32.totalorder %v480, 0
      %vm482 = vcmp.lt.s32.totalorder %v480, 128
      %vm483 = vmand %vm481, %vm482
      %v484 = vadd.s32 %v479, 4294967292
      %vm485 = vcmp.ge.s32.totalorder %v484, 0
      %vm486 = vcmp.lt.s32.totalorder %v484, 128
      %vm487 = vmand %vm485, %vm486
      %v488 = vadd.s32 %v479, 4294967294
      %vm489 = vcmp.ge.s32.totalorder %v488, 0
      %vm490 = vcmp.lt.s32.totalorder %v488, 128
      %vm491 = vmand %vm489, %vm490
      %v492 = vadd.s32 %v479, 4294967295
      %vm493 = vcmp.ge.s32.totalorder %v492, 0
      %vm494 = vcmp.lt.s32.totalorder %v492, 128
      %vm495 = vmand %vm493, %vm494
      %v496 = vadd.s32 %v479, 1
      %vm497 = vcmp.ge.s32.totalorder %v496, 0
      %vm498 = vcmp.lt.s32.totalorder %v496, 128
      %vm499 = vmand %vm497, %vm498
      %v500 = vadd.s32 %v479, 2
      %vm501 = vcmp.ge.s32.totalorder %v500, 0
      %vm502 = vcmp.lt.s32.totalorder %v500, 128
      %vm503 = vmand %vm501, %vm502
      %v504 = vadd.s32 %v479, 4
      %vm505 = vcmp.ge.s32.totalorder %v504, 0
      %vm506 = vcmp.lt.s32.totalorder %v504, 128
      %vm507 = vmand %vm505, %vm506
      %v508 = vadd.s32 %v479, 8
      %vm509 = vcmp.ge.s32.totalorder %v508, 0
      %vm510 = vcmp.lt.s32.totalorder %v508, 128
      %vm511 = vmand %vm509, %vm510
      %v512 = vld [vmem:[%s459] sm:$0xff]
      %513 = vrot.lane.b32.xlu0 %v512, 2
      %v514 = vpop.permute.xlu0 %513
      %v515 = vsel %vm491, 1, 0
      %vm516 = vcmp.eq.s32.totalorder %v515, 1
      %v517 = vsel %vm516, %v514, 0.0
      %518 = vrot.lane.b32.xlu0 %v512, 1
      %v519 = vpop.permute.xlu0 %518
      %v520 = vsel %vm495, 1, 0
      %vm521 = vcmp.eq.s32.totalorder %v520, 1
      %v522 = vsel %vm521, %v519, 0.0
      %523 = vrot.lane.b32.xlu0 %v512, 127
      %v524 = vpop.permute.xlu0 %523
      %v525 = vsel %vm499, 1, 0
      %vm526 = vcmp.eq.s32.totalorder %v525, 1
      %v527 = vsel %vm526, %v524, 0.0
      %528 = vrot.lane.b32.xlu0 %v512, 126
      %v529 = vpop.permute.xlu0 %528
      %v530 = vsel %vm503, 1, 0
      %vm531 = vcmp.eq.s32.totalorder %v530, 1
      %v532 = vsel %vm531, %v529, 0.0
      %v533 = vpack.c.bf16 %v522, %v517
      %v534 = vpack.c.bf16 %v527, %v512
      %v535 = vpack.c.bf16 %v532, %v532
      %v536 = vld [vmem:[%s1] sm:$0xf]
      %v537 = vld [vmem:[%s1 + $0x4] sm:$0xf]
      %v538 = vld [vmem:[%s1 + $0x8] sm:$0xf]
      %v539 = vld [vmem:[%s1 + $0xc] sm:$0xf]
      %v540 = vld [vmem:[%s1 + $0x10] sm:$0xf]
      %v541 = vld [vmem:[%s1 + $0x14] sm:$0xf]
      %v542 = vld [vmem:[%s1 + $0x18] sm:$0xf]
      %v543 = vld [vmem:[%s1 + $0x1c] sm:$0xf]
      %v544 = vld [vmem:[%s1 + $0x20] sm:$0xf]
      %v545 = vld [vmem:[%s2] sm:$0xff]
      %v546 = vld [vmem:[%s2 + $0x8] sm:$0xff]
      %v547 = vld [vmem:[%s2 + $0x10] sm:$0xff]
      %v548 = vld [vmem:[%s2 + $0x18] sm:$0xff]
      %v549 = vld [vmem:[%s2 + $0x20] sm:$0xff]
      %v550 = vld [vmem:[%s2 + $0x28] sm:$0xff]
      %v551 = vld [vmem:[%s2 + $0x30] sm:$0xff]
      %v552 = vld [vmem:[%s2 + $0x38] sm:$0xff]
      %v553 = vld [vmem:[%s2 + $0x40] sm:$0xff]
      %555 = vset.pattern.permute.xlu0 0
      %556 = vperm.xlu0 %555, %v545
      %v557 = vpop.permute.xlu0 %556
      %560 = vset.pattern.permute.xlu0 0
      %561 = vperm.xlu0 %560, %v546
      %v562 = vpop.permute.xlu0 %561
      %565 = vset.pattern.permute.xlu0 0
      %566 = vperm.xlu0 %565, %v547
      %v567 = vpop.permute.xlu0 %566
      %570 = vset.pattern.permute.xlu0 0
      %571 = vperm.xlu0 %570, %v548
      %v572 = vpop.permute.xlu0 %571
      %575 = vset.pattern.permute.xlu0 0
      %576 = vperm.xlu0 %575, %v549
      %v577 = vpop.permute.xlu0 %576
      %580 = vset.pattern.permute.xlu0 0
      %581 = vperm.xlu0 %580, %v550
      %v582 = vpop.permute.xlu0 %581
      %585 = vset.pattern.permute.xlu0 0
      %586 = vperm.xlu0 %585, %v551
      %v587 = vpop.permute.xlu0 %586
      %590 = vset.pattern.permute.xlu0 0
      %591 = vperm.xlu0 %590, %v552
      %v592 = vpop.permute.xlu0 %591
      %595 = vset.pattern.permute.xlu0 0
      %596 = vperm.xlu0 %595, %v553
      %v597 = vpop.permute.xlu0 %596
      %v608 = vunpack.c.l.b16 %v536
      %v609 = vunpack.c.l.b16 %v537
      %v610 = vunpack.c.l.b16 %v538
      %v611 = vunpack.c.l.b16 %v539
      %v612 = vunpack.c.l.b16 %v540
      %v613 = vunpack.c.l.b16 %v541
      %v614 = vunpack.c.l.b16 %v542
      %v615 = vunpack.c.l.b16 %v543
      %v616 = vunpack.c.l.b16 %v544
      %v617 = vpack.c.b16 %v609, %v608
      %v618 = vpack.c.b16 %v611, %v610
      %v619 = vpack.c.b16 %v613, %v612
      %v620 = vpack.c.b16 %v615, %v614
      %v621 = vpack.c.b16 %v616, %v616
      %vm622 = vcmask 326656
      %v624 = vsel %vm622, %v617, 0
      %v627 = vsel %vm622, %v618, 0
      %v630 = vsel %vm622, %v619, 0
      %v633 = vsel %vm622, %v620, 0
      %v636 = vsel %vm622, %v621, 0
      %vm638 = vcmask 1043456
      %v640 = vsel %vm638, %v535, 0
      %642 = vmatprep.subr.bf16.mxu0 0
      %643 = vmatpush1.bf16.msra.mxu0 %v533
      %644 = vmatprep.subr.bf16.mxu0 0
      %645 = vmatpush1.bf16.msra.mxu0 %v534
      %646 = vmatprep.subr.bf16.mxu0 0
      %647 = vmatpush1.bf16.msra.mxu0 %v640
      %648 = vmatprep.subr.bf16.mxu0 0
      %649 = vmatpush1.bf16.msra.mxu0 0
      %650 = vmatprep.subr.bf16.mxu0 0
      %651 = vmatpush1.bf16.msra.mxu0 0
      %652 = vmatprep.subr.bf16.mxu0 0
      %653 = vmatpush1.bf16.msra.mxu0 0
      %654 = vmatprep.subr.bf16.mxu0 0
      %655 = vmatpush1.bf16.msra.mxu0 0
      %656 = vmatprep.subr.bf16.mxu0 0
      %657 = vmatpush1.bf16.msra.mxu0 0
      %658 = vmatprep.subr.bf16.mxu0 0
      %659 = vmatpush1.bf16.msra.mxu0 0
      %660 = vmatprep.subr.bf16.mxu0 0
      %661 = vmatpush1.bf16.msra.mxu0 0
      %662 = vmatprep.subr.bf16.mxu0 0
      %663 = vmatpush1.bf16.msra.mxu0 0
      %664 = vmatprep.subr.bf16.mxu0 0
      %665 = vmatpush1.bf16.msra.mxu0 0
      %666 = vmatprep.subr.bf16.mxu0 0
      %667 = vmatpush1.bf16.msra.mxu0 0
      %668 = vmatprep.subr.bf16.mxu0 0
      %669 = vmatpush1.bf16.msra.mxu0 0
      %670 = vmatprep.subr.bf16.mxu0 0
      %671 = vmatpush1.bf16.msra.mxu0 0
      %672 = vmatprep.subr.bf16.mxu0 0
      %673 = vmatpush1.bf16.msra.mxu0 0
      %674 = vmatprep.mubr.bf16.mxu0 0
      %675 = vmatmul.mubr.bf16.gmra.mrb[0].mxu0 %v624
      %v676 = vpop.f32.mrb[0].mxu0
      %v677 = vadd.f32 %v557, %v676
      %v678 = vpop.f32.mrb[0].mxu0
      %v679 = vpop.f32.mrb[0].mxu0
      %v680 = vadd.f32 %v562, %v679
      %v681 = vpop.f32.mrb[0].mxu0
      %682 = vmatprep.mubr.bf16.mxu0 0
      %683 = vmatmul.mubr.bf16.gmra.mrb[0].mxu0 %v627
      %v684 = vpop.f32.mrb[0].mxu0
      %v685 = vadd.f32 %v567, %v684
      %v686 = vpop.f32.mrb[0].mxu0
      %v687 = vpop.f32.mrb[0].mxu0
      %v688 = vadd.f32 %v572, %v687
      %v689 = vpop.f32.mrb[0].mxu0
      %690 = vmatprep.mubr.bf16.mxu0 0
      %691 = vmatmul.mubr.bf16.gmra.mrb[0].mxu0 %v630
      %v692 = vpop.f32.mrb[0].mxu0
      %v693 = vadd.f32 %v577, %v692
      %v694 = vpop.f32.mrb[0].mxu0
      %v695 = vpop.f32.mrb[0].mxu0
      %v696 = vadd.f32 %v582, %v695
      %v697 = vpop.f32.mrb[0].mxu0
      %698 = vmatprep.mubr.bf16.mxu0 0
      %699 = vmatmul.mubr.bf16.gmra.mrb[0].mxu0 %v633
      %v700 = vpop.f32.mrb[0].mxu0
      %v701 = vadd.f32 %v587, %v700
      %v702 = vpop.f32.mrb[0].mxu0
      %v703 = vpop.f32.mrb[0].mxu0
      %v704 = vadd.f32 %v592, %v703
      %v705 = vpop.f32.mrb[0].mxu0
      %706 = vmatprep.mubr.bf16.mxu0 0
      %707 = vmatmul.mubr.bf16.gmra.mrb[0].mxu0 %v636
      %v708 = vpop.f32.mrb[0].mxu0
      %v709 = vadd.f32 %v597, %v708
      %v710 = vpop.f32.mrb[0].mxu0
      %v711 = vpop.f32.mrb[0].mxu0
      %v712 = vpop.f32.mrb[0].mxu0
      %713 = vdwg.mxu0
      %v714 = vmax.f32 %v677, 0.0
      %v715 = vmax.f32 %v680, 0.0
      %v716 = vmax.f32 %v685, 0.0
      %v717 = vmax.f32 %v688, 0.0
      %v718 = vmax.f32 %v693, 0.0
      %v719 = vmax.f32 %v696, 0.0
      %v720 = vmax.f32 %v701, 0.0
      %v721 = vmax.f32 %v704, 0.0
      %v722 = vmax.f32 %v709, 0.0
      %723 = vrot.lane.b32.xlu0 %v714, 2
      %v724 = vpop.permute.xlu0 %723
      %725 = vrot.lane.b32.xlu0 %v715, 2
      %v726 = vpop.permute.xlu0 %725
      %727 = vrot.lane.b32.xlu0 %v716, 2
      %v728 = vpop.permute.xlu0 %727
      %729 = vrot.lane.b32.xlu0 %v717, 2
      %v730 = vpop.permute.xlu0 %729
      %731 = vrot.lane.b32.xlu0 %v718, 2
      %v732 = vpop.permute.xlu0 %731
      %733 = vrot.lane.b32.xlu0 %v719, 2
      %v734 = vpop.permute.xlu0 %733
      %735 = vrot.lane.b32.xlu0 %v720, 2
      %v736 = vpop.permute.xlu0 %735
      %737 = vrot.lane.b32.xlu0 %v721, 2
      %v738 = vpop.permute.xlu0 %737
      %739 = vrot.lane.b32.xlu0 %v722, 2
      %v740 = vpop.permute.xlu0 %739
      %v741 = vsel %vm516, %v724, 0.0
      %v742 = vsel %vm516, %v726, 0.0
      %v743 = vsel %vm516, %v728, 0.0
      %v744 = vsel %vm516, %v730, 0.0
      %v745 = vsel %vm516, %v732, 0.0
      %v746 = vsel %vm516, %v734, 0.0
      %v747 = vsel %vm516, %v736, 0.0
      %v748 = vsel %vm516, %v738, 0.0
      %v749 = vsel %vm516, %v740, 0.0
      %750 = vrot.lane.b32.xlu0 %v714, 1
      %v751 = vpop.permute.xlu0 %750
      %752 = vrot.lane.b32.xlu0 %v715, 1
      %v753 = vpop.permute.xlu0 %752
      %754 = vrot.lane.b32.xlu0 %v716, 1
      %v755 = vpop.permute.xlu0 %754
      %756 = vrot.lane.b32.xlu0 %v717, 1
      %v757 = vpop.permute.xlu0 %756
      %758 = vrot.lane.b32.xlu0 %v718, 1
      %v759 = vpop.permute.xlu0 %758
      %760 = vrot.lane.b32.xlu0 %v719, 1
      %v761 = vpop.permute.xlu0 %760
      %762 = vrot.lane.b32.xlu0 %v720, 1
      %v763 = vpop.permute.xlu0 %762
      %764 = vrot.lane.b32.xlu0 %v721, 1
      %v765 = vpop.permute.xlu0 %764
      %766 = vrot.lane.b32.xlu0 %v722, 1
      %v767 = vpop.permute.xlu0 %766
      %v768 = vsel %vm521, %v751, 0.0
      %v769 = vsel %vm521, %v753, 0.0
      %v770 = vsel %vm521, %v755, 0.0
      %v771 = vsel %vm521, %v757, 0.0
      %v772 = vsel %vm521, %v759, 0.0
      %v773 = vsel %vm521, %v761, 0.0
      %v774 = vsel %vm521, %v763, 0.0
      %v775 = vsel %vm521, %v765, 0.0
      %v776 = vsel %vm521, %v767, 0.0
      %777 = vrot.lane.b32.xlu0 %v714, 127
      %v778 = vpop.permute.xlu0 %777
      %779 = vrot.lane.b32.xlu0 %v715, 127
      %v780 = vpop.permute.xlu0 %779
      %781 = vrot.lane.b32.xlu0 %v716, 127
      %v782 = vpop.permute.xlu0 %781
      %783 = vrot.lane.b32.xlu0 %v717, 127
      %v784 = vpop.permute.xlu0 %783
      %785 = vrot.lane.b32.xlu0 %v718, 127
      %v786 = vpop.permute.xlu0 %785
      %787 = vrot.lane.b32.xlu0 %v719, 127
      %v788 = vpop.permute.xlu0 %787
      %789 = vrot.lane.b32.xlu0 %v720, 127
      %v790 = vpop.permute.xlu0 %789
      %791 = vrot.lane.b32.xlu0 %v721, 127
      %v792 = vpop.permute.xlu0 %791
      %793 = vrot.lane.b32.xlu0 %v722, 127
      %v794 = vpop.permute.xlu0 %793
      %v795 = vsel %vm526, %v778, 0.0
      %v796 = vsel %vm526, %v780, 0.0
      %v797 = vsel %vm526, %v782, 0.0
      %v798 = vsel %vm526, %v784, 0.0
      %v799 = vsel %vm526, %v786, 0.0
      %v800 = vsel %vm526, %v788, 0.0
      %v801 = vsel %vm526, %v790, 0.0
      %v802 = vsel %vm526, %v792, 0.0
      %v803 = vsel %vm526, %v794, 0.0
      %804 = vrot.lane.b32.xlu0 %v714, 126
      %v805 = vpop.permute.xlu0 %804
      %806 = vrot.lane.b32.xlu0 %v715, 126
      %v807 = vpop.permute.xlu0 %806
      %808 = vrot.lane.b32.xlu0 %v716, 126
      %v809 = vpop.permute.xlu0 %808
      %810 = vrot.lane.b32.xlu0 %v717, 126
      %v811 = vpop.permute.xlu0 %810
      %812 = vrot.lane.b32.xlu0 %v718, 126
      %v813 = vpop.permute.xlu0 %812
      %814 = vrot.lane.b32.xlu0 %v719, 126
      %v815 = vpop.permute.xlu0 %814
      %816 = vrot.lane.b32.xlu0 %v720, 126
      %v817 = vpop.permute.xlu0 %816
      %818 = vrot.lane.b32.xlu0 %v721, 126
      %v819 = vpop.permute.xlu0 %818
      %820 = vrot.lane.b32.xlu0 %v722, 126
      %v821 = vpop.permute.xlu0 %820
      %v822 = vsel %vm531, %v805, 0.0
      %v823 = vsel %vm531, %v807, 0.0
      %v824 = vsel %vm531, %v809, 0.0
      %v825 = vsel %vm531, %v811, 0.0
      %v826 = vsel %vm531, %v813, 0.0
      %v827 = vsel %vm531, %v815, 0.0
      %v828 = vsel %vm531, %v817, 0.0
      %v829 = vsel %vm531, %v819, 0.0
      %v830 = vsel %vm531, %v821, 0.0
      %v831 = vpack.c.bf16 %v742, %v741
      %v832 = vpack.c.bf16 %v744, %v743
      %v833 = vpack.c.bf16 %v746, %v745
      %v834 = vpack.c.bf16 %v748, %v747
      %v835 = vpack.c.bf16 %v768, %v749
      %v836 = vpack.c.bf16 %v770, %v769
      %v837 = vpack.c.bf16 %v772, %v771
      %v838 = vpack.c.bf16 %v774, %v773
      %v839 = vpack.c.bf16 %v776, %v775
      %v840 = vpack.c.bf16 %v715, %v714
      %v841 = vpack.c.bf16 %v717, %v716
      %v842 = vpack.c.bf16 %v719, %v718
      %v843 = vpack.c.bf16 %v721, %v720
      %v844 = vpack.c.bf16 %v795, %v722
      %v845 = vpack.c.bf16 %v797, %v796
      %v846 = vpack.c.bf16 %v799, %v798
      %v847 = vpack.c.bf16 %v801, %v800
      %v848 = vpack.c.bf16 %v803, %v802
      %v849 = vpack.c.bf16 %v823, %v822
      %v850 = vpack.c.bf16 %v825, %v824
      %v851 = vpack.c.bf16 %v827, %v826
      %v852 = vpack.c.bf16 %v829, %v828
      %v853 = vpack.c.bf16 %v830, %v830
      %v854 = vld [vmem:[%s3] sm:$0xff]
      %v855 = vld [vmem:[%s3 + $0x8] sm:$0xf]
      %v856 = vld [vmem:[%s3 + $0xc] sm:$0xff]
      %v857 = vld [vmem:[%s3 + $0x14] sm:$0xf]
      %v858 = vld [vmem:[%s3 + $0x18] sm:$0xff]
      %v859 = vld [vmem:[%s3 + $0x20] sm:$0xf]
      %v860 = vld [vmem:[%s3 + $0x24] sm:$0xff]
      %v861 = vld [vmem:[%s3 + $0x2c] sm:$0xf]
      %v862 = vld [vmem:[%s3 + $0x30] sm:$0xff]
      %v863 = vld [vmem:[%s3 + $0x38] sm:$0xf]
      %v864 = vld [vmem:[%s3 + $0x3c] sm:$0xff]
      %v865 = vld [vmem:[%s3 + $0x44] sm:$0xf]
      %v866 = vld [vmem:[%s3 + $0x48] sm:$0xff]
      %v867 = vld [vmem:[%s3 + $0x50] sm:$0xf]
      %v868 = vld [vmem:[%s3 + $0x54] sm:$0xff]
      %v869 = vld [vmem:[%s3 + $0x5c] sm:$0xf]
      %v870 = vld [vmem:[%s3 + $0x60] sm:$0xff]
      %v871 = vld [vmem:[%s3 + $0x68] sm:$0xf]
      %v872 = vld [vmem:[%s4] sm:$0xff]
      %v873 = vld [vmem:[%s4 + $0x8] sm:$0xff]
      %v874 = vld [vmem:[%s4 + $0x10] sm:$0xff]
      %v875 = vld [vmem:[%s4 + $0x18] sm:$0xff]
      %v876 = vld [vmem:[%s4 + $0x20] sm:$0xff]
      %v877 = vld [vmem:[%s4 + $0x28] sm:$0xff]
      %v878 = vld [vmem:[%s4 + $0x30] sm:$0xff]
      %v879 = vld [vmem:[%s4 + $0x38] sm:$0xff]
      %v880 = vld [vmem:[%s4 + $0x40] sm:$0xff]
      %882 = vset.pattern.permute.xlu0 0
      %883 = vperm.xlu0 %882, %v872
      %v884 = vpop.permute.xlu0 %883
      %887 = vset.pattern.permute.xlu0 0
      %888 = vperm.xlu0 %887, %v873
      %v889 = vpop.permute.xlu0 %888
      %892 = vset.pattern.permute.xlu0 0
      %893 = vperm.xlu0 %892, %v874
      %v894 = vpop.permute.xlu0 %893
      %897 = vset.pattern.permute.xlu0 0
      %898 = vperm.xlu0 %897, %v875
      %v899 = vpop.permute.xlu0 %898
      %902 = vset.pattern.permute.xlu0 0
      %903 = vperm.xlu0 %902, %v876
      %v904 = vpop.permute.xlu0 %903
      %907 = vset.pattern.permute.xlu0 0
      %908 = vperm.xlu0 %907, %v877
      %v909 = vpop.permute.xlu0 %908
      %912 = vset.pattern.permute.xlu0 0
      %913 = vperm.xlu0 %912, %v878
      %v914 = vpop.permute.xlu0 %913
      %917 = vset.pattern.permute.xlu0 0
      %918 = vperm.xlu0 %917, %v879
      %v919 = vpop.permute.xlu0 %918
      %922 = vset.pattern.permute.xlu0 0
      %923 = vperm.xlu0 %922, %v880
      %v924 = vpop.permute.xlu0 %923
      %v944 = vunpack.c.l.b16 %v854
      %v945 = vunpack.c.h.b16 %v854
      %v946 = vunpack.c.l.b16 %v855
      %v947 = vunpack.c.l.b16 %v856
      %v948 = vunpack.c.h.b16 %v856
      %v949 = vunpack.c.l.b16 %v857
      %v950 = vunpack.c.l.b16 %v858
      %v951 = vunpack.c.h.b16 %v858
      %v952 = vunpack.c.l.b16 %v859
      %v953 = vunpack.c.l.b16 %v860
      %v954 = vunpack.c.h.b16 %v860
      %v955 = vunpack.c.l.b16 %v861
      %v956 = vunpack.c.l.b16 %v862
      %v957 = vunpack.c.h.b16 %v862
      %v958 = vunpack.c.l.b16 %v863
      %v959 = vunpack.c.l.b16 %v864
      %v960 = vunpack.c.h.b16 %v864
      %v961 = vunpack.c.l.b16 %v865
      %v962 = vunpack.c.l.b16 %v866
      %v963 = vunpack.c.h.b16 %v866
      %v964 = vunpack.c.l.b16 %v867
      %v965 = vunpack.c.l.b16 %v868
      %v966 = vunpack.c.h.b16 %v868
      %v967 = vunpack.c.l.b16 %v869
      %v968 = vunpack.c.l.b16 %v870
      %v969 = vunpack.c.h.b16 %v870
      %v970 = vunpack.c.l.b16 %v871
      %v971 = vpack.c.b16 %v947, %v944
      %v972 = vpack.c.b16 %v948, %v945
      %v973 = vpack.c.b16 %v949, %v946
      %v974 = vpack.c.b16 %v953, %v950
      %v975 = vpack.c.b16 %v954, %v951
      %v976 = vpack.c.b16 %v955, %v952
      %v977 = vpack.c.b16 %v959, %v956
      %v978 = vpack.c.b16 %v960, %v957
      %v979 = vpack.c.b16 %v961, %v958
      %v980 = vpack.c.b16 %v965, %v962
      %v981 = vpack.c.b16 %v966, %v963
      %v982 = vpack.c.b16 %v967, %v964
      %v983 = vpack.c.b16 %v968, %v968
      %v984 = vpack.c.b16 %v969, %v969
      %v985 = vpack.c.b16 %v970, %v970
      %vm996 = vcmask 850944
      %v998 = vsel %vm996, %v973, 0
      %v1001 = vsel %vm996, %v976, 0
      %v1004 = vsel %vm996, %v979, 0
      %v1007 = vsel %vm996, %v982, 0
      %v1010 = vsel %vm996, %v985, 0
      %v1013 = vsel %vm638, %v853, 0
      %1015 = vmatprep.subr.bf16.mxu0 0
      %1016 = vmatpush1.bf16.msra.mxu0 %v831
      %1017 = vmatprep.subr.bf16.mxu0 0
      %1018 = vmatpush1.bf16.msra.mxu0 %v832
      %1019 = vmatprep.subr.bf16.mxu0 0
      %1020 = vmatpush1.bf16.msra.mxu0 %v833
      %1021 = vmatprep.subr.bf16.mxu0 0
      %1022 = vmatpush1.bf16.msra.mxu0 %v834
      %1023 = vmatprep.subr.bf16.mxu0 0
      %1024 = vmatpush1.bf16.msra.mxu0 %v835
      %1025 = vmatprep.subr.bf16.mxu0 0
      %1026 = vmatpush1.bf16.msra.mxu0 %v836
      %1027 = vmatprep.subr.bf16.mxu0 0
      %1028 = vmatpush1.bf16.msra.mxu0 %v837
      %1029 = vmatprep.subr.bf16.mxu0 0
      %1030 = vmatpush1.bf16.msra.mxu0 %v838
      %1031 = vmatprep.subr.bf16.mxu0 0
      %1032 = vmatpush1.bf16.msra.mxu0 %v839
      %1033 = vmatprep.subr.bf16.mxu0 0
      %1034 = vmatpush1.bf16.msra.mxu0 %v840
      %1035 = vmatprep.subr.bf16.mxu0 0
      %1036 = vmatpush1.bf16.msra.mxu0 %v841
      %1037 = vmatprep.subr.bf16.mxu0 0
      %1038 = vmatpush1.bf16.msra.mxu0 %v842
      %1039 = vmatprep.subr.bf16.mxu0 0
      %1040 = vmatpush1.bf16.msra.mxu0 %v843
      %1041 = vmatprep.subr.bf16.mxu0 0
      %1042 = vmatpush1.bf16.msra.mxu0 %v844
      %1043 = vmatprep.subr.bf16.mxu0 0
      %1044 = vmatpush1.bf16.msra.mxu0 %v845
      %1045 = vmatprep.subr.bf16.mxu0 0
      %1046 = vmatpush1.bf16.msra.mxu0 %v846
      %1047 = vmatprep.mubr.bf16.mxu0 %v972
      %1048 = vmatmul.mubr.bf16.gmra.mrb[0].mxu0 %v971
      %v1049 = vpop.f32.mrb[0].mxu0
      %v1050 = vadd.f32 %v884, %v1049
      %v1051 = vpop.f32.mrb[0].mxu0
      %v1052 = vpop.f32.mrb[0].mxu0
      %v1053 = vadd.f32 %v889, %v1052
      %v1054 = vpop.f32.mrb[0].mxu0
      %1055 = vmatprep.mubr.bf16.mxu0 %v975
      %1056 = vmatmul.mubr.bf16.gmra.mrb[0].mxu0 %v974
      %v1057 = vpop.f32.mrb[0].mxu0
      %v1058 = vadd.f32 %v894, %v1057
      %v1059 = vpop.f32.mrb[0].mxu0
      %v1060 = vpop.f32.mrb[0].mxu0
      %v1061 = vadd.f32 %v899, %v1060
      %v1062 = vpop.f32.mrb[0].mxu0
      %1063 = vmatprep.mubr.bf16.mxu0 %v978
      %1064 = vmatmul.mubr.bf16.gmra.mrb[0].mxu0 %v977
      %v1065 = vpop.f32.mrb[0].mxu0
      %v1066 = vadd.f32 %v904, %v1065
      %v1067 = vpop.f32.mrb[0].mxu0
      %v1068 = vpop.f32.mrb[0].mxu0
      %v1069 = vadd.f32 %v909, %v1068
      %v1070 = vpop.f32.mrb[0].mxu0
      %1071 = vmatprep.mubr.bf16.mxu0 %v981
      %1072 = vmatmul.mubr.bf16.gmra.mrb[0].mxu0 %v980
      %v1073 = vpop.f32.mrb[0].mxu0
      %v1074 = vadd.f32 %v914, %v1073
      %v1075 = vpop.f32.mrb[0].mxu0
      %v1076 = vpop.f32.mrb[0].mxu0
      %v1077 = vadd.f32 %v919, %v1076
      %v1078 = vpop.f32.mrb[0].mxu0
      %1079 = vmatprep.mubr.bf16.mxu0 %v984
      %1080 = vmatmul.mubr.bf16.gmra.mrb[0].mxu0 %v983
      %v1081 = vpop.f32.mrb[0].mxu0
      %v1082 = vadd.f32 %v924, %v1081
      %v1083 = vpop.f32.mrb[0].mxu0
      %v1084 = vpop.f32.mrb[0].mxu0
      %v1085 = vpop.f32.mrb[0].mxu0
      %1086 = vdwg.mxu0
      %1087 = vmatprep.subr.bf16.mxu0 0
      %1088 = vmatpush1.bf16.msra.mxu0 %v847
      %1089 = vmatprep.subr.bf16.mxu0 0
      %1090 = vmatpush1.bf16.msra.mxu0 %v848
      %1091 = vmatprep.subr.bf16.mxu0 0
      %1092 = vmatpush1.bf16.msra.mxu0 %v849
      %1093 = vmatprep.subr.bf16.mxu0 0
      %1094 = vmatpush1.bf16.msra.mxu0 %v850
      %1095 = vmatprep.subr.bf16.mxu0 0
      %1096 = vmatpush1.bf16.msra.mxu0 %v851
      %1097 = vmatprep.subr.bf16.mxu0 0
      %1098 = vmatpush1.bf16.msra.mxu0 %v852
      %1099 = vmatprep.subr.bf16.mxu0 0
      %1100 = vmatpush1.bf16.msra.mxu0 %v1013
      %1101 = vmatprep.subr.bf16.mxu0 0
      %1102 = vmatpush1.bf16.msra.mxu0 0
      %1103 = vmatprep.subr.bf16.mxu0 0
      %1104 = vmatpush1.bf16.msra.mxu0 0
      %1105 = vmatprep.subr.bf16.mxu0 0
      %1106 = vmatpush1.bf16.msra.mxu0 0
      %1107 = vmatprep.subr.bf16.mxu0 0
      %1108 = vmatpush1.bf16.msra.mxu0 0
      %1109 = vmatprep.subr.bf16.mxu0 0
      %1110 = vmatpush1.bf16.msra.mxu0 0
      %1111 = vmatprep.subr.bf16.mxu0 0
      %1112 = vmatpush1.bf16.msra.mxu0 0
      %1113 = vmatprep.subr.bf16.mxu0 0
      %1114 = vmatpush1.bf16.msra.mxu0 0
      %1115 = vmatprep.subr.bf16.mxu0 0
      %1116 = vmatpush1.bf16.msra.mxu0 0
      %1117 = vmatprep.subr.bf16.mxu0 0
      %1118 = vmatpush1.bf16.msra.mxu0 0
      %1119 = vmatprep.mubr.bf16.mxu0 0
      %1120 = vmatmul.mubr.bf16.gmra.mrb[0].mxu0 %v998
      %v1121 = vpop.f32.mrb[0].mxu0
      %v1122 = vadd.f32 %v1050, %v1121
      %v1123 = vpop.f32.mrb[0].mxu0
      %v1124 = vpop.f32.mrb[0].mxu0
      %v1125 = vadd.f32 %v1053, %v1124
      %v1126 = vpop.f32.mrb[0].mxu0
      %1127 = vmatprep.mubr.bf16.mxu0 0
      %1128 = vmatmul.mubr.bf16.gmra.mrb[0].mxu0 %v1001
      %v1129 = vpop.f32.mrb[0].mxu0
      %v1130 = vadd.f32 %v1058, %v1129
      %v1131 = vpop.f32.mrb[0].mxu0
      %v1132 = vpop.f32.mrb[0].mxu0
      %v1133 = vadd.f32 %v1061, %v1132
      %v1134 = vpop.f32.mrb[0].mxu0
      %1135 = vmatprep.mubr.bf16.mxu0 0
      %1136 = vmatmul.mubr.bf16.gmra.mrb[0].mxu0 %v1004
      %v1137 = vpop.f32.mrb[0].mxu0
      %v1138 = vadd.f32 %v1066, %v1137
      %v1139 = vpop.f32.mrb[0].mxu0
      %v1140 = vpop.f32.mrb[0].mxu0
      %v1141 = vadd.f32 %v1069, %v1140
      %v1142 = vpop.f32.mrb[0].mxu0
      %1143 = vmatprep.mubr.bf16.mxu0 0
      %1144 = vmatmul.mubr.bf16.gmra.mrb[0].mxu0 %v1007
      %v1145 = vpop.f32.mrb[0].mxu0
      %v1146 = vadd.f32 %v1074, %v1145
      %v1147 = vpop.f32.mrb[0].mxu0
      %v1148 = vpop.f32.mrb[0].mxu0
      %v1149 = vadd.f32 %v1077, %v1148
      %v1150 = vpop.f32.mrb[0].mxu0
      %1151 = vmatprep.mubr.bf16.mxu0 0
      %1152 = vmatmul.mubr.bf16.gmra.mrb[0].mxu0 %v1010
      %v1153 = vpop.f32.mrb[0].mxu0
      %v1154 = vadd.f32 %v1082, %v1153
      %v1155 = vpop.f32.mrb[0].mxu0
      %v1156 = vpop.f32.mrb[0].mxu0
      %v1157 = vpop.f32.mrb[0].mxu0
      %1158 = vdwg.mxu0
      %v1159 = vmax.f32 %v1122, 0.0
      %v1160 = vmax.f32 %v1125, 0.0
      %v1161 = vmax.f32 %v1130, 0.0
      %v1162 = vmax.f32 %v1133, 0.0
      %v1163 = vmax.f32 %v1138, 0.0
      %v1164 = vmax.f32 %v1141, 0.0
      %v1165 = vmax.f32 %v1146, 0.0
      %v1166 = vmax.f32 %v1149, 0.0
      %v1167 = vmax.f32 %v1154, 0.0
      %1168 = vrot.lane.b32.xlu0 %v1159, 127
      %v1169 = vpop.permute.xlu0 %1168
      %1170 = vrot.lane.b32.xlu0 %v1160, 127
      %v1171 = vpop.permute.xlu0 %1170
      %1172 = vrot.lane.b32.xlu0 %v1161, 127
      %v1173 = vpop.permute.xlu0 %1172
      %1174 = vrot.lane.b32.xlu0 %v1162, 127
      %v1175 = vpop.permute.xlu0 %1174
      %1176 = vrot.lane.b32.xlu0 %v1163, 127
      %v1177 = vpop.permute.xlu0 %1176
      %1178 = vrot.lane.b32.xlu0 %v1164, 127
      %v1179 = vpop.permute.xlu0 %1178
      %1180 = vrot.lane.b32.xlu0 %v1165, 127
      %v1181 = vpop.permute.xlu0 %1180
      %1182 = vrot.lane.b32.xlu0 %v1166, 127
      %v1183 = vpop.permute.xlu0 %1182
      %1184 = vrot.lane.b32.xlu0 %v1167, 127
      %v1185 = vpop.permute.xlu0 %1184
      %v1186 = vmax.f32 %v1159, %v1169
      %v1187 = vmax.f32 %v1160, %v1171
      %v1188 = vmax.f32 %v1161, %v1173
      %v1189 = vmax.f32 %v1162, %v1175
      %v1190 = vmax.f32 %v1163, %v1177
      %v1191 = vmax.f32 %v1164, %v1179
      %v1192 = vmax.f32 %v1165, %v1181
      %v1193 = vmax.f32 %v1166, %v1183
      %v1194 = vmax.f32 %v1167, %v1185
      %1195 = vrot.lane.b32.xlu0 %v1186, 4
      %v1196 = vpop.permute.xlu0 %1195
      %1197 = vrot.lane.b32.xlu0 %v1187, 4
      %v1198 = vpop.permute.xlu0 %1197
      %1199 = vrot.lane.b32.xlu0 %v1188, 4
      %v1200 = vpop.permute.xlu0 %1199
      %1201 = vrot.lane.b32.xlu0 %v1189, 4
      %v1202 = vpop.permute.xlu0 %1201
      %1203 = vrot.lane.b32.xlu0 %v1190, 4
      %v1204 = vpop.permute.xlu0 %1203
      %1205 = vrot.lane.b32.xlu0 %v1191, 4
      %v1206 = vpop.permute.xlu0 %1205
      %1207 = vrot.lane.b32.xlu0 %v1192, 4
      %v1208 = vpop.permute.xlu0 %1207
      %1209 = vrot.lane.b32.xlu0 %v1193, 4
      %v1210 = vpop.permute.xlu0 %1209
      %1211 = vrot.lane.b32.xlu0 %v1194, 4
      %v1212 = vpop.permute.xlu0 %1211
      %v1213 = vsel %vm487, 1, 0
      %vm1214 = vcmp.eq.s32.totalorder %v1213, 1
      %v1215 = vsel %vm1214, %v1196, 0.0
      %v1216 = vsel %vm1214, %v1198, 0.0
      %v1217 = vsel %vm1214, %v1200, 0.0
      %v1218 = vsel %vm1214, %v1202, 0.0
      %v1219 = vsel %vm1214, %v1204, 0.0
      %v1220 = vsel %vm1214, %v1206, 0.0
      %v1221 = vsel %vm1214, %v1208, 0.0
      %v1222 = vsel %vm1214, %v1210, 0.0
      %v1223 = vsel %vm1214, %v1212, 0.0
      %1224 = vrot.lane.b32.xlu0 %v1186, 2
      %v1225 = vpop.permute.xlu0 %1224
      %1226 = vrot.lane.b32.xlu0 %v1187, 2
      %v1227 = vpop.permute.xlu0 %1226
      %1228 = vrot.lane.b32.xlu0 %v1188, 2
      %v1229 = vpop.permute.xlu0 %1228
      %1230 = vrot.lane.b32.xlu0 %v1189, 2
      %v1231 = vpop.permute.xlu0 %1230
      %1232 = vrot.lane.b32.xlu0 %v1190, 2
      %v1233 = vpop.permute.xlu0 %1232
      %1234 = vrot.lane.b32.xlu0 %v1191, 2
      %v1235 = vpop.permute.xlu0 %1234
      %1236 = vrot.lane.b32.xlu0 %v1192, 2
      %v1237 = vpop.permute.xlu0 %1236
      %1238 = vrot.lane.b32.xlu0 %v1193, 2
      %v1239 = vpop.permute.xlu0 %1238
      %1240 = vrot.lane.b32.xlu0 %v1194, 2
      %v1241 = vpop.permute.xlu0 %1240
      %v1242 = vsel %vm516, %v1225, 0.0
      %v1243 = vsel %vm516, %v1227, 0.0
      %v1244 = vsel %vm516, %v1229, 0.0
      %v1245 = vsel %vm516, %v1231, 0.0
      %v1246 = vsel %vm516, %v1233, 0.0
      %v1247 = vsel %vm516, %v1235, 0.0
      %v1248 = vsel %vm516, %v1237, 0.0
      %v1249 = vsel %vm516, %v1239, 0.0
      %v1250 = vsel %vm516, %v1241, 0.0
      %1251 = vrot.lane.b32.xlu0 %v1186, 126
      %v1252 = vpop.permute.xlu0 %1251
      %1253 = vrot.lane.b32.xlu0 %v1187, 126
      %v1254 = vpop.permute.xlu0 %1253
      %1255 = vrot.lane.b32.xlu0 %v1188, 126
      %v1256 = vpop.permute.xlu0 %1255
      %1257 = vrot.lane.b32.xlu0 %v1189, 126
      %v1258 = vpop.permute.xlu0 %1257
      %1259 = vrot.lane.b32.xlu0 %v1190, 126
      %v1260 = vpop.permute.xlu0 %1259
      %1261 = vrot.lane.b32.xlu0 %v1191, 126
      %v1262 = vpop.permute.xlu0 %1261
      %1263 = vrot.lane.b32.xlu0 %v1192, 126
      %v1264 = vpop.permute.xlu0 %1263
      %1265 = vrot.lane.b32.xlu0 %v1193, 126
      %v1266 = vpop.permute.xlu0 %1265
      %1267 = vrot.lane.b32.xlu0 %v1194, 126
      %v1268 = vpop.permute.xlu0 %1267
      %v1269 = vsel %vm531, %v1252, 0.0
      %v1270 = vsel %vm531, %v1254, 0.0
      %v1271 = vsel %vm531, %v1256, 0.0
      %v1272 = vsel %vm531, %v1258, 0.0
      %v1273 = vsel %vm531, %v1260, 0.0
      %v1274 = vsel %vm531, %v1262, 0.0
      %v1275 = vsel %vm531, %v1264, 0.0
      %v1276 = vsel %vm531, %v1266, 0.0
      %v1277 = vsel %vm531, %v1268, 0.0
      %1278 = vrot.lane.b32.xlu0 %v1186, 124
      %v1279 = vpop.permute.xlu0 %1278
      %1280 = vrot.lane.b32.xlu0 %v1187, 124
      %v1281 = vpop.permute.xlu0 %1280
      %1282 = vrot.lane.b32.xlu0 %v1188, 124
      %v1283 = vpop.permute.xlu0 %1282
      %1284 = vrot.lane.b32.xlu0 %v1189, 124
      %v1285 = vpop.permute.xlu0 %1284
      %1286 = vrot.lane.b32.xlu0 %v1190, 124
      %v1287 = vpop.permute.xlu0 %1286
      %1288 = vrot.lane.b32.xlu0 %v1191, 124
      %v1289 = vpop.permute.xlu0 %1288
      %1290 = vrot.lane.b32.xlu0 %v1192, 124
      %v1291 = vpop.permute.xlu0 %1290
      %1292 = vrot.lane.b32.xlu0 %v1193, 124
      %v1293 = vpop.permute.xlu0 %1292
      %1294 = vrot.lane.b32.xlu0 %v1194, 124
      %v1295 = vpop.permute.xlu0 %1294
      %v1296 = vsel %vm507, 1, 0
      %vm1297 = vcmp.eq.s32.totalorder %v1296, 1
      %v1298 = vsel %vm1297, %v1279, 0.0
      %v1299 = vsel %vm1297, %v1281, 0.0
      %v1300 = vsel %vm1297, %v1283, 0.0
      %v1301 = vsel %vm1297, %v1285, 0.0
      %v1302 = vsel %vm1297, %v1287, 0.0
      %v1303 = vsel %vm1297, %v1289, 0.0
      %v1304 = vsel %vm1297, %v1291, 0.0
      %v1305 = vsel %vm1297, %v1293, 0.0
      %v1306 = vsel %vm1297, %v1295, 0.0
      %v1307 = vpack.c.bf16 %v1216, %v1215
      %v1308 = vpack.c.bf16 %v1218, %v1217
      %v1309 = vpack.c.bf16 %v1220, %v1219
      %v1310 = vpack.c.bf16 %v1222, %v1221
      %v1311 = vpack.c.bf16 %v1242, %v1223
      %v1312 = vpack.c.bf16 %v1244, %v1243
      %v1313 = vpack.c.bf16 %v1246, %v1245
      %v1314 = vpack.c.bf16 %v1248, %v1247
      %v1315 = vpack.c.bf16 %v1250, %v1249
      %v1316 = vpack.c.bf16 %v1187, %v1186
      %v1317 = vpack.c.bf16 %v1189, %v1188
      %v1318 = vpack.c.bf16 %v1191, %v1190
      %v1319 = vpack.c.bf16 %v1193, %v1192
      %v1320 = vpack.c.bf16 %v1269, %v1194
      %v1321 = vpack.c.bf16 %v1271, %v1270
      %v1322 = vpack.c.bf16 %v1273, %v1272
      %v1323 = vpack.c.bf16 %v1275, %v1274
      %v1324 = vpack.c.bf16 %v1277, %v1276
      %v1325 = vpack.c.bf16 %v1299, %v1298
      %v1326 = vpack.c.bf16 %v1301, %v1300
      %v1327 = vpack.c.bf16 %v1303, %v1302
      %v1328 = vpack.c.bf16 %v1305, %v1304
      %v1329 = vpack.c.bf16 %v1306, %v1306
      %v1330 = vld [vmem:[%s5] sm:$0xff]
      %v1331 = vld [vmem:[%s5 + $0x8] sm:$0xf]
      %v1332 = vld [vmem:[%s5 + $0xc] sm:$0xff]
      %v1333 = vld [vmem:[%s5 + $0x14] sm:$0xf]
      %v1334 = vld [vmem:[%s5 + $0x18] sm:$0xff]
      %v1335 = vld [vmem:[%s5 + $0x20] sm:$0xf]
      %v1336 = vld [vmem:[%s5 + $0x24] sm:$0xff]
      %v1337 = vld [vmem:[%s5 + $0x2c] sm:$0xf]
      %v1338 = vld [vmem:[%s5 + $0x30] sm:$0xff]
      %v1339 = vld [vmem:[%s5 + $0x38] sm:$0xf]
      %v1340 = vld [vmem:[%s5 + $0x3c] sm:$0xff]
      %v1341 = vld [vmem:[%s5 + $0x44] sm:$0xf]
      %v1342 = vld [vmem:[%s5 + $0x48] sm:$0xff]
      %v1343 = vld [vmem:[%s5 + $0x50] sm:$0xf]
      %v1344 = vld [vmem:[%s5 + $0x54] sm:$0xff]
      %v1345 = vld [vmem:[%s5 + $0x5c] sm:$0xf]
      %v1346 = vld [vmem:[%s5 + $0x60] sm:$0xff]
      %v1347 = vld [vmem:[%s5 + $0x68] sm:$0xf]
      %v1348 = vld [vmem:[%s6] sm:$0xff]
      %v1349 = vld [vmem:[%s6 + $0x8] sm:$0xff]
      %v1350 = vld [vmem:[%s6 + $0x10] sm:$0xff]
      %v1351 = vld [vmem:[%s6 + $0x18] sm:$0xff]
      %v1352 = vld [vmem:[%s6 + $0x20] sm:$0xff]
      %v1353 = vld [vmem:[%s6 + $0x28] sm:$0xff]
      %v1354 = vld [vmem:[%s6 + $0x30] sm:$0xff]
      %v1355 = vld [vmem:[%s6 + $0x38] sm:$0xff]
      %v1356 = vld [vmem:[%s6 + $0x40] sm:$0xff]
      %1358 = vset.pattern.permute.xlu0 0
      %1359 = vperm.xlu0 %1358, %v1348
      %v1360 = vpop.permute.xlu0 %1359
      %1363 = vset.pattern.permute.xlu0 0
      %1364 = vperm.xlu0 %1363, %v1349
      %v1365 = vpop.permute.xlu0 %1364
      %1368 = vset.pattern.permute.xlu0 0
      %1369 = vperm.xlu0 %1368, %v1350
      %v1370 = vpop.permute.xlu0 %1369
      %1373 = vset.pattern.permute.xlu0 0
      %1374 = vperm.xlu0 %1373, %v1351
      %v1375 = vpop.permute.xlu0 %1374
      %1378 = vset.pattern.permute.xlu0 0
      %1379 = vperm.xlu0 %1378, %v1352
      %v1380 = vpop.permute.xlu0 %1379
      %1383 = vset.pattern.permute.xlu0 0
      %1384 = vperm.xlu0 %1383, %v1353
      %v1385 = vpop.permute.xlu0 %1384
      %1388 = vset.pattern.permute.xlu0 0
      %1389 = vperm.xlu0 %1388, %v1354
      %v1390 = vpop.permute.xlu0 %1389
      %1393 = vset.pattern.permute.xlu0 0
      %1394 = vperm.xlu0 %1393, %v1355
      %v1395 = vpop.permute.xlu0 %1394
      %1398 = vset.pattern.permute.xlu0 0
      %1399 = vperm.xlu0 %1398, %v1356
      %v1400 = vpop.permute.xlu0 %1399
      %v1420 = vunpack.c.l.b16 %v1330
      %v1421 = vunpack.c.h.b16 %v1330
      %v1422 = vunpack.c.l.b16 %v1331
      %v1423 = vunpack.c.l.b16 %v1332
      %v1424 = vunpack.c.h.b16 %v1332
      %v1425 = vunpack.c.l.b16 %v1333
      %v1426 = vunpack.c.l.b16 %v1334
      %v1427 = vunpack.c.h.b16 %v1334
      %v1428 = vunpack.c.l.b16 %v1335
      %v1429 = vunpack.c.l.b16 %v1336
      %v1430 = vunpack.c.h.b16 %v1336
      %v1431 = vunpack.c.l.b16 %v1337
      %v1432 = vunpack.c.l.b16 %v1338
      %v1433 = vunpack.c.h.b16 %v1338
      %v1434 = vunpack.c.l.b16 %v1339
      %v1435 = vunpack.c.l.b16 %v1340
      %v1436 = vunpack.c.h.b16 %v1340
      %v1437 = vunpack.c.l.b16 %v1341
      %v1438 = vunpack.c.l.b16 %v1342
      %v1439 = vunpack.c.h.b16 %v1342
      %v1440 = vunpack.c.l.b16 %v1343
      %v1441 = vunpack.c.l.b16 %v1344
      %v1442 = vunpack.c.h.b16 %v1344
      %v1443 = vunpack.c.l.b16 %v1345
      %v1444 = vunpack.c.l.b16 %v1346
      %v1445 = vunpack.c.h.b16 %v1346
      %v1446 = vunpack.c.l.b16 %v1347
      %v1447 = vpack.c.b16 %v1423, %v1420
      %v1448 = vpack.c.b16 %v1424, %v1421
      %v1449 = vpack.c.b16 %v1425, %v1422
      %v1450 = vpack.c.b16 %v1429, %v1426
      %v1451 = vpack.c.b16 %v1430, %v1427
      %v1452 = vpack.c.b16 %v1431, %v1428
      %v1453 = vpack.c.b16 %v1435, %v1432
      %v1454 = vpack.c.b16 %v1436, %v1433
      %v1455 = vpack.c.b16 %v1437, %v1434
      %v1456 = vpack.c.b16 %v1441, %v1438
      %v1457 = vpack.c.b16 %v1442, %v1439
      %v1458 = vpack.c.b16 %v1443, %v1440
      %v1459 = vpack.c.b16 %v1444, %v1444
      %v1460 = vpack.c.b16 %v1445, %v1445
      %v1461 = vpack.c.b16 %v1446, %v1446
      %v1473 = vsel %vm996, %v1449, 0
      %v1476 = vsel %vm996, %v1452, 0
      %v1479 = vsel %vm996, %v1455, 0
      %v1482 = vsel %vm996, %v1458, 0
      %v1485 = vsel %vm996, %v1461, 0
      %v1488 = vsel %vm638, %v1329, 0
      %1490 = vmatprep.subr.bf16.mxu0 0
      %1491 = vmatpush1.bf16.msra.mxu0 %v1307
      %1492 = vmatprep.subr.bf16.mxu0 0
      %1493 = vmatpush1.bf16.msra.mxu0 %v1308
      %1494 = vmatprep.subr.bf16.mxu0 0
      %1495 = vmatpush1.bf16.msra.mxu0 %v1309
      %1496 = vmatprep.subr.bf16.mxu0 0
      %1497 = vmatpush1.bf16.msra.mxu0 %v1310
      %1498 = vmatprep.subr.bf16.mxu0 0
      %1499 = vmatpush1.bf16.msra.mxu0 %v1311
      %1500 = vmatprep.subr.bf16.mxu0 0
      %1501 = vmatpush1.bf16.msra.mxu0 %v1312
      %1502 = vmatprep.subr.bf16.mxu0 0
      %1503 = vmatpush1.bf16.msra.mxu0 %v1313
      %1504 = vmatprep.subr.bf16.mxu0 0
      %1505 = vmatpush1.bf16.msra.mxu0 %v1314
      %1506 = vmatprep.subr.bf16.mxu0 0
      %1507 = vmatpush1.bf16.msra.mxu0 %v1315
      %1508 = vmatprep.subr.bf16.mxu0 0
      %1509 = vmatpush1.bf16.msra.mxu0 %v1316
      %1510 = vmatprep.subr.bf16.mxu0 0
      %1511 = vmatpush1.bf16.msra.mxu0 %v1317
      %1512 = vmatprep.subr.bf16.mxu0 0
      %1513 = vmatpush1.bf16.msra.mxu0 %v1318
      %1514 = vmatprep.subr.bf16.mxu0 0
      %1515 = vmatpush1.bf16.msra.mxu0 %v1319
      %1516 = vmatprep.subr.bf16.mxu0 0
      %1517 = vmatpush1.bf16.msra.mxu0 %v1320
      %1518 = vmatprep.subr.bf16.mxu0 0
      %1519 = vmatpush1.bf16.msra.mxu0 %v1321
      %1520 = vmatprep.subr.bf16.mxu0 0
      %1521 = vmatpush1.bf16.msra.mxu0 %v1322
      %1522 = vmatprep.mubr.bf16.mxu0 %v1448
      %1523 = vmatmul.mubr.bf16.gmra.mrb[0].mxu0 %v1447
      %v1524 = vpop.f32.mrb[0].mxu0
      %v1525 = vadd.f32 %v1360, %v1524
      %v1526 = vpop.f32.mrb[0].mxu0
      %v1527 = vpop.f32.mrb[0].mxu0
      %v1528 = vadd.f32 %v1365, %v1527
      %v1529 = vpop.f32.mrb[0].mxu0
      %1530 = vmatprep.mubr.bf16.mxu0 %v1451
      %1531 = vmatmul.mubr.bf16.gmra.mrb[0].mxu0 %v1450
      %v1532 = vpop.f32.mrb[0].mxu0
      %v1533 = vadd.f32 %v1370, %v1532
      %v1534 = vpop.f32.mrb[0].mxu0
      %v1535 = vpop.f32.mrb[0].mxu0
      %v1536 = vadd.f32 %v1375, %v1535
      %v1537 = vpop.f32.mrb[0].mxu0
      %1538 = vmatprep.mubr.bf16.mxu0 %v1454
      %1539 = vmatmul.mubr.bf16.gmra.mrb[0].mxu0 %v1453
      %v1540 = vpop.f32.mrb[0].mxu0
      %v1541 = vadd.f32 %v1380, %v1540
      %v1542 = vpop.f32.mrb[0].mxu0
      %v1543 = vpop.f32.mrb[0].mxu0
      %v1544 = vadd.f32 %v1385, %v1543
      %v1545 = vpop.f32.mrb[0].mxu0
      %1546 = vmatprep.mubr.bf16.mxu0 %v1457
      %1547 = vmatmul.mubr.bf16.gmra.mrb[0].mxu0 %v1456
      %v1548 = vpop.f32.mrb[0].mxu0
      %v1549 = vadd.f32 %v1390, %v1548
      %v1550 = vpop.f32.mrb[0].mxu0
      %v1551 = vpop.f32.mrb[0].mxu0
      %v1552 = vadd.f32 %v1395, %v1551
      %v1553 = vpop.f32.mrb[0].mxu0
      %1554 = vmatprep.mubr.bf16.mxu0 %v1460
      %1555 = vmatmul.mubr.bf16.gmra.mrb[0].mxu0 %v1459
      %v1556 = vpop.f32.mrb[0].mxu0
      %v1557 = vadd.f32 %v1400, %v1556
      %v1558 = vpop.f32.mrb[0].mxu0
      %v1559 = vpop.f32.mrb[0].mxu0
      %v1560 = vpop.f32.mrb[0].mxu0
      %1561 = vdwg.mxu0
      %1562 = vmatprep.subr.bf16.mxu0 0
      %1563 = vmatpush1.bf16.msra.mxu0 %v1323
      %1564 = vmatprep.subr.bf16.mxu0 0
      %1565 = vmatpush1.bf16.msra.mxu0 %v1324
      %1566 = vmatprep.subr.bf16.mxu0 0
      %1567 = vmatpush1.bf16.msra.mxu0 %v1325
      %1568 = vmatprep.subr.bf16.mxu0 0
      %1569 = vmatpush1.bf16.msra.mxu0 %v1326
      %1570 = vmatprep.subr.bf16.mxu0 0
      %1571 = vmatpush1.bf16.msra.mxu0 %v1327
      %1572 = vmatprep.subr.bf16.mxu0 0
      %1573 = vmatpush1.bf16.msra.mxu0 %v1328
      %1574 = vmatprep.subr.bf16.mxu0 0
      %1575 = vmatpush1.bf16.msra.mxu0 %v1488
      %1576 = vmatprep.subr.bf16.mxu0 0
      %1577 = vmatpush1.bf16.msra.mxu0 0
      %1578 = vmatprep.subr.bf16.mxu0 0
      %1579 = vmatpush1.bf16.msra.mxu0 0
      %1580 = vmatprep.subr.bf16.mxu0 0
      %1581 = vmatpush1.bf16.msra.mxu0 0
      %1582 = vmatprep.subr.bf16.mxu0 0
      %1583 = vmatpush1.bf16.msra.mxu0 0
      %1584 = vmatprep.subr.bf16.mxu0 0
      %1585 = vmatpush1.bf16.msra.mxu0 0
      %1586 = vmatprep.subr.bf16.mxu0 0
      %1587 = vmatpush1.bf16.msra.mxu0 0
      %1588 = vmatprep.subr.bf16.mxu0 0
      %1589 = vmatpush1.bf16.msra.mxu0 0
      %1590 = vmatprep.subr.bf16.mxu0 0
      %1591 = vmatpush1.bf16.msra.mxu0 0
      %1592 = vmatprep.subr.bf16.mxu0 0
      %1593 = vmatpush1.bf16.msra.mxu0 0
      %1594 = vmatprep.mubr.bf16.mxu0 0
      %1595 = vmatmul.mubr.bf16.gmra.mrb[0].mxu0 %v1473
      %v1596 = vpop.f32.mrb[0].mxu0
      %v1597 = vadd.f32 %v1525, %v1596
      %v1598 = vpop.f32.mrb[0].mxu0
      %v1599 = vpop.f32.mrb[0].mxu0
      %v1600 = vadd.f32 %v1528, %v1599
      %v1601 = vpop.f32.mrb[0].mxu0
      %1602 = vmatprep.mubr.bf16.mxu0 0
      %1603 = vmatmul.mubr.bf16.gmra.mrb[0].mxu0 %v1476
      %v1604 = vpop.f32.mrb[0].mxu0
      %v1605 = vadd.f32 %v1533, %v1604
      %v1606 = vpop.f32.mrb[0].mxu0
      %v1607 = vpop.f32.mrb[0].mxu0
      %v1608 = vadd.f32 %v1536, %v1607
      %v1609 = vpop.f32.mrb[0].mxu0
      %1610 = vmatprep.mubr.bf16.mxu0 0
      %1611 = vmatmul.mubr.bf16.gmra.mrb[0].mxu0 %v1479
      %v1612 = vpop.f32.mrb[0].mxu0
      %v1613 = vadd.f32 %v1541, %v1612
      %v1614 = vpop.f32.mrb[0].mxu0
      %v1615 = vpop.f32.mrb[0].mxu0
      %v1616 = vadd.f32 %v1544, %v1615
      %v1617 = vpop.f32.mrb[0].mxu0
      %1618 = vmatprep.mubr.bf16.mxu0 0
      %1619 = vmatmul.mubr.bf16.gmra.mrb[0].mxu0 %v1482
      %v1620 = vpop.f32.mrb[0].mxu0
      %v1621 = vadd.f32 %v1549, %v1620
      %v1622 = vpop.f32.mrb[0].mxu0
      %v1623 = vpop.f32.mrb[0].mxu0
      %v1624 = vadd.f32 %v1552, %v1623
      %v1625 = vpop.f32.mrb[0].mxu0
      %1626 = vmatprep.mubr.bf16.mxu0 0
      %1627 = vmatmul.mubr.bf16.gmra.mrb[0].mxu0 %v1485
      %v1628 = vpop.f32.mrb[0].mxu0
      %v1629 = vadd.f32 %v1557, %v1628
      %v1630 = vpop.f32.mrb[0].mxu0
      %v1631 = vpop.f32.mrb[0].mxu0
      %v1632 = vpop.f32.mrb[0].mxu0
      %1633 = vdwg.mxu0
      %v1634 = vmax.f32 %v1597, 0.0
      %v1635 = vmax.f32 %v1600, 0.0
      %v1636 = vmax.f32 %v1605, 0.0
      %v1637 = vmax.f32 %v1608, 0.0
      %v1638 = vmax.f32 %v1613, 0.0
      %v1639 = vmax.f32 %v1616, 0.0
      %v1640 = vmax.f32 %v1621, 0.0
      %v1641 = vmax.f32 %v1624, 0.0
      %v1642 = vmax.f32 %v1629, 0.0
      %1643 = vrot.lane.b32.xlu0 %v1634, 4
      %v1644 = vpop.permute.xlu0 %1643
      %1645 = vrot.lane.b32.xlu0 %v1635, 4
      %v1646 = vpop.permute.xlu0 %1645
      %1647 = vrot.lane.b32.xlu0 %v1636, 4
      %v1648 = vpop.permute.xlu0 %1647
      %1649 = vrot.lane.b32.xlu0 %v1637, 4
      %v1650 = vpop.permute.xlu0 %1649
      %1651 = vrot.lane.b32.xlu0 %v1638, 4
      %v1652 = vpop.permute.xlu0 %1651
      %1653 = vrot.lane.b32.xlu0 %v1639, 4
      %v1654 = vpop.permute.xlu0 %1653
      %1655 = vrot.lane.b32.xlu0 %v1640, 4
      %v1656 = vpop.permute.xlu0 %1655
      %1657 = vrot.lane.b32.xlu0 %v1641, 4
      %v1658 = vpop.permute.xlu0 %1657
      %1659 = vrot.lane.b32.xlu0 %v1642, 4
      %v1660 = vpop.permute.xlu0 %1659
      %v1661 = vsel %vm1214, %v1644, 0.0
      %v1662 = vsel %vm1214, %v1646, 0.0
      %v1663 = vsel %vm1214, %v1648, 0.0
      %v1664 = vsel %vm1214, %v1650, 0.0
      %v1665 = vsel %vm1214, %v1652, 0.0
      %v1666 = vsel %vm1214, %v1654, 0.0
      %v1667 = vsel %vm1214, %v1656, 0.0
      %v1668 = vsel %vm1214, %v1658, 0.0
      %v1669 = vsel %vm1214, %v1660, 0.0
      %1670 = vrot.lane.b32.xlu0 %v1634, 2
      %v1671 = vpop.permute.xlu0 %1670
      %1672 = vrot.lane.b32.xlu0 %v1635, 2
      %v1673 = vpop.permute.xlu0 %1672
      %1674 = vrot.lane.b32.xlu0 %v1636, 2
      %v1675 = vpop.permute.xlu0 %1674
      %1676 = vrot.lane.b32.xlu0 %v1637, 2
      %v1677 = vpop.permute.xlu0 %1676
      %1678 = vrot.lane.b32.xlu0 %v1638, 2
      %v1679 = vpop.permute.xlu0 %1678
      %1680 = vrot.lane.b32.xlu0 %v1639, 2
      %v1681 = vpop.permute.xlu0 %1680
      %1682 = vrot.lane.b32.xlu0 %v1640, 2
      %v1683 = vpop.permute.xlu0 %1682
      %1684 = vrot.lane.b32.xlu0 %v1641, 2
      %v1685 = vpop.permute.xlu0 %1684
      %1686 = vrot.lane.b32.xlu0 %v1642, 2
      %v1687 = vpop.permute.xlu0 %1686
      %v1688 = vsel %vm516, %v1671, 0.0
      %v1689 = vsel %vm516, %v1673, 0.0
      %v1690 = vsel %vm516, %v1675, 0.0
      %v1691 = vsel %vm516, %v1677, 0.0
      %v1692 = vsel %vm516, %v1679, 0.0
      %v1693 = vsel %vm516, %v1681, 0.0
      %v1694 = vsel %vm516, %v1683, 0.0
      %v1695 = vsel %vm516, %v1685, 0.0
      %v1696 = vsel %vm516, %v1687, 0.0
      %1697 = vrot.lane.b32.xlu0 %v1634, 126
      %v1698 = vpop.permute.xlu0 %1697
      %1699 = vrot.lane.b32.xlu0 %v1635, 126
      %v1700 = vpop.permute.xlu0 %1699
      %1701 = vrot.lane.b32.xlu0 %v1636, 126
      %v1702 = vpop.permute.xlu0 %1701
      %1703 = vrot.lane.b32.xlu0 %v1637, 126
      %v1704 = vpop.permute.xlu0 %1703
      %1705 = vrot.lane.b32.xlu0 %v1638, 126
      %v1706 = vpop.permute.xlu0 %1705
      %1707 = vrot.lane.b32.xlu0 %v1639, 126
      %v1708 = vpop.permute.xlu0 %1707
      %1709 = vrot.lane.b32.xlu0 %v1640, 126
      %v1710 = vpop.permute.xlu0 %1709
      %1711 = vrot.lane.b32.xlu0 %v1641, 126
      %v1712 = vpop.permute.xlu0 %1711
      %1713 = vrot.lane.b32.xlu0 %v1642, 126
      %v1714 = vpop.permute.xlu0 %1713
      %v1715 = vsel %vm531, %v1698, 0.0
      %v1716 = vsel %vm531, %v1700, 0.0
      %v1717 = vsel %vm531, %v1702, 0.0
      %v1718 = vsel %vm531, %v1704, 0.0
      %v1719 = vsel %vm531, %v1706, 0.0
      %v1720 = vsel %vm531, %v1708, 0.0
      %v1721 = vsel %vm531, %v1710, 0.0
      %v1722 = vsel %vm531, %v1712, 0.0
      %v1723 = vsel %vm531, %v1714, 0.0
      %1724 = vrot.lane.b32.xlu0 %v1634, 124
      %v1725 = vpop.permute.xlu0 %1724
      %1726 = vrot.lane.b32.xlu0 %v1635, 124
      %v1727 = vpop.permute.xlu0 %1726
      %1728 = vrot.lane.b32.xlu0 %v1636, 124
      %v1729 = vpop.permute.xlu0 %1728
      %1730 = vrot.lane.b32.xlu0 %v1637, 124
      %v1731 = vpop.permute.xlu0 %1730
      %1732 = vrot.lane.b32.xlu0 %v1638, 124
      %v1733 = vpop.permute.xlu0 %1732
      %1734 = vrot.lane.b32.xlu0 %v1639, 124
      %v1735 = vpop.permute.xlu0 %1734
      %1736 = vrot.lane.b32.xlu0 %v1640, 124
      %v1737 = vpop.permute.xlu0 %1736
      %1738 = vrot.lane.b32.xlu0 %v1641, 124
      %v1739 = vpop.permute.xlu0 %1738
      %1740 = vrot.lane.b32.xlu0 %v1642, 124
      %v1741 = vpop.permute.xlu0 %1740
      %v1742 = vsel %vm1297, %v1725, 0.0
      %v1743 = vsel %vm1297, %v1727, 0.0
      %v1744 = vsel %vm1297, %v1729, 0.0
      %v1745 = vsel %vm1297, %v1731, 0.0
      %v1746 = vsel %vm1297, %v1733, 0.0
      %v1747 = vsel %vm1297, %v1735, 0.0
      %v1748 = vsel %vm1297, %v1737, 0.0
      %v1749 = vsel %vm1297, %v1739, 0.0
      %v1750 = vsel %vm1297, %v1741, 0.0
      %v1751 = vpack.c.bf16 %v1662, %v1661
      %v1752 = vpack.c.bf16 %v1664, %v1663
      %v1753 = vpack.c.bf16 %v1666, %v1665
      %v1754 = vpack.c.bf16 %v1668, %v1667
      %v1755 = vpack.c.bf16 %v1688, %v1669
      %v1756 = vpack.c.bf16 %v1690, %v1689
      %v1757 = vpack.c.bf16 %v1692, %v1691
      %v1758 = vpack.c.bf16 %v1694, %v1693
      %v1759 = vpack.c.bf16 %v1696, %v1695
      %v1760 = vpack.c.bf16 %v1635, %v1634
      %v1761 = vpack.c.bf16 %v1637, %v1636
      %v1762 = vpack.c.bf16 %v1639, %v1638
      %v1763 = vpack.c.bf16 %v1641, %v1640
      %v1764 = vpack.c.bf16 %v1715, %v1642
      %v1765 = vpack.c.bf16 %v1717, %v1716
      %v1766 = vpack.c.bf16 %v1719, %v1718
      %v1767 = vpack.c.bf16 %v1721, %v1720
      %v1768 = vpack.c.bf16 %v1723, %v1722
      %v1769 = vpack.c.bf16 %v1743, %v1742
      %v1770 = vpack.c.bf16 %v1745, %v1744
      %v1771 = vpack.c.bf16 %v1747, %v1746
      %v1772 = vpack.c.bf16 %v1749, %v1748
      %v1773 = vpack.c.bf16 %v1750, %v1750
      %v1774 = vld [vmem:[%s7] sm:$0xff]
      %v1775 = vld [vmem:[%s7 + $0x8] sm:$0xf]
      %v1776 = vld [vmem:[%s7 + $0xc] sm:$0xff]
      %v1777 = vld [vmem:[%s7 + $0x14] sm:$0xf]
      %v1778 = vld [vmem:[%s7 + $0x18] sm:$0xff]
      %v1779 = vld [vmem:[%s7 + $0x20] sm:$0xf]
      %v1780 = vld [vmem:[%s7 + $0x24] sm:$0xff]
      %v1781 = vld [vmem:[%s7 + $0x2c] sm:$0xf]
      %v1782 = vld [vmem:[%s7 + $0x30] sm:$0xff]
      %v1783 = vld [vmem:[%s7 + $0x38] sm:$0xf]
      %v1784 = vld [vmem:[%s7 + $0x3c] sm:$0xff]
      %v1785 = vld [vmem:[%s7 + $0x44] sm:$0xf]
      %v1786 = vld [vmem:[%s7 + $0x48] sm:$0xff]
      %v1787 = vld [vmem:[%s7 + $0x50] sm:$0xf]
      %v1788 = vld [vmem:[%s7 + $0x54] sm:$0xff]
      %v1789 = vld [vmem:[%s7 + $0x5c] sm:$0xf]
      %v1790 = vld [vmem:[%s7 + $0x60] sm:$0xff]
      %v1791 = vld [vmem:[%s7 + $0x68] sm:$0xf]
      %v1792 = vld [vmem:[%s8] sm:$0xff]
      %v1793 = vld [vmem:[%s8 + $0x8] sm:$0xff]
      %v1794 = vld [vmem:[%s8 + $0x10] sm:$0xff]
      %v1795 = vld [vmem:[%s8 + $0x18] sm:$0xff]
      %v1796 = vld [vmem:[%s8 + $0x20] sm:$0xff]
      %v1797 = vld [vmem:[%s8 + $0x28] sm:$0xff]
      %v1798 = vld [vmem:[%s8 + $0x30] sm:$0xff]
      %v1799 = vld [vmem:[%s8 + $0x38] sm:$0xff]
      %v1800 = vld [vmem:[%s8 + $0x40] sm:$0xff]
      %1802 = vset.pattern.permute.xlu0 0
      %1803 = vperm.xlu0 %1802, %v1792
      %v1804 = vpop.permute.xlu0 %1803
      %1807 = vset.pattern.permute.xlu0 0
      %1808 = vperm.xlu0 %1807, %v1793
      %v1809 = vpop.permute.xlu0 %1808
      %1812 = vset.pattern.permute.xlu0 0
      %1813 = vperm.xlu0 %1812, %v1794
      %v1814 = vpop.permute.xlu0 %1813
      %1817 = vset.pattern.permute.xlu0 0
      %1818 = vperm.xlu0 %1817, %v1795
      %v1819 = vpop.permute.xlu0 %1818
      %1822 = vset.pattern.permute.xlu0 0
      %1823 = vperm.xlu0 %1822, %v1796
      %v1824 = vpop.permute.xlu0 %1823
      %1827 = vset.pattern.permute.xlu0 0
      %1828 = vperm.xlu0 %1827, %v1797
      %v1829 = vpop.permute.xlu0 %1828
      %1832 = vset.pattern.permute.xlu0 0
      %1833 = vperm.xlu0 %1832, %v1798
      %v1834 = vpop.permute.xlu0 %1833
      %1837 = vset.pattern.permute.xlu0 0
      %1838 = vperm.xlu0 %1837, %v1799
      %v1839 = vpop.permute.xlu0 %1838
      %1842 = vset.pattern.permute.xlu0 0
      %1843 = vperm.xlu0 %1842, %v1800
      %v1844 = vpop.permute.xlu0 %1843
      %v1864 = vunpack.c.l.b16 %v1774
      %v1865 = vunpack.c.h.b16 %v1774
      %v1866 = vunpack.c.l.b16 %v1775
      %v1867 = vunpack.c.l.b16 %v1776
      %v1868 = vunpack.c.h.b16 %v1776
      %v1869 = vunpack.c.l.b16 %v1777
      %v1870 = vunpack.c.l.b16 %v1778
      %v1871 = vunpack.c.h.b16 %v1778
      %v1872 = vunpack.c.l.b16 %v1779
      %v1873 = vunpack.c.l.b16 %v1780
      %v1874 = vunpack.c.h.b16 %v1780
      %v1875 = vunpack.c.l.b16 %v1781
      %v1876 = vunpack.c.l.b16 %v1782
      %v1877 = vunpack.c.h.b16 %v1782
      %v1878 = vunpack.c.l.b16 %v1783
      %v1879 = vunpack.c.l.b16 %v1784
      %v1880 = vunpack.c.h.b16 %v1784
      %v1881 = vunpack.c.l.b16 %v1785
      %v1882 = vunpack.c.l.b16 %v1786
      %v1883 = vunpack.c.h.b16 %v1786
      %v1884 = vunpack.c.l.b16 %v1787
      %v1885 = vunpack.c.l.b16 %v1788
      %v1886 = vunpack.c.h.b16 %v1788
      %v1887 = vunpack.c.l.b16 %v1789
      %v1888 = vunpack.c.l.b16 %v1790
      %v1889 = vunpack.c.h.b16 %v1790
      %v1890 = vunpack.c.l.b16 %v1791
      %v1891 = vpack.c.b16 %v1867, %v1864
      %v1892 = vpack.c.b16 %v1868, %v1865
      %v1893 = vpack.c.b16 %v1869, %v1866
      %v1894 = vpack.c.b16 %v1873, %v1870
      %v1895 = vpack.c.b16 %v1874, %v1871
      %v1896 = vpack.c.b16 %v1875, %v1872
      %v1897 = vpack.c.b16 %v1879, %v1876
      %v1898 = vpack.c.b16 %v1880, %v1877
      %v1899 = vpack.c.b16 %v1881, %v1878
      %v1900 = vpack.c.b16 %v1885, %v1882
      %v1901 = vpack.c.b16 %v1886, %v1883
      %v1902 = vpack.c.b16 %v1887, %v1884
      %v1903 = vpack.c.b16 %v1888, %v1888
      %v1904 = vpack.c.b16 %v1889, %v1889
      %v1905 = vpack.c.b16 %v1890, %v1890
      %v1917 = vsel %vm996, %v1893, 0
      %v1920 = vsel %vm996, %v1896, 0
      %v1923 = vsel %vm996, %v1899, 0
      %v1926 = vsel %vm996, %v1902, 0
      %v1929 = vsel %vm996, %v1905, 0
      %v1932 = vsel %vm638, %v1773, 0
      %1934 = vmatprep.subr.bf16.mxu0 0
      %1935 = vmatpush1.bf16.msra.mxu0 %v1751
      %1936 = vmatprep.subr.bf16.mxu0 0
      %1937 = vmatpush1.bf16.msra.mxu0 %v1752
      %1938 = vmatprep.subr.bf16.mxu0 0
      %1939 = vmatpush1.bf16.msra.mxu0 %v1753
      %1940 = vmatprep.subr.bf16.mxu0 0
      %1941 = vmatpush1.bf16.msra.mxu0 %v1754
      %1942 = vmatprep.subr.bf16.mxu0 0
      %1943 = vmatpush1.bf16.msra.mxu0 %v1755
      %1944 = vmatprep.subr.bf16.mxu0 0
      %1945 = vmatpush1.bf16.msra.mxu0 %v1756
      %1946 = vmatprep.subr.bf16.mxu0 0
      %1947 = vmatpush1.bf16.msra.mxu0 %v1757
      %1948 = vmatprep.subr.bf16.mxu0 0
      %1949 = vmatpush1.bf16.msra.mxu0 %v1758
      %1950 = vmatprep.subr.bf16.mxu0 0
      %1951 = vmatpush1.bf16.msra.mxu0 %v1759
      %1952 = vmatprep.subr.bf16.mxu0 0
      %1953 = vmatpush1.bf16.msra.mxu0 %v1760
      %1954 = vmatprep.subr.bf16.mxu0 0
      %1955 = vmatpush1.bf16.msra.mxu0 %v1761
      %1956 = vmatprep.subr.bf16.mxu0 0
      %1957 = vmatpush1.bf16.msra.mxu0 %v1762
      %1958 = vmatprep.subr.bf16.mxu0 0
      %1959 = vmatpush1.bf16.msra.mxu0 %v1763
      %1960 = vmatprep.subr.bf16.mxu0 0
      %1961 = vmatpush1.bf16.msra.mxu0 %v1764
      %1962 = vmatprep.subr.bf16.mxu0 0
      %1963 = vmatpush1.bf16.msra.mxu0 %v1765
      %1964 = vmatprep.subr.bf16.mxu0 0
      %1965 = vmatpush1.bf16.msra.mxu0 %v1766
      %1966 = vmatprep.mubr.bf16.mxu0 %v1892
      %1967 = vmatmul.mubr.bf16.gmra.mrb[0].mxu0 %v1891
      %v1968 = vpop.f32.mrb[0].mxu0
      %v1969 = vadd.f32 %v1804, %v1968
      %v1970 = vpop.f32.mrb[0].mxu0
      %v1971 = vpop.f32.mrb[0].mxu0
      %v1972 = vadd.f32 %v1809, %v1971
      %v1973 = vpop.f32.mrb[0].mxu0
      %1974 = vmatprep.mubr.bf16.mxu0 %v1895
      %1975 = vmatmul.mubr.bf16.gmra.mrb[0].mxu0 %v1894
      %v1976 = vpop.f32.mrb[0].mxu0
      %v1977 = vadd.f32 %v1814, %v1976
      %v1978 = vpop.f32.mrb[0].mxu0
      %v1979 = vpop.f32.mrb[0].mxu0
      %v1980 = vadd.f32 %v1819, %v1979
      %v1981 = vpop.f32.mrb[0].mxu0
      %1982 = vmatprep.mubr.bf16.mxu0 %v1898
      %1983 = vmatmul.mubr.bf16.gmra.mrb[0].mxu0 %v1897
      %v1984 = vpop.f32.mrb[0].mxu0
      %v1985 = vadd.f32 %v1824, %v1984
      %v1986 = vpop.f32.mrb[0].mxu0
      %v1987 = vpop.f32.mrb[0].mxu0
      %v1988 = vadd.f32 %v1829, %v1987
      %v1989 = vpop.f32.mrb[0].mxu0
      %1990 = vmatprep.mubr.bf16.mxu0 %v1901
      %1991 = vmatmul.mubr.bf16.gmra.mrb[0].mxu0 %v1900
      %v1992 = vpop.f32.mrb[0].mxu0
      %v1993 = vadd.f32 %v1834, %v1992
      %v1994 = vpop.f32.mrb[0].mxu0
      %v1995 = vpop.f32.mrb[0].mxu0
      %v1996 = vadd.f32 %v1839, %v1995
      %v1997 = vpop.f32.mrb[0].mxu0
      %1998 = vmatprep.mubr.bf16.mxu0 %v1904
      %1999 = vmatmul.mubr.bf16.gmra.mrb[0].mxu0 %v1903
      %v2000 = vpop.f32.mrb[0].mxu0
      %v2001 = vadd.f32 %v1844, %v2000
      %v2002 = vpop.f32.mrb[0].mxu0
      %v2003 = vpop.f32.mrb[0].mxu0
      %v2004 = vpop.f32.mrb[0].mxu0
      %2005 = vdwg.mxu0
      %2006 = vmatprep.subr.bf16.mxu0 0
      %2007 = vmatpush1.bf16.msra.mxu0 %v1767
      %2008 = vmatprep.subr.bf16.mxu0 0
      %2009 = vmatpush1.bf16.msra.mxu0 %v1768
      %2010 = vmatprep.subr.bf16.mxu0 0
      %2011 = vmatpush1.bf16.msra.mxu0 %v1769
      %2012 = vmatprep.subr.bf16.mxu0 0
      %2013 = vmatpush1.bf16.msra.mxu0 %v1770
      %2014 = vmatprep.subr.bf16.mxu0 0
      %2015 = vmatpush1.bf16.msra.mxu0 %v1771
      %2016 = vmatprep.subr.bf16.mxu0 0
      %2017 = vmatpush1.bf16.msra.mxu0 %v1772
      %2018 = vmatprep.subr.bf16.mxu0 0
      %2019 = vmatpush1.bf16.msra.mxu0 %v1932
      %2020 = vmatprep.subr.bf16.mxu0 0
      %2021 = vmatpush1.bf16.msra.mxu0 0
      %2022 = vmatprep.subr.bf16.mxu0 0
      %2023 = vmatpush1.bf16.msra.mxu0 0
      %2024 = vmatprep.subr.bf16.mxu0 0
      %2025 = vmatpush1.bf16.msra.mxu0 0
      %2026 = vmatprep.subr.bf16.mxu0 0
      %2027 = vmatpush1.bf16.msra.mxu0 0
      %2028 = vmatprep.subr.bf16.mxu0 0
      %2029 = vmatpush1.bf16.msra.mxu0 0
      %2030 = vmatprep.subr.bf16.mxu0 0
      %2031 = vmatpush1.bf16.msra.mxu0 0
      %2032 = vmatprep.subr.bf16.mxu0 0
      %2033 = vmatpush1.bf16.msra.mxu0 0
      %2034 = vmatprep.subr.bf16.mxu0 0
      %2035 = vmatpush1.bf16.msra.mxu0 0
      %2036 = vmatprep.subr.bf16.mxu0 0
      %2037 = vmatpush1.bf16.msra.mxu0 0
      %2038 = vmatprep.mubr.bf16.mxu0 0
      %2039 = vmatmul.mubr.bf16.gmra.mrb[0].mxu0 %v1917
      %v2040 = vpop.f32.mrb[0].mxu0
      %v2041 = vadd.f32 %v1969, %v2040
      %v2042 = vpop.f32.mrb[0].mxu0
      %v2043 = vpop.f32.mrb[0].mxu0
      %v2044 = vadd.f32 %v1972, %v2043
      %v2045 = vpop.f32.mrb[0].mxu0
      %2046 = vmatprep.mubr.bf16.mxu0 0
      %2047 = vmatmul.mubr.bf16.gmra.mrb[0].mxu0 %v1920
      %v2048 = vpop.f32.mrb[0].mxu0
      %v2049 = vadd.f32 %v1977, %v2048
      %v2050 = vpop.f32.mrb[0].mxu0
      %v2051 = vpop.f32.mrb[0].mxu0
      %v2052 = vadd.f32 %v1980, %v2051
      %v2053 = vpop.f32.mrb[0].mxu0
      %2054 = vmatprep.mubr.bf16.mxu0 0
      %2055 = vmatmul.mubr.bf16.gmra.mrb[0].mxu0 %v1923
      %v2056 = vpop.f32.mrb[0].mxu0
      %v2057 = vadd.f32 %v1985, %v2056
      %v2058 = vpop.f32.mrb[0].mxu0
      %v2059 = vpop.f32.mrb[0].mxu0
      %v2060 = vadd.f32 %v1988, %v2059
      %v2061 = vpop.f32.mrb[0].mxu0
      %2062 = vmatprep.mubr.bf16.mxu0 0
      %2063 = vmatmul.mubr.bf16.gmra.mrb[0].mxu0 %v1926
      %v2064 = vpop.f32.mrb[0].mxu0
      %v2065 = vadd.f32 %v1993, %v2064
      %v2066 = vpop.f32.mrb[0].mxu0
      %v2067 = vpop.f32.mrb[0].mxu0
      %v2068 = vadd.f32 %v1996, %v2067
      %v2069 = vpop.f32.mrb[0].mxu0
      %2070 = vmatprep.mubr.bf16.mxu0 0
      %2071 = vmatmul.mubr.bf16.gmra.mrb[0].mxu0 %v1929
      %v2072 = vpop.f32.mrb[0].mxu0
      %v2073 = vadd.f32 %v2001, %v2072
      %v2074 = vpop.f32.mrb[0].mxu0
      %v2075 = vpop.f32.mrb[0].mxu0
      %v2076 = vpop.f32.mrb[0].mxu0
      %2077 = vdwg.mxu0
      %v2078 = vmax.f32 %v2041, 0.0
      %v2079 = vmax.f32 %v2044, 0.0
      %v2080 = vmax.f32 %v2049, 0.0
      %v2081 = vmax.f32 %v2052, 0.0
      %v2082 = vmax.f32 %v2057, 0.0
      %v2083 = vmax.f32 %v2060, 0.0
      %v2084 = vmax.f32 %v2065, 0.0
      %v2085 = vmax.f32 %v2068, 0.0
      %v2086 = vmax.f32 %v2073, 0.0
      %2087 = vrot.lane.b32.xlu0 %v2078, 126
      %v2088 = vpop.permute.xlu0 %2087
      %2089 = vrot.lane.b32.xlu0 %v2079, 126
      %v2090 = vpop.permute.xlu0 %2089
      %2091 = vrot.lane.b32.xlu0 %v2080, 126
      %v2092 = vpop.permute.xlu0 %2091
      %2093 = vrot.lane.b32.xlu0 %v2081, 126
      %v2094 = vpop.permute.xlu0 %2093
      %2095 = vrot.lane.b32.xlu0 %v2082, 126
      %v2096 = vpop.permute.xlu0 %2095
      %2097 = vrot.lane.b32.xlu0 %v2083, 126
      %v2098 = vpop.permute.xlu0 %2097
      %2099 = vrot.lane.b32.xlu0 %v2084, 126
      %v2100 = vpop.permute.xlu0 %2099
      %2101 = vrot.lane.b32.xlu0 %v2085, 126
      %v2102 = vpop.permute.xlu0 %2101
      %2103 = vrot.lane.b32.xlu0 %v2086, 126
      %v2104 = vpop.permute.xlu0 %2103
      %v2105 = vmax.f32 %v2078, %v2088
      %v2106 = vmax.f32 %v2079, %v2090
      %v2107 = vmax.f32 %v2080, %v2092
      %v2108 = vmax.f32 %v2081, %v2094
      %v2109 = vmax.f32 %v2082, %v2096
      %v2110 = vmax.f32 %v2083, %v2098
      %v2111 = vmax.f32 %v2084, %v2100
      %v2112 = vmax.f32 %v2085, %v2102
      %v2113 = vmax.f32 %v2086, %v2104
      %2114 = vrot.lane.b32.xlu0 %v2105, 8
      %v2115 = vpop.permute.xlu0 %2114
      %2116 = vrot.lane.b32.xlu0 %v2106, 8
      %v2117 = vpop.permute.xlu0 %2116
      %2118 = vrot.lane.b32.xlu0 %v2107, 8
      %v2119 = vpop.permute.xlu0 %2118
      %2120 = vrot.lane.b32.xlu0 %v2108, 8
      %v2121 = vpop.permute.xlu0 %2120
      %2122 = vrot.lane.b32.xlu0 %v2109, 8
      %v2123 = vpop.permute.xlu0 %2122
      %2124 = vrot.lane.b32.xlu0 %v2110, 8
      %v2125 = vpop.permute.xlu0 %2124
      %2126 = vrot.lane.b32.xlu0 %v2111, 8
      %v2127 = vpop.permute.xlu0 %2126
      %2128 = vrot.lane.b32.xlu0 %v2112, 8
      %v2129 = vpop.permute.xlu0 %2128
      %2130 = vrot.lane.b32.xlu0 %v2113, 8
      %v2131 = vpop.permute.xlu0 %2130
      %v2132 = vsel %vm483, 1, 0
      %vm2133 = vcmp.eq.s32.totalorder %v2132, 1
      %v2134 = vsel %vm2133, %v2115, 0.0
      %v2135 = vsel %vm2133, %v2117, 0.0
      %v2136 = vsel %vm2133, %v2119, 0.0
      %v2137 = vsel %vm2133, %v2121, 0.0
      %v2138 = vsel %vm2133, %v2123, 0.0
      %v2139 = vsel %vm2133, %v2125, 0.0
      %v2140 = vsel %vm2133, %v2127, 0.0
      %v2141 = vsel %vm2133, %v2129, 0.0
      %v2142 = vsel %vm2133, %v2131, 0.0
      %2143 = vrot.lane.b32.xlu0 %v2105, 4
      %v2144 = vpop.permute.xlu0 %2143
      %2145 = vrot.lane.b32.xlu0 %v2106, 4
      %v2146 = vpop.permute.xlu0 %2145
      %2147 = vrot.lane.b32.xlu0 %v2107, 4
      %v2148 = vpop.permute.xlu0 %2147
      %2149 = vrot.lane.b32.xlu0 %v2108, 4
      %v2150 = vpop.permute.xlu0 %2149
      %2151 = vrot.lane.b32.xlu0 %v2109, 4
      %v2152 = vpop.permute.xlu0 %2151
      %2153 = vrot.lane.b32.xlu0 %v2110, 4
      %v2154 = vpop.permute.xlu0 %2153
      %2155 = vrot.lane.b32.xlu0 %v2111, 4
      %v2156 = vpop.permute.xlu0 %2155
      %2157 = vrot.lane.b32.xlu0 %v2112, 4
      %v2158 = vpop.permute.xlu0 %2157
      %2159 = vrot.lane.b32.xlu0 %v2113, 4
      %v2160 = vpop.permute.xlu0 %2159
      %v2161 = vsel %vm1214, %v2144, 0.0
      %v2162 = vsel %vm1214, %v2146, 0.0
      %v2163 = vsel %vm1214, %v2148, 0.0
      %v2164 = vsel %vm1214, %v2150, 0.0
      %v2165 = vsel %vm1214, %v2152, 0.0
      %v2166 = vsel %vm1214, %v2154, 0.0
      %v2167 = vsel %vm1214, %v2156, 0.0
      %v2168 = vsel %vm1214, %v2158, 0.0
      %v2169 = vsel %vm1214, %v2160, 0.0
      %2170 = vrot.lane.b32.xlu0 %v2105, 124
      %v2171 = vpop.permute.xlu0 %2170
      %2172 = vrot.lane.b32.xlu0 %v2106, 124
      %v2173 = vpop.permute.xlu0 %2172
      %2174 = vrot.lane.b32.xlu0 %v2107, 124
      %v2175 = vpop.permute.xlu0 %2174
      %2176 = vrot.lane.b32.xlu0 %v2108, 124
      %v2177 = vpop.permute.xlu0 %2176
      %2178 = vrot.lane.b32.xlu0 %v2109, 124
      %v2179 = vpop.permute.xlu0 %2178
      %2180 = vrot.lane.b32.xlu0 %v2110, 124
      %v2181 = vpop.permute.xlu0 %2180
      %2182 = vrot.lane.b32.xlu0 %v2111, 124
      %v2183 = vpop.permute.xlu0 %2182
      %2184 = vrot.lane.b32.xlu0 %v2112, 124
      %v2185 = vpop.permute.xlu0 %2184
      %2186 = vrot.lane.b32.xlu0 %v2113, 124
      %v2187 = vpop.permute.xlu0 %2186
      %v2188 = vsel %vm1297, %v2171, 0.0
      %v2189 = vsel %vm1297, %v2173, 0.0
      %v2190 = vsel %vm1297, %v2175, 0.0
      %v2191 = vsel %vm1297, %v2177, 0.0
      %v2192 = vsel %vm1297, %v2179, 0.0
      %v2193 = vsel %vm1297, %v2181, 0.0
      %v2194 = vsel %vm1297, %v2183, 0.0
      %v2195 = vsel %vm1297, %v2185, 0.0
      %v2196 = vsel %vm1297, %v2187, 0.0
      %2197 = vrot.lane.b32.xlu0 %v2105, 120
      %v2198 = vpop.permute.xlu0 %2197
      %2199 = vrot.lane.b32.xlu0 %v2106, 120
      %v2200 = vpop.permute.xlu0 %2199
      %2201 = vrot.lane.b32.xlu0 %v2107, 120
      %v2202 = vpop.permute.xlu0 %2201
      %2203 = vrot.lane.b32.xlu0 %v2108, 120
      %v2204 = vpop.permute.xlu0 %2203
      %2205 = vrot.lane.b32.xlu0 %v2109, 120
      %v2206 = vpop.permute.xlu0 %2205
      %2207 = vrot.lane.b32.xlu0 %v2110, 120
      %v2208 = vpop.permute.xlu0 %2207
      %2209 = vrot.lane.b32.xlu0 %v2111, 120
      %v2210 = vpop.permute.xlu0 %2209
      %2211 = vrot.lane.b32.xlu0 %v2112, 120
      %v2212 = vpop.permute.xlu0 %2211
      %2213 = vrot.lane.b32.xlu0 %v2113, 120
      %v2214 = vpop.permute.xlu0 %2213
      %v2215 = vsel %vm511, 1, 0
      %vm2216 = vcmp.eq.s32.totalorder %v2215, 1
      %v2217 = vsel %vm2216, %v2198, 0.0
      %v2218 = vsel %vm2216, %v2200, 0.0
      %v2219 = vsel %vm2216, %v2202, 0.0
      %v2220 = vsel %vm2216, %v2204, 0.0
      %v2221 = vsel %vm2216, %v2206, 0.0
      %v2222 = vsel %vm2216, %v2208, 0.0
      %v2223 = vsel %vm2216, %v2210, 0.0
      %v2224 = vsel %vm2216, %v2212, 0.0
      %v2225 = vsel %vm2216, %v2214, 0.0
      %v2226 = vpack.c.bf16 %v2135, %v2134
      %v2227 = vpack.c.bf16 %v2137, %v2136
      %v2228 = vpack.c.bf16 %v2139, %v2138
      %v2229 = vpack.c.bf16 %v2141, %v2140
      %v2230 = vpack.c.bf16 %v2161, %v2142
      %v2231 = vpack.c.bf16 %v2163, %v2162
      %v2232 = vpack.c.bf16 %v2165, %v2164
      %v2233 = vpack.c.bf16 %v2167, %v2166
      %v2234 = vpack.c.bf16 %v2169, %v2168
      %v2235 = vpack.c.bf16 %v2106, %v2105
      %v2236 = vpack.c.bf16 %v2108, %v2107
      %v2237 = vpack.c.bf16 %v2110, %v2109
      %v2238 = vpack.c.bf16 %v2112, %v2111
      %v2239 = vpack.c.bf16 %v2188, %v2113
      %v2240 = vpack.c.bf16 %v2190, %v2189
      %v2241 = vpack.c.bf16 %v2192, %v2191
      %v2242 = vpack.c.bf16 %v2194, %v2193
      %v2243 = vpack.c.bf16 %v2196, %v2195
      %v2244 = vpack.c.bf16 %v2218, %v2217
      %v2245 = vpack.c.bf16 %v2220, %v2219
      %v2246 = vpack.c.bf16 %v2222, %v2221
      %v2247 = vpack.c.bf16 %v2224, %v2223
      %v2248 = vpack.c.bf16 %v2225, %v2225
      %v2249 = vld [vmem:[%s9] sm:$0xff]
      %v2250 = vld [vmem:[%s9 + $0x8] sm:$0xf]
      %v2251 = vld [vmem:[%s9 + $0xc] sm:$0xff]
      %v2252 = vld [vmem:[%s9 + $0x14] sm:$0xf]
      %v2253 = vld [vmem:[%s9 + $0x18] sm:$0xff]
      %v2254 = vld [vmem:[%s9 + $0x20] sm:$0xf]
      %v2255 = vld [vmem:[%s9 + $0x24] sm:$0xff]
      %v2256 = vld [vmem:[%s9 + $0x2c] sm:$0xf]
      %v2257 = vld [vmem:[%s9 + $0x30] sm:$0xff]
      %v2258 = vld [vmem:[%s9 + $0x38] sm:$0xf]
      %v2259 = vld [vmem:[%s9 + $0x3c] sm:$0xff]
      %v2260 = vld [vmem:[%s9 + $0x44] sm:$0xf]
      %v2261 = vld [vmem:[%s9 + $0x48] sm:$0xff]
      %v2262 = vld [vmem:[%s9 + $0x50] sm:$0xf]
      %v2263 = vld [vmem:[%s9 + $0x54] sm:$0xff]
      %v2264 = vld [vmem:[%s9 + $0x5c] sm:$0xf]
      %v2265 = vld [vmem:[%s9 + $0x60] sm:$0xff]
      %v2266 = vld [vmem:[%s9 + $0x68] sm:$0xf]
      %v2267 = vld [vmem:[%s10] sm:$0xff]
      %v2268 = vld [vmem:[%s10 + $0x8] sm:$0xff]
      %v2269 = vld [vmem:[%s10 + $0x10] sm:$0xff]
      %v2270 = vld [vmem:[%s10 + $0x18] sm:$0xff]
      %v2271 = vld [vmem:[%s10 + $0x20] sm:$0xff]
      %v2272 = vld [vmem:[%s10 + $0x28] sm:$0xff]
      %v2273 = vld [vmem:[%s10 + $0x30] sm:$0xff]
      %v2274 = vld [vmem:[%s10 + $0x38] sm:$0xff]
      %v2275 = vld [vmem:[%s10 + $0x40] sm:$0xff]
      %2277 = vset.pattern.permute.xlu0 0
      %2278 = vperm.xlu0 %2277, %v2267
      %v2279 = vpop.permute.xlu0 %2278
      %2282 = vset.pattern.permute.xlu0 0
      %2283 = vperm.xlu0 %2282, %v2268
      %v2284 = vpop.permute.xlu0 %2283
      %2287 = vset.pattern.permute.xlu0 0
      %2288 = vperm.xlu0 %2287, %v2269
      %v2289 = vpop.permute.xlu0 %2288
      %2292 = vset.pattern.permute.xlu0 0
      %2293 = vperm.xlu0 %2292, %v2270
      %v2294 = vpop.permute.xlu0 %2293
      %2297 = vset.pattern.permute.xlu0 0
      %2298 = vperm.xlu0 %2297, %v2271
      %v2299 = vpop.permute.xlu0 %2298
      %2302 = vset.pattern.permute.xlu0 0
      %2303 = vperm.xlu0 %2302, %v2272
      %v2304 = vpop.permute.xlu0 %2303
      %2307 = vset.pattern.permute.xlu0 0
      %2308 = vperm.xlu0 %2307, %v2273
      %v2309 = vpop.permute.xlu0 %2308
      %2312 = vset.pattern.permute.xlu0 0
      %2313 = vperm.xlu0 %2312, %v2274
      %v2314 = vpop.permute.xlu0 %2313
      %2317 = vset.pattern.permute.xlu0 0
      %2318 = vperm.xlu0 %2317, %v2275
      %v2319 = vpop.permute.xlu0 %2318
      %v2339 = vunpack.c.l.b16 %v2249
      %v2340 = vunpack.c.h.b16 %v2249
      %v2341 = vunpack.c.l.b16 %v2250
      %v2342 = vunpack.c.l.b16 %v2251
      %v2343 = vunpack.c.h.b16 %v2251
      %v2344 = vunpack.c.l.b16 %v2252
      %v2345 = vunpack.c.l.b16 %v2253
      %v2346 = vunpack.c.h.b16 %v2253
      %v2347 = vunpack.c.l.b16 %v2254
      %v2348 = vunpack.c.l.b16 %v2255
      %v2349 = vunpack.c.h.b16 %v2255
      %v2350 = vunpack.c.l.b16 %v2256
      %v2351 = vunpack.c.l.b16 %v2257
      %v2352 = vunpack.c.h.b16 %v2257
      %v2353 = vunpack.c.l.b16 %v2258
      %v2354 = vunpack.c.l.b16 %v2259
      %v2355 = vunpack.c.h.b16 %v2259
      %v2356 = vunpack.c.l.b16 %v2260
      %v2357 = vunpack.c.l.b16 %v2261
      %v2358 = vunpack.c.h.b16 %v2261
      %v2359 = vunpack.c.l.b16 %v2262
      %v2360 = vunpack.c.l.b16 %v2263
      %v2361 = vunpack.c.h.b16 %v2263
      %v2362 = vunpack.c.l.b16 %v2264
      %v2363 = vunpack.c.l.b16 %v2265
      %v2364 = vunpack.c.h.b16 %v2265
      %v2365 = vunpack.c.l.b16 %v2266
      %v2366 = vpack.c.b16 %v2342, %v2339
      %v2367 = vpack.c.b16 %v2343, %v2340
      %v2368 = vpack.c.b16 %v2344, %v2341
      %v2369 = vpack.c.b16 %v2348, %v2345
      %v2370 = vpack.c.b16 %v2349, %v2346
      %v2371 = vpack.c.b16 %v2350, %v2347
      %v2372 = vpack.c.b16 %v2354, %v2351
      %v2373 = vpack.c.b16 %v2355, %v2352
      %v2374 = vpack.c.b16 %v2356, %v2353
      %v2375 = vpack.c.b16 %v2360, %v2357
      %v2376 = vpack.c.b16 %v2361, %v2358
      %v2377 = vpack.c.b16 %v2362, %v2359
      %v2378 = vpack.c.b16 %v2363, %v2363
      %v2379 = vpack.c.b16 %v2364, %v2364
      %v2380 = vpack.c.b16 %v2365, %v2365
      %v2392 = vsel %vm996, %v2368, 0
      %v2395 = vsel %vm996, %v2371, 0
      %v2398 = vsel %vm996, %v2374, 0
      %v2401 = vsel %vm996, %v2377, 0
      %v2404 = vsel %vm996, %v2380, 0
      %v2407 = vsel %vm638, %v2248, 0
      %2409 = vmatprep.subr.bf16.mxu0 0
      %2410 = vmatpush1.bf16.msra.mxu0 %v2226
      %2411 = vmatprep.subr.bf16.mxu0 0
      %2412 = vmatpush1.bf16.msra.mxu0 %v2227
      %2413 = vmatprep.subr.bf16.mxu0 0
      %2414 = vmatpush1.bf16.msra.mxu0 %v2228
      %2415 = vmatprep.subr.bf16.mxu0 0
      %2416 = vmatpush1.bf16.msra.mxu0 %v2229
      %2417 = vmatprep.subr.bf16.mxu0 0
      %2418 = vmatpush1.bf16.msra.mxu0 %v2230
      %2419 = vmatprep.subr.bf16.mxu0 0
      %2420 = vmatpush1.bf16.msra.mxu0 %v2231
      %2421 = vmatprep.subr.bf16.mxu0 0
      %2422 = vmatpush1.bf16.msra.mxu0 %v2232
      %2423 = vmatprep.subr.bf16.mxu0 0
      %2424 = vmatpush1.bf16.msra.mxu0 %v2233
      %2425 = vmatprep.subr.bf16.mxu0 0
      %2426 = vmatpush1.bf16.msra.mxu0 %v2234
      %2427 = vmatprep.subr.bf16.mxu0 0
      %2428 = vmatpush1.bf16.msra.mxu0 %v2235
      %2429 = vmatprep.subr.bf16.mxu0 0
      %2430 = vmatpush1.bf16.msra.mxu0 %v2236
      %2431 = vmatprep.subr.bf16.mxu0 0
      %2432 = vmatpush1.bf16.msra.mxu0 %v2237
      %2433 = vmatprep.subr.bf16.mxu0 0
      %2434 = vmatpush1.bf16.msra.mxu0 %v2238
      %2435 = vmatprep.subr.bf16.mxu0 0
      %2436 = vmatpush1.bf16.msra.mxu0 %v2239
      %2437 = vmatprep.subr.bf16.mxu0 0
      %2438 = vmatpush1.bf16.msra.mxu0 %v2240
      %2439 = vmatprep.subr.bf16.mxu0 0
      %2440 = vmatpush1.bf16.msra.mxu0 %v2241
      %2441 = vmatprep.mubr.bf16.mxu0 %v2367
      %2442 = vmatmul.mubr.bf16.gmra.mrb[0].mxu0 %v2366
      %v2443 = vpop.f32.mrb[0].mxu0
      %v2444 = vadd.f32 %v2279, %v2443
      %v2445 = vpop.f32.mrb[0].mxu0
      %v2446 = vpop.f32.mrb[0].mxu0
      %v2447 = vadd.f32 %v2284, %v2446
      %v2448 = vpop.f32.mrb[0].mxu0
      %2449 = vmatprep.mubr.bf16.mxu0 %v2370
      %2450 = vmatmul.mubr.bf16.gmra.mrb[0].mxu0 %v2369
      %v2451 = vpop.f32.mrb[0].mxu0
      %v2452 = vadd.f32 %v2289, %v2451
      %v2453 = vpop.f32.mrb[0].mxu0
      %v2454 = vpop.f32.mrb[0].mxu0
      %v2455 = vadd.f32 %v2294, %v2454
      %v2456 = vpop.f32.mrb[0].mxu0
      %2457 = vmatprep.mubr.bf16.mxu0 %v2373
      %2458 = vmatmul.mubr.bf16.gmra.mrb[0].mxu0 %v2372
      %v2459 = vpop.f32.mrb[0].mxu0
      %v2460 = vadd.f32 %v2299, %v2459
      %v2461 = vpop.f32.mrb[0].mxu0
      %v2462 = vpop.f32.mrb[0].mxu0
      %v2463 = vadd.f32 %v2304, %v2462
      %v2464 = vpop.f32.mrb[0].mxu0
      %2465 = vmatprep.mubr.bf16.mxu0 %v2376
      %2466 = vmatmul.mubr.bf16.gmra.mrb[0].mxu0 %v2375
      %v2467 = vpop.f32.mrb[0].mxu0
      %v2468 = vadd.f32 %v2309, %v2467
      %v2469 = vpop.f32.mrb[0].mxu0
      %v2470 = vpop.f32.mrb[0].mxu0
      %v2471 = vadd.f32 %v2314, %v2470
      %v2472 = vpop.f32.mrb[0].mxu0
      %2473 = vmatprep.mubr.bf16.mxu0 %v2379
      %2474 = vmatmul.mubr.bf16.gmra.mrb[0].mxu0 %v2378
      %v2475 = vpop.f32.mrb[0].mxu0
      %v2476 = vadd.f32 %v2319, %v2475
      %v2477 = vpop.f32.mrb[0].mxu0
      %v2478 = vpop.f32.mrb[0].mxu0
      %v2479 = vpop.f32.mrb[0].mxu0
      %2480 = vdwg.mxu0
      %2481 = vmatprep.subr.bf16.mxu0 0
      %2482 = vmatpush1.bf16.msra.mxu0 %v2242
      %2483 = vmatprep.subr.bf16.mxu0 0
      %2484 = vmatpush1.bf16.msra.mxu0 %v2243
      %2485 = vmatprep.subr.bf16.mxu0 0
      %2486 = vmatpush1.bf16.msra.mxu0 %v2244
      %2487 = vmatprep.subr.bf16.mxu0 0
      %2488 = vmatpush1.bf16.msra.mxu0 %v2245
      %2489 = vmatprep.subr.bf16.mxu0 0
      %2490 = vmatpush1.bf16.msra.mxu0 %v2246
      %2491 = vmatprep.subr.bf16.mxu0 0
      %2492 = vmatpush1.bf16.msra.mxu0 %v2247
      %2493 = vmatprep.subr.bf16.mxu0 0
      %2494 = vmatpush1.bf16.msra.mxu0 %v2407
      %2495 = vmatprep.subr.bf16.mxu0 0
      %2496 = vmatpush1.bf16.msra.mxu0 0
      %2497 = vmatprep.subr.bf16.mxu0 0
      %2498 = vmatpush1.bf16.msra.mxu0 0
      %2499 = vmatprep.subr.bf16.mxu0 0
      %2500 = vmatpush1.bf16.msra.mxu0 0
      %2501 = vmatprep.subr.bf16.mxu0 0
      %2502 = vmatpush1.bf16.msra.mxu0 0
      %2503 = vmatprep.subr.bf16.mxu0 0
      %2504 = vmatpush1.bf16.msra.mxu0 0
      %2505 = vmatprep.subr.bf16.mxu0 0
      %2506 = vmatpush1.bf16.msra.mxu0 0
      %2507 = vmatprep.subr.bf16.mxu0 0
      %2508 = vmatpush1.bf16.msra.mxu0 0
      %2509 = vmatprep.subr.bf16.mxu0 0
      %2510 = vmatpush1.bf16.msra.mxu0 0
      %2511 = vmatprep.subr.bf16.mxu0 0
      %2512 = vmatpush1.bf16.msra.mxu0 0
      %2513 = vmatprep.mubr.bf16.mxu0 0
      %2514 = vmatmul.mubr.bf16.gmra.mrb[0].mxu0 %v2392
      %v2515 = vpop.f32.mrb[0].mxu0
      %v2516 = vadd.f32 %v2444, %v2515
      %v2517 = vpop.f32.mrb[0].mxu0
      %v2518 = vpop.f32.mrb[0].mxu0
      %v2519 = vadd.f32 %v2447, %v2518
      %v2520 = vpop.f32.mrb[0].mxu0
      %2521 = vmatprep.mubr.bf16.mxu0 0
      %2522 = vmatmul.mubr.bf16.gmra.mrb[0].mxu0 %v2395
      %v2523 = vpop.f32.mrb[0].mxu0
      %v2524 = vadd.f32 %v2452, %v2523
      %v2525 = vpop.f32.mrb[0].mxu0
      %v2526 = vpop.f32.mrb[0].mxu0
      %v2527 = vadd.f32 %v2455, %v2526
      %v2528 = vpop.f32.mrb[0].mxu0
      %2529 = vmatprep.mubr.bf16.mxu0 0
      %2530 = vmatmul.mubr.bf16.gmra.mrb[0].mxu0 %v2398
      %v2531 = vpop.f32.mrb[0].mxu0
      %v2532 = vadd.f32 %v2460, %v2531
      %v2533 = vpop.f32.mrb[0].mxu0
      %v2534 = vpop.f32.mrb[0].mxu0
      %v2535 = vadd.f32 %v2463, %v2534
      %v2536 = vpop.f32.mrb[0].mxu0
      %2537 = vmatprep.mubr.bf16.mxu0 0
      %2538 = vmatmul.mubr.bf16.gmra.mrb[0].mxu0 %v2401
      %v2539 = vpop.f32.mrb[0].mxu0
      %v2540 = vadd.f32 %v2468, %v2539
      %v2541 = vpop.f32.mrb[0].mxu0
      %v2542 = vpop.f32.mrb[0].mxu0
      %v2543 = vadd.f32 %v2471, %v2542
      %v2544 = vpop.f32.mrb[0].mxu0
      %2545 = vmatprep.mubr.bf16.mxu0 0
      %2546 = vmatmul.mubr.bf16.gmra.mrb[0].mxu0 %v2404
      %v2547 = vpop.f32.mrb[0].mxu0
      %v2548 = vadd.f32 %v2476, %v2547
      %v2549 = vpop.f32.mrb[0].mxu0
      %v2550 = vpop.f32.mrb[0].mxu0
      %v2551 = vpop.f32.mrb[0].mxu0
      %2552 = vdwg.mxu0
      %v2553 = vmax.f32 %v2516, 0.0
      %v2554 = vmax.f32 %v2519, 0.0
      %v2555 = vmax.f32 %v2524, 0.0
      %v2556 = vmax.f32 %v2527, 0.0
      %v2557 = vmax.f32 %v2532, 0.0
      %v2558 = vmax.f32 %v2535, 0.0
      %v2559 = vmax.f32 %v2540, 0.0
      %v2560 = vmax.f32 %v2543, 0.0
      %v2561 = vmax.f32 %v2548, 0.0
      %2562 = vrot.lane.b32.xlu0 %v2553, 8
      %v2563 = vpop.permute.xlu0 %2562
      %2564 = vrot.lane.b32.xlu0 %v2554, 8
      %v2565 = vpop.permute.xlu0 %2564
      %2566 = vrot.lane.b32.xlu0 %v2555, 8
      %v2567 = vpop.permute.xlu0 %2566
      %2568 = vrot.lane.b32.xlu0 %v2556, 8
      %v2569 = vpop.permute.xlu0 %2568
      %2570 = vrot.lane.b32.xlu0 %v2557, 8
      %v2571 = vpop.permute.xlu0 %2570
      %2572 = vrot.lane.b32.xlu0 %v2558, 8
      %v2573 = vpop.permute.xlu0 %2572
      %2574 = vrot.lane.b32.xlu0 %v2559, 8
      %v2575 = vpop.permute.xlu0 %2574
      %2576 = vrot.lane.b32.xlu0 %v2560, 8
      %v2577 = vpop.permute.xlu0 %2576
      %2578 = vrot.lane.b32.xlu0 %v2561, 8
      %v2579 = vpop.permute.xlu0 %2578
      %v2580 = vsel %vm2133, %v2563, 0.0
      %v2581 = vsel %vm2133, %v2565, 0.0
      %v2582 = vsel %vm2133, %v2567, 0.0
      %v2583 = vsel %vm2133, %v2569, 0.0
      %v2584 = vsel %vm2133, %v2571, 0.0
      %v2585 = vsel %vm2133, %v2573, 0.0
      %v2586 = vsel %vm2133, %v2575, 0.0
      %v2587 = vsel %vm2133, %v2577, 0.0
      %v2588 = vsel %vm2133, %v2579, 0.0
      %2589 = vrot.lane.b32.xlu0 %v2553, 4
      %v2590 = vpop.permute.xlu0 %2589
      %2591 = vrot.lane.b32.xlu0 %v2554, 4
      %v2592 = vpop.permute.xlu0 %2591
      %2593 = vrot.lane.b32.xlu0 %v2555, 4
      %v2594 = vpop.permute.xlu0 %2593
      %2595 = vrot.lane.b32.xlu0 %v2556, 4
      %v2596 = vpop.permute.xlu0 %2595
      %2597 = vrot.lane.b32.xlu0 %v2557, 4
      %v2598 = vpop.permute.xlu0 %2597
      %2599 = vrot.lane.b32.xlu0 %v2558, 4
      %v2600 = vpop.permute.xlu0 %2599
      %2601 = vrot.lane.b32.xlu0 %v2559, 4
      %v2602 = vpop.permute.xlu0 %2601
      %2603 = vrot.lane.b32.xlu0 %v2560, 4
      %v2604 = vpop.permute.xlu0 %2603
      %2605 = vrot.lane.b32.xlu0 %v2561, 4
      %v2606 = vpop.permute.xlu0 %2605
      %v2607 = vsel %vm1214, %v2590, 0.0
      %v2608 = vsel %vm1214, %v2592, 0.0
      %v2609 = vsel %vm1214, %v2594, 0.0
      %v2610 = vsel %vm1214, %v2596, 0.0
      %v2611 = vsel %vm1214, %v2598, 0.0
      %v2612 = vsel %vm1214, %v2600, 0.0
      %v2613 = vsel %vm1214, %v2602, 0.0
      %v2614 = vsel %vm1214, %v2604, 0.0
      %v2615 = vsel %vm1214, %v2606, 0.0
      %2616 = vrot.lane.b32.xlu0 %v2553, 124
      %v2617 = vpop.permute.xlu0 %2616
      %2618 = vrot.lane.b32.xlu0 %v2554, 124
      %v2619 = vpop.permute.xlu0 %2618
      %2620 = vrot.lane.b32.xlu0 %v2555, 124
      %v2621 = vpop.permute.xlu0 %2620
      %2622 = vrot.lane.b32.xlu0 %v2556, 124
      %v2623 = vpop.permute.xlu0 %2622
      %2624 = vrot.lane.b32.xlu0 %v2557, 124
      %v2625 = vpop.permute.xlu0 %2624
      %2626 = vrot.lane.b32.xlu0 %v2558, 124
      %v2627 = vpop.permute.xlu0 %2626
      %2628 = vrot.lane.b32.xlu0 %v2559, 124
      %v2629 = vpop.permute.xlu0 %2628
      %2630 = vrot.lane.b32.xlu0 %v2560, 124
      %v2631 = vpop.permute.xlu0 %2630
      %2632 = vrot.lane.b32.xlu0 %v2561, 124
      %v2633 = vpop.permute.xlu0 %2632
      %v2634 = vsel %vm1297, %v2617, 0.0
      %v2635 = vsel %vm1297, %v2619, 0.0
      %v2636 = vsel %vm1297, %v2621, 0.0
      %v2637 = vsel %vm1297, %v2623, 0.0
      %v2638 = vsel %vm1297, %v2625, 0.0
      %v2639 = vsel %vm1297, %v2627, 0.0
      %v2640 = vsel %vm1297, %v2629, 0.0
      %v2641 = vsel %vm1297, %v2631, 0.0
      %v2642 = vsel %vm1297, %v2633, 0.0
      %2643 = vrot.lane.b32.xlu0 %v2553, 120
      %v2644 = vpop.permute.xlu0 %2643
      %2645 = vrot.lane.b32.xlu0 %v2554, 120
      %v2646 = vpop.permute.xlu0 %2645
      %2647 = vrot.lane.b32.xlu0 %v2555, 120
      %v2648 = vpop.permute.xlu0 %2647
      %2649 = vrot.lane.b32.xlu0 %v2556, 120
      %v2650 = vpop.permute.xlu0 %2649
      %2651 = vrot.lane.b32.xlu0 %v2557, 120
      %v2652 = vpop.permute.xlu0 %2651
      %2653 = vrot.lane.b32.xlu0 %v2558, 120
      %v2654 = vpop.permute.xlu0 %2653
      %2655 = vrot.lane.b32.xlu0 %v2559, 120
      %v2656 = vpop.permute.xlu0 %2655
      %2657 = vrot.lane.b32.xlu0 %v2560, 120
      %v2658 = vpop.permute.xlu0 %2657
      %2659 = vrot.lane.b32.xlu0 %v2561, 120
      %v2660 = vpop.permute.xlu0 %2659
      %v2661 = vsel %vm2216, %v2644, 0.0
      %v2662 = vsel %vm2216, %v2646, 0.0
      %v2663 = vsel %vm2216, %v2648, 0.0
      %v2664 = vsel %vm2216, %v2650, 0.0
      %v2665 = vsel %vm2216, %v2652, 0.0
      %v2666 = vsel %vm2216, %v2654, 0.0
      %v2667 = vsel %vm2216, %v2656, 0.0
      %v2668 = vsel %vm2216, %v2658, 0.0
      %v2669 = vsel %vm2216, %v2660, 0.0
      %v2670 = vpack.c.bf16 %v2581, %v2580
      %v2671 = vpack.c.bf16 %v2583, %v2582
      %v2672 = vpack.c.bf16 %v2585, %v2584
      %v2673 = vpack.c.bf16 %v2587, %v2586
      %v2674 = vpack.c.bf16 %v2607, %v2588
      %v2675 = vpack.c.bf16 %v2609, %v2608
      %v2676 = vpack.c.bf16 %v2611, %v2610
      %v2677 = vpack.c.bf16 %v2613, %v2612
      %v2678 = vpack.c.bf16 %v2615, %v2614
      %v2679 = vpack.c.bf16 %v2554, %v2553
      %v2680 = vpack.c.bf16 %v2556, %v2555
      %v2681 = vpack.c.bf16 %v2558, %v2557
      %v2682 = vpack.c.bf16 %v2560, %v2559
      %v2683 = vpack.c.bf16 %v2634, %v2561
      %v2684 = vpack.c.bf16 %v2636, %v2635
      %v2685 = vpack.c.bf16 %v2638, %v2637
      %v2686 = vpack.c.bf16 %v2640, %v2639
      %v2687 = vpack.c.bf16 %v2642, %v2641
      %v2688 = vpack.c.bf16 %v2662, %v2661
      %v2689 = vpack.c.bf16 %v2664, %v2663
      %v2690 = vpack.c.bf16 %v2666, %v2665
      %v2691 = vpack.c.bf16 %v2668, %v2667
      %v2692 = vpack.c.bf16 %v2669, %v2669
      %v2693 = vld [vmem:[%s11] sm:$0xff]
      %v2694 = vld [vmem:[%s11 + $0x8] sm:$0xf]
      %v2695 = vld [vmem:[%s11 + $0xc] sm:$0xff]
      %v2696 = vld [vmem:[%s11 + $0x14] sm:$0xf]
      %v2697 = vld [vmem:[%s11 + $0x18] sm:$0xff]
      %v2698 = vld [vmem:[%s11 + $0x20] sm:$0xf]
      %v2699 = vld [vmem:[%s11 + $0x24] sm:$0xff]
      %v2700 = vld [vmem:[%s11 + $0x2c] sm:$0xf]
      %v2701 = vld [vmem:[%s11 + $0x30] sm:$0xff]
      %v2702 = vld [vmem:[%s11 + $0x38] sm:$0xf]
      %v2703 = vld [vmem:[%s11 + $0x3c] sm:$0xff]
      %v2704 = vld [vmem:[%s11 + $0x44] sm:$0xf]
      %v2705 = vld [vmem:[%s11 + $0x48] sm:$0xff]
      %v2706 = vld [vmem:[%s11 + $0x50] sm:$0xf]
      %v2707 = vld [vmem:[%s11 + $0x54] sm:$0xff]
      %v2708 = vld [vmem:[%s11 + $0x5c] sm:$0xf]
      %v2709 = vld [vmem:[%s11 + $0x60] sm:$0xff]
      %v2710 = vld [vmem:[%s11 + $0x68] sm:$0xf]
      %v2711 = vld [vmem:[%s12] sm:$0xff]
      %v2712 = vld [vmem:[%s12 + $0x8] sm:$0xff]
      %v2713 = vld [vmem:[%s12 + $0x10] sm:$0xff]
      %v2714 = vld [vmem:[%s12 + $0x18] sm:$0xff]
      %v2715 = vld [vmem:[%s12 + $0x20] sm:$0xff]
      %v2716 = vld [vmem:[%s12 + $0x28] sm:$0xff]
      %v2717 = vld [vmem:[%s12 + $0x30] sm:$0xff]
      %v2718 = vld [vmem:[%s12 + $0x38] sm:$0xff]
      %v2719 = vld [vmem:[%s12 + $0x40] sm:$0xff]
      %2721 = vset.pattern.permute.xlu0 0
      %2722 = vperm.xlu0 %2721, %v2711
      %v2723 = vpop.permute.xlu0 %2722
      %2726 = vset.pattern.permute.xlu0 0
      %2727 = vperm.xlu0 %2726, %v2712
      %v2728 = vpop.permute.xlu0 %2727
      %2731 = vset.pattern.permute.xlu0 0
      %2732 = vperm.xlu0 %2731, %v2713
      %v2733 = vpop.permute.xlu0 %2732
      %2736 = vset.pattern.permute.xlu0 0
      %2737 = vperm.xlu0 %2736, %v2714
      %v2738 = vpop.permute.xlu0 %2737
      %2741 = vset.pattern.permute.xlu0 0
      %2742 = vperm.xlu0 %2741, %v2715
      %v2743 = vpop.permute.xlu0 %2742
      %2746 = vset.pattern.permute.xlu0 0
      %2747 = vperm.xlu0 %2746, %v2716
      %v2748 = vpop.permute.xlu0 %2747
      %2751 = vset.pattern.permute.xlu0 0
      %2752 = vperm.xlu0 %2751, %v2717
      %v2753 = vpop.permute.xlu0 %2752
      %2756 = vset.pattern.permute.xlu0 0
      %2757 = vperm.xlu0 %2756, %v2718
      %v2758 = vpop.permute.xlu0 %2757
      %2761 = vset.pattern.permute.xlu0 0
      %2762 = vperm.xlu0 %2761, %v2719
      %v2763 = vpop.permute.xlu0 %2762
      %v2783 = vunpack.c.l.b16 %v2693
      %v2784 = vunpack.c.h.b16 %v2693
      %v2785 = vunpack.c.l.b16 %v2694
      %v2786 = vunpack.c.l.b16 %v2695
      %v2787 = vunpack.c.h.b16 %v2695
      %v2788 = vunpack.c.l.b16 %v2696
      %v2789 = vunpack.c.l.b16 %v2697
      %v2790 = vunpack.c.h.b16 %v2697
      %v2791 = vunpack.c.l.b16 %v2698
      %v2792 = vunpack.c.l.b16 %v2699
      %v2793 = vunpack.c.h.b16 %v2699
      %v2794 = vunpack.c.l.b16 %v2700
      %v2795 = vunpack.c.l.b16 %v2701
      %v2796 = vunpack.c.h.b16 %v2701
      %v2797 = vunpack.c.l.b16 %v2702
      %v2798 = vunpack.c.l.b16 %v2703
      %v2799 = vunpack.c.h.b16 %v2703
      %v2800 = vunpack.c.l.b16 %v2704
      %v2801 = vunpack.c.l.b16 %v2705
      %v2802 = vunpack.c.h.b16 %v2705
      %v2803 = vunpack.c.l.b16 %v2706
      %v2804 = vunpack.c.l.b16 %v2707
      %v2805 = vunpack.c.h.b16 %v2707
      %v2806 = vunpack.c.l.b16 %v2708
      %v2807 = vunpack.c.l.b16 %v2709
      %v2808 = vunpack.c.h.b16 %v2709
      %v2809 = vunpack.c.l.b16 %v2710
      %v2810 = vpack.c.b16 %v2786, %v2783
      %v2811 = vpack.c.b16 %v2787, %v2784
      %v2812 = vpack.c.b16 %v2788, %v2785
      %v2813 = vpack.c.b16 %v2792, %v2789
      %v2814 = vpack.c.b16 %v2793, %v2790
      %v2815 = vpack.c.b16 %v2794, %v2791
      %v2816 = vpack.c.b16 %v2798, %v2795
      %v2817 = vpack.c.b16 %v2799, %v2796
      %v2818 = vpack.c.b16 %v2800, %v2797
      %v2819 = vpack.c.b16 %v2804, %v2801
      %v2820 = vpack.c.b16 %v2805, %v2802
      %v2821 = vpack.c.b16 %v2806, %v2803
      %v2822 = vpack.c.b16 %v2807, %v2807
      %v2823 = vpack.c.b16 %v2808, %v2808
      %v2824 = vpack.c.b16 %v2809, %v2809
      %v2836 = vsel %vm996, %v2812, 0
      %v2839 = vsel %vm996, %v2815, 0
      %v2842 = vsel %vm996, %v2818, 0
      %v2845 = vsel %vm996, %v2821, 0
      %v2848 = vsel %vm996, %v2824, 0
      %v2851 = vsel %vm638, %v2692, 0
      %2853 = vmatprep.subr.bf16.mxu0 0
      %2854 = vmatpush1.bf16.msra.mxu0 %v2670
      %2855 = vmatprep.subr.bf16.mxu0 0
      %2856 = vmatpush1.bf16.msra.mxu0 %v2671
      %2857 = vmatprep.subr.bf16.mxu0 0
      %2858 = vmatpush1.bf16.msra.mxu0 %v2672
      %2859 = vmatprep.subr.bf16.mxu0 0
      %2860 = vmatpush1.bf16.msra.mxu0 %v2673
      %2861 = vmatprep.subr.bf16.mxu0 0
      %2862 = vmatpush1.bf16.msra.mxu0 %v2674
      %2863 = vmatprep.subr.bf16.mxu0 0
      %2864 = vmatpush1.bf16.msra.mxu0 %v2675
      %2865 = vmatprep.subr.bf16.mxu0 0
      %2866 = vmatpush1.bf16.msra.mxu0 %v2676
      %2867 = vmatprep.subr.bf16.mxu0 0
      %2868 = vmatpush1.bf16.msra.mxu0 %v2677
      %2869 = vmatprep.subr.bf16.mxu0 0
      %2870 = vmatpush1.bf16.msra.mxu0 %v2678
      %2871 = vmatprep.subr.bf16.mxu0 0
      %2872 = vmatpush1.bf16.msra.mxu0 %v2679
      %2873 = vmatprep.subr.bf16.mxu0 0
      %2874 = vmatpush1.bf16.msra.mxu0 %v2680
      %2875 = vmatprep.subr.bf16.mxu0 0
      %2876 = vmatpush1.bf16.msra.mxu0 %v2681
      %2877 = vmatprep.subr.bf16.mxu0 0
      %2878 = vmatpush1.bf16.msra.mxu0 %v2682
      %2879 = vmatprep.subr.bf16.mxu0 0
      %2880 = vmatpush1.bf16.msra.mxu0 %v2683
      %2881 = vmatprep.subr.bf16.mxu0 0
      %2882 = vmatpush1.bf16.msra.mxu0 %v2684
      %2883 = vmatprep.subr.bf16.mxu0 0
      %2884 = vmatpush1.bf16.msra.mxu0 %v2685
      %2885 = vmatprep.mubr.bf16.mxu0 %v2811
      %2886 = vmatmul.mubr.bf16.gmra.mrb[0].mxu0 %v2810
      %v2887 = vpop.f32.mrb[0].mxu0
      %v2888 = vadd.f32 %v2723, %v2887
      %v2889 = vpop.f32.mrb[0].mxu0
      %v2890 = vpop.f32.mrb[0].mxu0
      %v2891 = vadd.f32 %v2728, %v2890
      %v2892 = vpop.f32.mrb[0].mxu0
      %2893 = vmatprep.mubr.bf16.mxu0 %v2814
      %2894 = vmatmul.mubr.bf16.gmra.mrb[0].mxu0 %v2813
      %v2895 = vpop.f32.mrb[0].mxu0
      %v2896 = vadd.f32 %v2733, %v2895
      %v2897 = vpop.f32.mrb[0].mxu0
      %v2898 = vpop.f32.mrb[0].mxu0
      %v2899 = vadd.f32 %v2738, %v2898
      %v2900 = vpop.f32.mrb[0].mxu0
      %2901 = vmatprep.mubr.bf16.mxu0 %v2817
      %2902 = vmatmul.mubr.bf16.gmra.mrb[0].mxu0 %v2816
      %v2903 = vpop.f32.mrb[0].mxu0
      %v2904 = vadd.f32 %v2743, %v2903
      %v2905 = vpop.f32.mrb[0].mxu0
      %v2906 = vpop.f32.mrb[0].mxu0
      %v2907 = vadd.f32 %v2748, %v2906
      %v2908 = vpop.f32.mrb[0].mxu0
      %2909 = vmatprep.mubr.bf16.mxu0 %v2820
      %2910 = vmatmul.mubr.bf16.gmra.mrb[0].mxu0 %v2819
      %v2911 = vpop.f32.mrb[0].mxu0
      %v2912 = vadd.f32 %v2753, %v2911
      %v2913 = vpop.f32.mrb[0].mxu0
      %v2914 = vpop.f32.mrb[0].mxu0
      %v2915 = vadd.f32 %v2758, %v2914
      %v2916 = vpop.f32.mrb[0].mxu0
      %2917 = vmatprep.mubr.bf16.mxu0 %v2823
      %2918 = vmatmul.mubr.bf16.gmra.mrb[0].mxu0 %v2822
      %v2919 = vpop.f32.mrb[0].mxu0
      %v2920 = vadd.f32 %v2763, %v2919
      %v2921 = vpop.f32.mrb[0].mxu0
      %v2922 = vpop.f32.mrb[0].mxu0
      %v2923 = vpop.f32.mrb[0].mxu0
      %2924 = vdwg.mxu0
      %2925 = vmatprep.subr.bf16.mxu0 0
      %2926 = vmatpush1.bf16.msra.mxu0 %v2686
      %2927 = vmatprep.subr.bf16.mxu0 0
      %2928 = vmatpush1.bf16.msra.mxu0 %v2687
      %2929 = vmatprep.subr.bf16.mxu0 0
      %2930 = vmatpush1.bf16.msra.mxu0 %v2688
      %2931 = vmatprep.subr.bf16.mxu0 0
      %2932 = vmatpush1.bf16.msra.mxu0 %v2689
      %2933 = vmatprep.subr.bf16.mxu0 0
      %2934 = vmatpush1.bf16.msra.mxu0 %v2690
      %2935 = vmatprep.subr.bf16.mxu0 0
      %2936 = vmatpush1.bf16.msra.mxu0 %v2691
      %2937 = vmatprep.subr.bf16.mxu0 0
      %2938 = vmatpush1.bf16.msra.mxu0 %v2851
      %2939 = vmatprep.subr.bf16.mxu0 0
      %2940 = vmatpush1.bf16.msra.mxu0 0
      %2941 = vmatprep.subr.bf16.mxu0 0
      %2942 = vmatpush1.bf16.msra.mxu0 0
      %2943 = vmatprep.subr.bf16.mxu0 0
      %2944 = vmatpush1.bf16.msra.mxu0 0
      %2945 = vmatprep.subr.bf16.mxu0 0
      %2946 = vmatpush1.bf16.msra.mxu0 0
      %2947 = vmatprep.subr.bf16.mxu0 0
      %2948 = vmatpush1.bf16.msra.mxu0 0
      %2949 = vmatprep.subr.bf16.mxu0 0
      %2950 = vmatpush1.bf16.msra.mxu0 0
      %2951 = vmatprep.subr.bf16.mxu0 0
      %2952 = vmatpush1.bf16.msra.mxu0 0
      %2953 = vmatprep.subr.bf16.mxu0 0
      %2954 = vmatpush1.bf16.msra.mxu0 0
      %2955 = vmatprep.subr.bf16.mxu0 0
      %2956 = vmatpush1.bf16.msra.mxu0 0
      %2957 = vmatprep.mubr.bf16.mxu0 0
      %2958 = vmatmul.mubr.bf16.gmra.mrb[0].mxu0 %v2836
      %v2959 = vpop.f32.mrb[0].mxu0
      %v2960 = vadd.f32 %v2888, %v2959
      %v2961 = vpop.f32.mrb[0].mxu0
      %v2962 = vpop.f32.mrb[0].mxu0
      %v2963 = vadd.f32 %v2891, %v2962
      %v2964 = vpop.f32.mrb[0].mxu0
      %2965 = vmatprep.mubr.bf16.mxu0 0
      %2966 = vmatmul.mubr.bf16.gmra.mrb[0].mxu0 %v2839
      %v2967 = vpop.f32.mrb[0].mxu0
      %v2968 = vadd.f32 %v2896, %v2967
      %v2969 = vpop.f32.mrb[0].mxu0
      %v2970 = vpop.f32.mrb[0].mxu0
      %v2971 = vadd.f32 %v2899, %v2970
      %v2972 = vpop.f32.mrb[0].mxu0
      %2973 = vmatprep.mubr.bf16.mxu0 0
      %2974 = vmatmul.mubr.bf16.gmra.mrb[0].mxu0 %v2842
      %v2975 = vpop.f32.mrb[0].mxu0
      %v2976 = vadd.f32 %v2904, %v2975
      %v2977 = vpop.f32.mrb[0].mxu0
      %v2978 = vpop.f32.mrb[0].mxu0
      %v2979 = vadd.f32 %v2907, %v2978
      %v2980 = vpop.f32.mrb[0].mxu0
      %2981 = vmatprep.mubr.bf16.mxu0 0
      %2982 = vmatmul.mubr.bf16.gmra.mrb[0].mxu0 %v2845
      %v2983 = vpop.f32.mrb[0].mxu0
      %v2984 = vadd.f32 %v2912, %v2983
      %v2985 = vpop.f32.mrb[0].mxu0
      %v2986 = vpop.f32.mrb[0].mxu0
      %v2987 = vadd.f32 %v2915, %v2986
      %v2988 = vpop.f32.mrb[0].mxu0
      %2989 = vmatprep.mubr.bf16.mxu0 0
      %2990 = vmatmul.mubr.bf16.gmra.mrb[0].mxu0 %v2848
      %v2991 = vpop.f32.mrb[0].mxu0
      %v2992 = vadd.f32 %v2920, %v2991
      %v2993 = vpop.f32.mrb[0].mxu0
      %v2994 = vpop.f32.mrb[0].mxu0
      %v2995 = vpop.f32.mrb[0].mxu0
      %2996 = vdwg.mxu0
      %v2997 = vmax.f32 %v2960, 0.0
      %v2998 = vmax.f32 %v2963, 0.0
      %v2999 = vmax.f32 %v2968, 0.0
      %v3000 = vmax.f32 %v2971, 0.0
      %v3001 = vmax.f32 %v2976, 0.0
      %v3002 = vmax.f32 %v2979, 0.0
      %v3003 = vmax.f32 %v2984, 0.0
      %v3004 = vmax.f32 %v2987, 0.0
      %v3005 = vmax.f32 %v2992, 0.0
      %3006 = vrot.lane.b32.xlu0 %v2997, 124
      %v3007 = vpop.permute.xlu0 %3006
      %3008 = vrot.lane.b32.xlu0 %v2998, 124
      %v3009 = vpop.permute.xlu0 %3008
      %3010 = vrot.lane.b32.xlu0 %v2999, 124
      %v3011 = vpop.permute.xlu0 %3010
      %3012 = vrot.lane.b32.xlu0 %v3000, 124
      %v3013 = vpop.permute.xlu0 %3012
      %3014 = vrot.lane.b32.xlu0 %v3001, 124
      %v3015 = vpop.permute.xlu0 %3014
      %3016 = vrot.lane.b32.xlu0 %v3002, 124
      %v3017 = vpop.permute.xlu0 %3016
      %3018 = vrot.lane.b32.xlu0 %v3003, 124
      %v3019 = vpop.permute.xlu0 %3018
      %3020 = vrot.lane.b32.xlu0 %v3004, 124
      %v3021 = vpop.permute.xlu0 %3020
      %3022 = vrot.lane.b32.xlu0 %v3005, 124
      %v3023 = vpop.permute.xlu0 %3022
      %v3024 = vmax.f32 %v2997, %v3007
      %v3025 = vmax.f32 %v2998, %v3009
      %v3026 = vmax.f32 %v2999, %v3011
      %v3027 = vmax.f32 %v3000, %v3013
      %v3028 = vmax.f32 %v3001, %v3015
      %v3029 = vmax.f32 %v3002, %v3017
      %v3030 = vmax.f32 %v3003, %v3019
      %v3031 = vmax.f32 %v3004, %v3021
      %v3032 = vmax.f32 %v3005, %v3023
      %v3033 = vpack.c.bf16 %v3025, %v3024
      %v3034 = vpack.c.bf16 %v3027, %v3026
      %v3035 = vpack.c.bf16 %v3029, %v3028
      %v3036 = vpack.c.bf16 %v3031, %v3030
      %v3037 = vpack.c.bf16 %v3032, %v3032
      %v3038 = vld [vmem:[%s13] sm:$0xf]
      %v3039 = vld [vmem:[%s13 + $0x4] sm:$0xf]
      %v3040 = vld [vmem:[%s13 + $0x8] sm:$0xf]
      %v3041 = vld [vmem:[%s13 + $0xc] sm:$0xf]
      %v3042 = vld [vmem:[%s13 + $0x10] sm:$0xf]
      %v3043 = vld [vmem:[%s13 + $0x14] sm:$0xf]
      %v3044 = vld [vmem:[%s13 + $0x18] sm:$0xf]
      %v3045 = vld [vmem:[%s13 + $0x1c] sm:$0xf]
      %v3046 = vld [vmem:[%s13 + $0x20] sm:$0xf]
      %v3047 = vld [vmem:[%s13 + $0x24] sm:$0xf]
      %v3048 = vld [vmem:[%s13 + $0x28] sm:$0xf]
      %v3049 = vld [vmem:[%s13 + $0x2c] sm:$0xf]
      %v3050 = vld [vmem:[%s13 + $0x30] sm:$0xf]
      %v3051 = vld [vmem:[%s13 + $0x34] sm:$0xf]
      %v3052 = vld [vmem:[%s13 + $0x38] sm:$0xf]
      %v3053 = vld [vmem:[%s13 + $0x3c] sm:$0xf]
      %v3070 = vunpack.c.l.b16 %v3038
      %v3071 = vunpack.c.l.b16 %v3039
      %v3072 = vunpack.c.l.b16 %v3040
      %v3073 = vunpack.c.l.b16 %v3041
      %v3074 = vunpack.c.l.b16 %v3042
      %v3075 = vunpack.c.l.b16 %v3043
      %v3076 = vunpack.c.l.b16 %v3044
      %v3077 = vunpack.c.l.b16 %v3045
      %v3078 = vunpack.c.l.b16 %v3046
      %v3079 = vunpack.c.l.b16 %v3047
      %v3080 = vunpack.c.l.b16 %v3048
      %v3081 = vunpack.c.l.b16 %v3049
      %v3082 = vunpack.c.l.b16 %v3050
      %v3083 = vunpack.c.l.b16 %v3051
      %v3084 = vunpack.c.l.b16 %v3052
      %v3085 = vunpack.c.l.b16 %v3053
      %v3086 = vpack.c.b16 %v3071, %v3070
      %v3087 = vpack.c.b16 %v3073, %v3072
      %v3088 = vpack.c.b16 %v3075, %v3074
      %v3089 = vpack.c.b16 %v3077, %v3076
      %v3090 = vpack.c.b16 %v3079, %v3078
      %v3091 = vpack.c.b16 %v3081, %v3080
      %v3092 = vpack.c.b16 %v3083, %v3082
      %v3093 = vpack.c.b16 %v3085, %v3084
      %3102 = vmatprep.subr.bf16.mxu0 0
      %3103 = vmatpush1.bf16.msra.mxu0 %v3086
      %3104 = vmatprep.subr.bf16.mxu0 0
      %3105 = vmatpush1.bf16.msra.mxu0 %v3087
      %3106 = vmatprep.subr.bf16.mxu0 0
      %3107 = vmatpush1.bf16.msra.mxu0 %v3088
      %3108 = vmatprep.subr.bf16.mxu0 0
      %3109 = vmatpush1.bf16.msra.mxu0 %v3089
      %3110 = vmatprep.subr.bf16.mxu0 0
      %3111 = vmatpush1.bf16.msra.mxu0 %v3090
      %3112 = vmatprep.subr.bf16.mxu0 0
      %3113 = vmatpush1.bf16.msra.mxu0 %v3091
      %3114 = vmatprep.subr.bf16.mxu0 0
      %3115 = vmatpush1.bf16.msra.mxu0 %v3092
      %3116 = vmatprep.subr.bf16.mxu0 0
      %3117 = vmatpush1.bf16.msra.mxu0 %v3093
      %3118 = vmatprep.subr.bf16.mxu0 0
      %3119 = vmatpush1.bf16.msra.mxu0 0
      %3120 = vmatprep.subr.bf16.mxu0 0
      %3121 = vmatpush1.bf16.msra.mxu0 0
      %3122 = vmatprep.subr.bf16.mxu0 0
      %3123 = vmatpush1.bf16.msra.mxu0 0
      %3124 = vmatprep.subr.bf16.mxu0 0
      %3125 = vmatpush1.bf16.msra.mxu0 0
      %3126 = vmatprep.subr.bf16.mxu0 0
      %3127 = vmatpush1.bf16.msra.mxu0 0
      %3128 = vmatprep.subr.bf16.mxu0 0
      %3129 = vmatpush1.bf16.msra.mxu0 0
      %3130 = vmatprep.subr.bf16.mxu0 0
      %3131 = vmatpush1.bf16.msra.mxu0 0
      %3132 = vmatprep.subr.bf16.mxu0 0
      %3133 = vmatpush1.bf16.msra.mxu0 0
      %3134 = vmatprep.mubr.bf16.mxu0 0
      %3135 = vmatmul.mubr.bf16.gmra.mrb[0].mxu0 %v3033
      %v3136 = vpop.f32.mrb[0].mxu0
      %v3137 = vadd.f32 0.0, %v3136
      %v3138 = vpop.f32.mrb[0].mxu0
      %v3139 = vpop.f32.mrb[0].mxu0
      %v3140 = vadd.f32 0.0, %v3139
      %v3141 = vpop.f32.mrb[0].mxu0
      %3142 = vmatprep.mubr.bf16.mxu0 0
      %3143 = vmatmul.mubr.bf16.gmra.mrb[0].mxu0 %v3034
      %v3144 = vpop.f32.mrb[0].mxu0
      %v3145 = vadd.f32 0.0, %v3144
      %v3146 = vpop.f32.mrb[0].mxu0
      %v3147 = vpop.f32.mrb[0].mxu0
      %v3148 = vadd.f32 0.0, %v3147
      %v3149 = vpop.f32.mrb[0].mxu0
      %3150 = vmatprep.mubr.bf16.mxu0 0
      %3151 = vmatmul.mubr.bf16.gmra.mrb[0].mxu0 %v3035
      %v3152 = vpop.f32.mrb[0].mxu0
      %v3153 = vadd.f32 0.0, %v3152
      %v3154 = vpop.f32.mrb[0].mxu0
      %v3155 = vpop.f32.mrb[0].mxu0
      %v3156 = vadd.f32 0.0, %v3155
      %v3157 = vpop.f32.mrb[0].mxu0
      %3158 = vmatprep.mubr.bf16.mxu0 0
      %3159 = vmatmul.mubr.bf16.gmra.mrb[0].mxu0 %v3036
      %v3160 = vpop.f32.mrb[0].mxu0
      %v3161 = vadd.f32 0.0, %v3160
      %v3162 = vpop.f32.mrb[0].mxu0
      %v3163 = vpop.f32.mrb[0].mxu0
      %v3164 = vadd.f32 0.0, %v3163
      %v3165 = vpop.f32.mrb[0].mxu0
      %3166 = vmatprep.mubr.bf16.mxu0 0
      %3167 = vmatmul.mubr.bf16.gmra.mrb[0].mxu0 %v3037
      %v3168 = vpop.f32.mrb[0].mxu0
      %v3169 = vadd.f32 0.0, %v3168
      %v3170 = vpop.f32.mrb[0].mxu0
      %v3171 = vpop.f32.mrb[0].mxu0
      %v3172 = vpop.f32.mrb[0].mxu0
      %3173 = vdwg.mxu0
      %vm3174 = vcmask 130048
      %3175 = vst.msk [vmem:[%s464] sm:$0xff] %vm3174, %v3137
      %3176 = vst.msk [vmem:[%s464 + $0x8] sm:$0xff] %vm3174, %v3140
      %3177 = vst.msk [vmem:[%s464 + $0x10] sm:$0xff] %vm3174, %v3145
      %3178 = vst.msk [vmem:[%s464 + $0x18] sm:$0xff] %vm3174, %v3148
      %3179 = vst.msk [vmem:[%s464 + $0x20] sm:$0xff] %vm3174, %v3153
      %3180 = vst.msk [vmem:[%s464 + $0x28] sm:$0xff] %vm3174, %v3156
      %3181 = vst.msk [vmem:[%s464 + $0x30] sm:$0xff] %vm3174, %v3161
      %3182 = vst.msk [vmem:[%s464 + $0x38] sm:$0xff] %vm3174, %v3164
      %3183 = vst.msk [vmem:[%s464 + $0x40] sm:$0xff] %vm3174, %v3169
      %p3184 = scmp.lt.s32.totalorder %s25, 1
      %s3185 = scalar_select %p3184, %s25, 1
      %s3186 = smul.addr %s3185, 9
      %s3187 = smul.addr %s3186, 8
      %s3188 = scalar_lea.vmem %s14, %s3187
      // Predicated region
      $region77: #{zipnet_forward.2} parent=75 // pred_check
        %p3189 = pneg %p342
      $region78: #{zipnet_forward.2} parent=75 // pred_check_branch
        %3191 = sbr.rel (%p3189) target = $region80
      $region79: #{zipnet_forward.2} parent=75 // pred_region
        _
      $region80: #{zipnet_forward.2} parent=75 // pred_fallthru
        _
    $region76: #{zipnet_forward.2} parent=5 // pred_fallthru
      _
    %p3192 = scmp.le.s32.totalorder 2, %s20
    // Predicated region
    $region81: #{zipnet_forward.2} parent=5 // pred_check
      %p3193 = pneg %p3192
    $region82: #{zipnet_forward.2} parent=5 // pred_check_branch
      %3195 = sbr.rel (%p3193) target = $region84
    $region83: #{zipnet_forward.2} parent=5 // pred_region
      %s3196 = ssub.s32 %s20, 2
      // Predicated region
      $region85: #{zipnet_forward.2} parent=83 // pred_check
        %p3197 = pneg %p348
      $region86: #{zipnet_forward.2} parent=83 // pred_check_branch
        %3199 = sbr.rel (%p3197) target = $region88
      $region87: #{zipnet_forward.2} parent=83 // pred_region
        %p3200 = scmp.lt.s32.totalorder %s26, 1
        %s3201 = scalar_select %p3200, %s26, 1
        %s3202 = smul.addr %s3201, 9
        %s3203 = smul.addr %s3202, 8
        %s3204 = scalar_lea.vmem %s14, %s3203
      $region88: #{zipnet_forward.2} parent=83 // pred_fallthru
        _
    $region84: #{zipnet_forward.2} parent=5 // pred_fallthru
      _
  $region6: #{zipnet_forward.2} parent=0 // loop_footer
    %s24 = sadd.s32 1, %s20
  $region7: #{zipnet_forward.2} parent=0 // loop_footer_branch
    %19 = sbr.rel target = $region3
  $region8: #{zipnet_forward.2} parent=0 // loop_exit
    _

</llo_original>
